<compile_context>
chip_gen: v6e
topology: v6e:2x2x1
jax: 0.10.0
libtpu: 0.0.40
codegen_flags: <defaults>
</compile_context>

<pallas_src>
import functools

import jax
import jax.numpy as jnp
from jax.experimental import pallas as pl
from jax.experimental.pallas import tpu as pltpu

EPS = 1e-5                      # nn.InstanceNorm1d default eps (affine=False)
MXU_DTYPE = jnp.float32         # jnp.bfloat16 on v6e/v7x for more MXU TF/s


# ---------------- in-kernel math on (L, C) float32 values --------------------

def _instance_norm(y):
    """Per-channel normalization over the length axis; one-pass stats."""
    inv_n = 1.0 / y.shape[0]
    mean = jnp.sum(y, axis=0, keepdims=True) * inv_n
    var = jnp.sum(y * y, axis=0, keepdims=True) * inv_n - mean * mean
    return (y - mean) * jax.lax.rsqrt(var + EPS)


def _glu(y):   # nn.GLU(dim=1) on NCL == split channel (last) dim here
    c = y.shape[-1] // 2
    return y[:, :c] * jax.nn.sigmoid(y[:, c:])


def _gate(y):  # GateActivationUnit gating
    c = y.shape[-1] // 2
    return jnp.tanh(y[:, :c]) * jax.nn.sigmoid(y[:, c:])


def _pad_rows(x, pad):
    if pad == 0:
        return x
    z = jnp.zeros((pad, x.shape[1]), x.dtype)
    return jnp.concatenate([z, x, z], axis=0)


def _conv_same(x, w2d, b, K, dilation=1):
    """'same'-padded stride-1 Conv1d as a single im2col MXU matmul.

    x: (L, C_in) f32; w2d: (K*C_in, C_out) tap-major (== transpose of the
    PyTorch (C_out, C_in, K) weight, flattened); b: (1, C_out)."""
    L = x.shape[0]
    pad = (dilation * (K - 1)) // 2            # ConvNorm 'same', stride 1
    xp = _pad_rows(x, pad)
    if K == 1:
        cols = xp
    else:
        cols = jnp.concatenate(
            [xp[k * dilation:k * dilation + L, :] for k in range(K)], axis=1)
    acc = jnp.dot(cols.astype(MXU_DTYPE), w2d.astype(MXU_DTYPE),
                  preferred_element_type=jnp.float32)
    return acc + b


def _conv_k8_s2(x, w2d, b):
    """ConvNorm(kernel=8, stride=2, pad=3): stride-1 im2col conv, then an
    even-row selection matmul (no strided slices inside the kernel)."""
    L = x.shape[0]
    K, pad = 8, 3
    xp = _pad_rows(x, pad)                      # (L + 6, C)
    L_full = L + 2 * pad - K + 1                # = L - 1  (stride-1 positions)
    L_out = (L + 2 * pad - K) // 2 + 1          # = L // 2 (matches PyTorch)
    cols = jnp.concatenate([xp[k:k + L_full, :] for k in range(K)], axis=1)
    y_full = jnp.dot(cols.astype(MXU_DTYPE), w2d.astype(MXU_DTYPE),
                     preferred_element_type=jnp.float32) + b
    # select rows 0, 2, 4, ... via a tiny matmul (MXU-friendly, lowering-safe)
    rows = jax.lax.broadcasted_iota(jnp.int32, (L_out, L_full), 0)
    cidx = jax.lax.broadcasted_iota(jnp.int32, (L_out, L_full), 1)
    sel = (cidx == 2 * rows).astype(jnp.float32)
    return jnp.dot(sel, y_full, preferred_element_type=jnp.float32)


# ---------------- fused encoder kernel ----------------------------------------

def _encoder_kernel(n_layers,
                    x_ref, w_in_ref, b_in_ref, w_ds_ref, b_ds_ref,
                    w_gi_ref, b_gi_ref, w_go_ref, b_go_ref,
                    w_o1_ref, b_o1_ref, w_o2_ref, b_o2_ref, o_ref):
    x = x_ref[0].astype(jnp.float32)                                   # (L, C_in)

    # input_layer: ConvNorm(k=15) + GLU
    h = _glu(_conv_same(x, w_in_ref[...], b_in_ref[...], K=15))        # (L, H)

    # down_sample: ConvNorm(k=8, stride=2) + InstanceNorm1d + GLU
    h = _glu(_instance_norm(_conv_k8_s2(h, w_ds_ref[...], b_ds_ref[...])))  # (L/2, H)

    # dilated GateActivationUnits; skip accumulation fused into the kernel
    skip_sum = jnp.zeros_like(h)
    for i in range(n_layers):
        d = 2 ** i
        g = _gate(_conv_same(h, w_gi_ref[i], b_gi_ref[i], K=5, dilation=d))
        skip = _instance_norm(_conv_same(g, w_go_ref[i], b_go_ref[i], K=3))
        h = h + skip
        skip_sum = skip_sum + skip

    # output_layer: ConvNorm(k=5) + InstanceNorm1d + GLU + ConvNorm(k=1)
    y = _glu(_instance_norm(_conv_same(skip_sum, w_o1_ref[...], b_o1_ref[...], K=5)))
    y = _conv_same(y, w_o2_ref[...], b_o2_ref[...], K=1)
    o_ref[0] = y.astype(o_ref.dtype)


def _rep_spec(shape):
    zeros = (0,) * len(shape)
    return pl.BlockSpec(shape, lambda i, z=zeros: z)


def encoder_forward(x_ncl, params, n_layers=5):
    """x_ncl: (B, input_dim, L) PyTorch NCL -> (B, output_dim, L // 2)."""
    B, C_in, L = x_ncl.shape
    assert L % 2 == 0, "stride-2 down-sampling assumes even L"
    out_dim = params["out2_w"].shape[-1]
    L_out = L // 2

    # one-time boundary transposes (kernel works channels-last internally)
    x = jnp.transpose(x_ncl, (0, 2, 1))                                # (B, L, C_in)

    kernel = functools.partial(_encoder_kernel, n_layers)
    weight_keys = ("in_w", "in_b", "ds_w", "ds_b",
                   "gau_in_w", "gau_in_b", "gau_out_w", "gau_out_b",
                   "out1_w", "out1_b", "out2_w", "out2_b")

    out = pl.pallas_call(
        kernel,
        out_shape=jax.ShapeDtypeStruct((B, L_out, out_dim), x.dtype),
        grid=(B,),
        in_specs=[pl.BlockSpec((1, L, C_in), lambda i: (i, 0, 0))]
                 + [_rep_spec(params[k].shape) for k in weight_keys],
        out_specs=pl.BlockSpec((1, L_out, out_dim), lambda i: (i, 0, 0)),
        compiler_params=pltpu.CompilerParams(
            dimension_semantics=("parallel",),
            vmem_limit_bytes=64 * 1024 * 1024),
    )(x, *(params[k] for k in weight_keys))

    return jnp.transpose(out, (0, 2, 1))                               # back to NCL


# ---------------- parameters (deterministic, synthetic) -----------------------

def _xavier_conv(key, K, c_in, c_out, gain=1.0):
    fan_in, fan_out = c_in * K, c_out * K
    lim = gain * (6.0 / (fan_in + fan_out)) ** 0.5
    kw, kb = jax.random.split(key)
    # (K, C_in, C_out) == transpose of PyTorch (C_out, C_in, K);
    # pre-flattened tap-major to (K*C_in, C_out) for the im2col matmul.
    w = jax.random.uniform(kw, (K, c_in, c_out), jnp.float32, -lim, lim)
    bl = 1.0 / (fan_in ** 0.5)
    b = jax.random.uniform(kb, (c_out,), jnp.float32, -bl, bl)
    return w.reshape(K * c_in, c_out), b.reshape(1, c_out)


def init_encoder_params(key, input_dim, hidden_dim, output_dim,
                        n_layers=5, down_sample_factor=2):
    assert down_sample_factor == 2, "fused kernel hardcodes one down-sample stage"
    keys = iter(jax.random.split(key, 4 + 2 * n_layers))
    in_w, in_b = _xavier_conv(next(keys), 15, input_dim, 2 * hidden_dim)
    ds_w, ds_b = _xavier_conv(next(keys), 8, hidden_dim, 2 * hidden_dim)
    gi = [_xavier_conv(next(keys), 5, hidden_dim, 2 * hidden_dim)
          for _ in range(n_layers)]
    go = [_xavier_conv(next(keys), 3, hidden_dim, hidden_dim)
          for _ in range(n_layers)]
    o1_w, o1_b = _xavier_conv(next(keys), 5, hidden_dim, 2 * output_dim)
    o2_w, o2_b = _xavier_conv(next(keys), 1, output_dim, output_dim)
    return {
        "in_w": in_w, "in_b": in_b,
        "ds_w": ds_w, "ds_b": ds_b,
        "gau_in_w": jnp.stack([w for w, _ in gi]),
        "gau_in_b": jnp.stack([b for _, b in gi]),
        "gau_out_w": jnp.stack([w for w, _ in go]),
        "gau_out_b": jnp.stack([b for _, b in go]),
        "out1_w": o1_w, "out1_b": o1_b,
        "out2_w": o2_w, "out2_b": o2_b,
    }


if __name__ == "__main__":
    B, input_dim, hidden_dim, output_dim, L = 2, 8, 32, 16, 64
    key = jax.random.PRNGKey(0)
    kp, kx = jax.random.split(key)
    params = init_encoder_params(kp, input_dim, hidden_dim, output_dim, n_layers=5)
    x = jax.random.normal(kx, (B, input_dim, L), jnp.float32)

    fwd = jax.jit(functools.partial(encoder_forward, n_layers=5))
    out = jax.block_until_ready(fwd(x, params))

    assert out.shape == (B, output_dim, L // 2), out.shape
    assert bool(jnp.all(jnp.isfinite(out)))
    print("KERNEL_OK")
</pallas_src>

<mosaic_0001>
module attributes {stable_mosaic.version = 11 : i64} {
  func.func @_encoder_kernel(%arg0: i32, %arg1: memref<1x64x8xf32, #tpu.memory_space<vmem>>, %arg2: memref<120x64xf32, #tpu.memory_space<vmem>>, %arg3: memref<1x64xf32, #tpu.memory_space<vmem>>, %arg4: memref<256x64xf32, #tpu.memory_space<vmem>>, %arg5: memref<1x64xf32, #tpu.memory_space<vmem>>, %arg6: memref<5x160x64xf32, #tpu.memory_space<vmem>>, %arg7: memref<5x1x64xf32, #tpu.memory_space<vmem>>, %arg8: memref<5x96x32xf32, #tpu.memory_space<vmem>>, %arg9: memref<5x1x32xf32, #tpu.memory_space<vmem>>, %arg10: memref<160x32xf32, #tpu.memory_space<vmem>>, %arg11: memref<1x32xf32, #tpu.memory_space<vmem>>, %arg12: memref<16x16xf32, #tpu.memory_space<vmem>>, %arg13: memref<1x16xf32, #tpu.memory_space<vmem>>, %arg14: memref<1x32x16xf32, #tpu.memory_space<vmem>>) attributes {dimension_semantics = [#tpu.dimension_semantics<parallel>], iteration_bounds = array<i64: 2>, scalar_prefetch = 0 : i64, scratch_operands = 0 : i64, tpu.core_type = #tpu.core_type<tc>, window_params = [{transform_indices = @transform_0, window_bounds = array<i64: 1, 64, 8>}, {pipeline_mode = #tpu.pipeline_mode<synchronous>, transform_indices = @transform_1, window_bounds = array<i64: 120, 64>}, {pipeline_mode = #tpu.pipeline_mode<synchronous>, transform_indices = @transform_2, window_bounds = array<i64: 1, 64>}, {pipeline_mode = #tpu.pipeline_mode<synchronous>, transform_indices = @transform_3, window_bounds = array<i64: 256, 64>}, {pipeline_mode = #tpu.pipeline_mode<synchronous>, transform_indices = @transform_4, window_bounds = array<i64: 1, 64>}, {pipeline_mode = #tpu.pipeline_mode<synchronous>, transform_indices = @transform_5, window_bounds = array<i64: 5, 160, 64>}, {pipeline_mode = #tpu.pipeline_mode<synchronous>, transform_indices = @transform_6, window_bounds = array<i64: 5, 1, 64>}, {pipeline_mode = #tpu.pipeline_mode<synchronous>, transform_indices = @transform_7, window_bounds = array<i64: 5, 96, 32>}, {pipeline_mode = #tpu.pipeline_mode<synchronous>, transform_indices = @transform_8, window_bounds = array<i64: 5, 1, 32>}, {pipeline_mode = #tpu.pipeline_mode<synchronous>, transform_indices = @transform_9, window_bounds = array<i64: 160, 32>}, {pipeline_mode = #tpu.pipeline_mode<synchronous>, transform_indices = @transform_10, window_bounds = array<i64: 1, 32>}, {pipeline_mode = #tpu.pipeline_mode<synchronous>, transform_indices = @transform_11, window_bounds = array<i64: 16, 16>}, {pipeline_mode = #tpu.pipeline_mode<synchronous>, transform_indices = @transform_12, window_bounds = array<i64: 1, 16>}, {transform_indices = @transform_13, window_bounds = array<i64: 1, 32, 16>}]} {
    %c0 = arith.constant 0 : index
    %c0_0 = arith.constant 0 : index
    %c0_1 = arith.constant 0 : index
    %0 = vector.load %arg1[%c0, %c0_0, %c0_1] : memref<1x64x8xf32, #tpu.memory_space<vmem>>, vector<1x64x8xf32>
    %1 = vector.shape_cast %0 : vector<1x64x8xf32> to vector<64x8xf32>
    %c0_2 = arith.constant 0 : index
    %c0_3 = arith.constant 0 : index
    %2 = vector.load %arg2[%c0_2, %c0_3] : memref<120x64xf32, #tpu.memory_space<vmem>>, vector<120x64xf32>
    %c0_4 = arith.constant 0 : index
    %c0_5 = arith.constant 0 : index
    %3 = vector.load %arg3[%c0_4, %c0_5] : memref<1x64xf32, #tpu.memory_space<vmem>>, vector<1x64xf32>
    %cst = arith.constant 0.000000e+00 : f32
    %4 = vector.broadcast %cst : f32 to vector<7x8xf32>
    %5 = tpu.concatenate %4, %1, %4 in 0 : vector<7x8xf32>, vector<64x8xf32>, vector<7x8xf32> -> vector<78x8xf32>
    %6 = vector.extract_strided_slice %5 {offsets = [0, 0], sizes = [64, 8], strides = [1, 1]} : vector<78x8xf32> to vector<64x8xf32>
    %7 = vector.extract_strided_slice %5 {offsets = [1, 0], sizes = [64, 8], strides = [1, 1]} : vector<78x8xf32> to vector<64x8xf32>
    %8 = vector.extract_strided_slice %5 {offsets = [2, 0], sizes = [64, 8], strides = [1, 1]} : vector<78x8xf32> to vector<64x8xf32>
    %9 = vector.extract_strided_slice %5 {offsets = [3, 0], sizes = [64, 8], strides = [1, 1]} : vector<78x8xf32> to vector<64x8xf32>
    %10 = vector.extract_strided_slice %5 {offsets = [4, 0], sizes = [64, 8], strides = [1, 1]} : vector<78x8xf32> to vector<64x8xf32>
    %11 = vector.extract_strided_slice %5 {offsets = [5, 0], sizes = [64, 8], strides = [1, 1]} : vector<78x8xf32> to vector<64x8xf32>
    %12 = vector.extract_strided_slice %5 {offsets = [6, 0], sizes = [64, 8], strides = [1, 1]} : vector<78x8xf32> to vector<64x8xf32>
    %13 = vector.extract_strided_slice %5 {offsets = [7, 0], sizes = [64, 8], strides = [1, 1]} : vector<78x8xf32> to vector<64x8xf32>
    %14 = vector.extract_strided_slice %5 {offsets = [8, 0], sizes = [64, 8], strides = [1, 1]} : vector<78x8xf32> to vector<64x8xf32>
    %15 = vector.extract_strided_slice %5 {offsets = [9, 0], sizes = [64, 8], strides = [1, 1]} : vector<78x8xf32> to vector<64x8xf32>
    %16 = vector.extract_strided_slice %5 {offsets = [10, 0], sizes = [64, 8], strides = [1, 1]} : vector<78x8xf32> to vector<64x8xf32>
    %17 = vector.extract_strided_slice %5 {offsets = [11, 0], sizes = [64, 8], strides = [1, 1]} : vector<78x8xf32> to vector<64x8xf32>
    %18 = vector.extract_strided_slice %5 {offsets = [12, 0], sizes = [64, 8], strides = [1, 1]} : vector<78x8xf32> to vector<64x8xf32>
    %19 = vector.extract_strided_slice %5 {offsets = [13, 0], sizes = [64, 8], strides = [1, 1]} : vector<78x8xf32> to vector<64x8xf32>
    %20 = vector.extract_strided_slice %5 {offsets = [14, 0], sizes = [64, 8], strides = [1, 1]} : vector<78x8xf32> to vector<64x8xf32>
    %21 = tpu.concatenate %6, %7, %8, %9, %10, %11, %12, %13, %14, %15, %16, %17, %18, %19, %20 in 1 : vector<64x8xf32>, vector<64x8xf32>, vector<64x8xf32>, vector<64x8xf32>, vector<64x8xf32>, vector<64x8xf32>, vector<64x8xf32>, vector<64x8xf32>, vector<64x8xf32>, vector<64x8xf32>, vector<64x8xf32>, vector<64x8xf32>, vector<64x8xf32>, vector<64x8xf32>, vector<64x8xf32> -> vector<64x120xf32>
    %cst_6 = arith.constant dense<0.000000e+00> : vector<64x64xf32>
    %22 = tpu.matmul %21, %2, %cst_6 {dimension_numbers = #tpu.dot_dimension_numbers<[1], [0], [0], [1], [0, 0, 1, 1], [], []>} : vector<64x120xf32>, vector<120x64xf32>, vector<64x64xf32> -> vector<64x64xf32>
    %23 = vector.broadcast %3 : vector<1x64xf32> to vector<64x64xf32>
    %24 = arith.addf %22, %23 : vector<64x64xf32>
    %25 = vector.extract_strided_slice %24 {offsets = [0, 0], sizes = [64, 32], strides = [1, 1]} : vector<64x64xf32> to vector<64x32xf32>
    %26 = vector.extract_strided_slice %24 {offsets = [0, 32], sizes = [64, 32], strides = [1, 1]} : vector<64x64xf32> to vector<64x32xf32>
    %27 = arith.negf %26 : vector<64x32xf32>
    %28 = math.exp %27 : vector<64x32xf32>
    %cst_7 = arith.constant 1.000000e+00 : f32
    %29 = vector.broadcast %cst_7 : f32 to vector<64x32xf32>
    %30 = arith.addf %29, %28 : vector<64x32xf32>
    %31 = arith.divf %29, %30 : vector<64x32xf32>
    %32 = arith.mulf %25, %31 : vector<64x32xf32>
    %c0_8 = arith.constant 0 : index
    %c0_9 = arith.constant 0 : index
    %33 = vector.load %arg4[%c0_8, %c0_9] : memref<256x64xf32, #tpu.memory_space<vmem>>, vector<256x64xf32>
    %c0_10 = arith.constant 0 : index
    %c0_11 = arith.constant 0 : index
    %34 = vector.load %arg5[%c0_10, %c0_11] : memref<1x64xf32, #tpu.memory_space<vmem>>, vector<1x64xf32>
    %cst_12 = arith.constant 0.000000e+00 : f32
    %35 = vector.broadcast %cst_12 : f32 to vector<3x32xf32>
    %36 = tpu.concatenate %35, %32, %35 in 0 : vector<3x32xf32>, vector<64x32xf32>, vector<3x32xf32> -> vector<70x32xf32>
    %37 = vector.extract_strided_slice %36 {offsets = [0, 0], sizes = [63, 32], strides = [1, 1]} : vector<70x32xf32> to vector<63x32xf32>
    %38 = vector.extract_strided_slice %36 {offsets = [1, 0], sizes = [63, 32], strides = [1, 1]} : vector<70x32xf32> to vector<63x32xf32>
    %39 = vector.extract_strided_slice %36 {offsets = [2, 0], sizes = [63, 32], strides = [1, 1]} : vector<70x32xf32> to vector<63x32xf32>
    %40 = vector.extract_strided_slice %36 {offsets = [3, 0], sizes = [63, 32], strides = [1, 1]} : vector<70x32xf32> to vector<63x32xf32>
    %41 = vector.extract_strided_slice %36 {offsets = [4, 0], sizes = [63, 32], strides = [1, 1]} : vector<70x32xf32> to vector<63x32xf32>
    %42 = vector.extract_strided_slice %36 {offsets = [5, 0], sizes = [63, 32], strides = [1, 1]} : vector<70x32xf32> to vector<63x32xf32>
    %43 = vector.extract_strided_slice %36 {offsets = [6, 0], sizes = [63, 32], strides = [1, 1]} : vector<70x32xf32> to vector<63x32xf32>
    %44 = vector.extract_strided_slice %36 {offsets = [7, 0], sizes = [63, 32], strides = [1, 1]} : vector<70x32xf32> to vector<63x32xf32>
    %45 = tpu.concatenate %37, %38, %39, %40, %41, %42, %43, %44 in 1 : vector<63x32xf32>, vector<63x32xf32>, vector<63x32xf32>, vector<63x32xf32>, vector<63x32xf32>, vector<63x32xf32>, vector<63x32xf32>, vector<63x32xf32> -> vector<63x256xf32>
    %cst_13 = arith.constant dense<0.000000e+00> : vector<63x64xf32>
    %46 = tpu.matmul %45, %33, %cst_13 {dimension_numbers = #tpu.dot_dimension_numbers<[1], [0], [0], [1], [0, 0, 1, 1], [], []>} : vector<63x256xf32>, vector<256x64xf32>, vector<63x64xf32> -> vector<63x64xf32>
    %47 = vector.broadcast %34 : vector<1x64xf32> to vector<63x64xf32>
    %48 = arith.addf %46, %47 : vector<63x64xf32>
    %49 = tpu.iota {dimensions = array<i32: 0>} : vector<32x63xi32>
    %50 = tpu.iota {dimensions = array<i32: 1>} : vector<32x63xi32>
    %c2_i32 = arith.constant 2 : i32
    %51 = vector.broadcast %c2_i32 : i32 to vector<32x63xi32>
    %52 = arith.muli %51, %49 : vector<32x63xi32>
    %53 = arith.cmpi eq, %50, %52 : vector<32x63xi32>
    %54 = arith.extui %53 : vector<32x63xi1> to vector<32x63xi32>
    %55 = arith.sitofp %54 : vector<32x63xi32> to vector<32x63xf32>
    %cst_14 = arith.constant dense<0.000000e+00> : vector<32x64xf32>
    %56 = tpu.matmul %55, %48, %cst_14 {dimension_numbers = #tpu.dot_dimension_numbers<[1], [0], [0], [1], [0, 0, 1, 1], [], []>} : vector<32x63xf32>, vector<63x64xf32>, vector<32x64xf32> -> vector<32x64xf32>
    %cst_15 = arith.constant dense<0.000000e+00> : vector<64xf32>
    %57 = vector.multi_reduction <add>, %56, %cst_15 [0] : vector<32x64xf32> to vector<64xf32>
    %58 = vector.shape_cast %57 : vector<64xf32> to vector<1x64xf32>
    %cst_16 = arith.constant 3.125000e-02 : f32
    %59 = vector.broadcast %cst_16 : f32 to vector<1x64xf32>
    %60 = arith.mulf %58, %59 : vector<1x64xf32>
    %61 = arith.mulf %56, %56 : vector<32x64xf32>
    %cst_17 = arith.constant dense<0.000000e+00> : vector<64xf32>
    %62 = vector.multi_reduction <add>, %61, %cst_17 [0] : vector<32x64xf32> to vector<64xf32>
    %63 = vector.shape_cast %62 : vector<64xf32> to vector<1x64xf32>
    %cst_18 = arith.constant 3.125000e-02 : f32
    %64 = vector.broadcast %cst_18 : f32 to vector<1x64xf32>
    %65 = arith.mulf %63, %64 : vector<1x64xf32>
    %66 = arith.mulf %60, %60 : vector<1x64xf32>
    %67 = arith.subf %65, %66 : vector<1x64xf32>
    %68 = vector.broadcast %60 : vector<1x64xf32> to vector<32x64xf32>
    %69 = arith.subf %56, %68 : vector<32x64xf32>
    %cst_19 = arith.constant 9.99999974E-6 : f32
    %70 = vector.broadcast %cst_19 : f32 to vector<1x64xf32>
    %71 = arith.addf %67, %70 : vector<1x64xf32>
    %72 = math.rsqrt %71 : vector<1x64xf32>
    %73 = vector.broadcast %72 : vector<1x64xf32> to vector<32x64xf32>
    %74 = arith.mulf %69, %73 : vector<32x64xf32>
    %75 = vector.extract_strided_slice %74 {offsets = [0, 0], sizes = [32, 32], strides = [1, 1]} : vector<32x64xf32> to vector<32x32xf32>
    %76 = vector.extract_strided_slice %74 {offsets = [0, 32], sizes = [32, 32], strides = [1, 1]} : vector<32x64xf32> to vector<32x32xf32>
    %77 = arith.negf %76 : vector<32x32xf32>
    %78 = math.exp %77 : vector<32x32xf32>
    %cst_20 = arith.constant 1.000000e+00 : f32
    %79 = vector.broadcast %cst_20 : f32 to vector<32x32xf32>
    %80 = arith.addf %79, %78 : vector<32x32xf32>
    %81 = arith.divf %79, %80 : vector<32x32xf32>
    %82 = arith.mulf %75, %81 : vector<32x32xf32>
    %cst_21 = arith.constant 0.000000e+00 : f32
    %83 = vector.broadcast %cst_21 : f32 to vector<32x32xf32>
    %c0_22 = arith.constant 0 : index
    %c0_23 = arith.constant 0 : index
    %c0_24 = arith.constant 0 : index
    %84 = vector.load %arg6[%c0_22, %c0_23, %c0_24] : memref<5x160x64xf32, #tpu.memory_space<vmem>>, vector<1x160x64xf32>
    %85 = vector.shape_cast %84 : vector<1x160x64xf32> to vector<160x64xf32>
    %c0_25 = arith.constant 0 : index
    %c0_26 = arith.constant 0 : index
    %c0_27 = arith.constant 0 : index
    %86 = vector.load %arg7[%c0_25, %c0_26, %c0_27] : memref<5x1x64xf32, #tpu.memory_space<vmem>>, vector<1x1x64xf32>
    %87 = vector.shape_cast %86 : vector<1x1x64xf32> to vector<1x64xf32>
    %cst_28 = arith.constant 0.000000e+00 : f32
    %88 = vector.broadcast %cst_28 : f32 to vector<2x32xf32>
    %89 = tpu.concatenate %88, %82, %88 in 0 : vector<2x32xf32>, vector<32x32xf32>, vector<2x32xf32> -> vector<36x32xf32>
    %90 = vector.extract_strided_slice %89 {offsets = [0, 0], sizes = [32, 32], strides = [1, 1]} : vector<36x32xf32> to vector<32x32xf32>
    %91 = vector.extract_strided_slice %89 {offsets = [1, 0], sizes = [32, 32], strides = [1, 1]} : vector<36x32xf32> to vector<32x32xf32>
    %92 = vector.extract_strided_slice %89 {offsets = [2, 0], sizes = [32, 32], strides = [1, 1]} : vector<36x32xf32> to vector<32x32xf32>
    %93 = vector.extract_strided_slice %89 {offsets = [3, 0], sizes = [32, 32], strides = [1, 1]} : vector<36x32xf32> to vector<32x32xf32>
    %94 = vector.extract_strided_slice %89 {offsets = [4, 0], sizes = [32, 32], strides = [1, 1]} : vector<36x32xf32> to vector<32x32xf32>
    %95 = tpu.concatenate %90, %91, %92, %93, %94 in 1 : vector<32x32xf32>, vector<32x32xf32>, vector<32x32xf32>, vector<32x32xf32>, vector<32x32xf32> -> vector<32x160xf32>
    %cst_29 = arith.constant dense<0.000000e+00> : vector<32x64xf32>
    %96 = tpu.matmul %95, %85, %cst_29 {dimension_numbers = #tpu.dot_dimension_numbers<[1], [0], [0], [1], [0, 0, 1, 1], [], []>} : vector<32x160xf32>, vector<160x64xf32>, vector<32x64xf32> -> vector<32x64xf32>
    %97 = vector.broadcast %87 : vector<1x64xf32> to vector<32x64xf32>
    %98 = arith.addf %96, %97 : vector<32x64xf32>
    %99 = vector.extract_strided_slice %98 {offsets = [0, 0], sizes = [32, 32], strides = [1, 1]} : vector<32x64xf32> to vector<32x32xf32>
    %100 = math.tanh %99 : vector<32x32xf32>
    %101 = vector.extract_strided_slice %98 {offsets = [0, 32], sizes = [32, 32], strides = [1, 1]} : vector<32x64xf32> to vector<32x32xf32>
    %102 = arith.negf %101 : vector<32x32xf32>
    %103 = math.exp %102 : vector<32x32xf32>
    %cst_30 = arith.constant 1.000000e+00 : f32
    %104 = vector.broadcast %cst_30 : f32 to vector<32x32xf32>
    %105 = arith.addf %104, %103 : vector<32x32xf32>
    %106 = arith.divf %104, %105 : vector<32x32xf32>
    %107 = arith.mulf %100, %106 : vector<32x32xf32>
    %c0_31 = arith.constant 0 : index
    %c0_32 = arith.constant 0 : index
    %c0_33 = arith.constant 0 : index
    %108 = vector.load %arg8[%c0_31, %c0_32, %c0_33] : memref<5x96x32xf32, #tpu.memory_space<vmem>>, vector<1x96x32xf32>
    %109 = vector.shape_cast %108 : vector<1x96x32xf32> to vector<96x32xf32>
    %c0_34 = arith.constant 0 : index
    %c0_35 = arith.constant 0 : index
    %c0_36 = arith.constant 0 : index
    %110 = vector.load %arg9[%c0_34, %c0_35, %c0_36] : memref<5x1x32xf32, #tpu.memory_space<vmem>>, vector<1x1x32xf32>
    %111 = vector.shape_cast %110 : vector<1x1x32xf32> to vector<1x32xf32>
    %cst_37 = arith.constant 0.000000e+00 : f32
    %112 = vector.broadcast %cst_37 : f32 to vector<1x32xf32>
    %113 = tpu.concatenate %112, %107, %112 in 0 : vector<1x32xf32>, vector<32x32xf32>, vector<1x32xf32> -> vector<34x32xf32>
    %114 = vector.extract_strided_slice %113 {offsets = [0, 0], sizes = [32, 32], strides = [1, 1]} : vector<34x32xf32> to vector<32x32xf32>
    %115 = vector.extract_strided_slice %113 {offsets = [1, 0], sizes = [32, 32], strides = [1, 1]} : vector<34x32xf32> to vector<32x32xf32>
    %116 = vector.extract_strided_slice %113 {offsets = [2, 0], sizes = [32, 32], strides = [1, 1]} : vector<34x32xf32> to vector<32x32xf32>
    %117 = tpu.concatenate %114, %115, %116 in 1 : vector<32x32xf32>, vector<32x32xf32>, vector<32x32xf32> -> vector<32x96xf32>
    %cst_38 = arith.constant dense<0.000000e+00> : vector<32x32xf32>
    %118 = tpu.matmul %117, %109, %cst_38 {dimension_numbers = #tpu.dot_dimension_numbers<[1], [0], [0], [1], [0, 0, 1, 1], [], []>} : vector<32x96xf32>, vector<96x32xf32>, vector<32x32xf32> -> vector<32x32xf32>
    %119 = vector.broadcast %111 : vector<1x32xf32> to vector<32x32xf32>
    %120 = arith.addf %118, %119 : vector<32x32xf32>
    %cst_39 = arith.constant dense<0.000000e+00> : vector<32xf32>
    %121 = vector.multi_reduction <add>, %120, %cst_39 [0] : vector<32x32xf32> to vector<32xf32>
    %122 = vector.shape_cast %121 : vector<32xf32> to vector<1x32xf32>
    %cst_40 = arith.constant 3.125000e-02 : f32
    %123 = vector.broadcast %cst_40 : f32 to vector<1x32xf32>
    %124 = arith.mulf %122, %123 : vector<1x32xf32>
    %125 = arith.mulf %120, %120 : vector<32x32xf32>
    %cst_41 = arith.constant dense<0.000000e+00> : vector<32xf32>
    %126 = vector.multi_reduction <add>, %125, %cst_41 [0] : vector<32x32xf32> to vector<32xf32>
    %127 = vector.shape_cast %126 : vector<32xf32> to vector<1x32xf32>
    %cst_42 = arith.constant 3.125000e-02 : f32
    %128 = vector.broadcast %cst_42 : f32 to vector<1x32xf32>
    %129 = arith.mulf %127, %128 : vector<1x32xf32>
    %130 = arith.mulf %124, %124 : vector<1x32xf32>
    %131 = arith.subf %129, %130 : vector<1x32xf32>
    %132 = vector.broadcast %124 : vector<1x32xf32> to vector<32x32xf32>
    %133 = arith.subf %120, %132 : vector<32x32xf32>
    %cst_43 = arith.constant 9.99999974E-6 : f32
    %134 = vector.broadcast %cst_43 : f32 to vector<1x32xf32>
    %135 = arith.addf %131, %134 : vector<1x32xf32>
    %136 = math.rsqrt %135 : vector<1x32xf32>
    %137 = vector.broadcast %136 : vector<1x32xf32> to vector<32x32xf32>
    %138 = arith.mulf %133, %137 : vector<32x32xf32>
    %139 = arith.addf %82, %138 : vector<32x32xf32>
    %140 = arith.addf %83, %138 : vector<32x32xf32>
    %c1 = arith.constant 1 : index
    %c0_44 = arith.constant 0 : index
    %c0_45 = arith.constant 0 : index
    %141 = vector.load %arg6[%c1, %c0_44, %c0_45] : memref<5x160x64xf32, #tpu.memory_space<vmem>>, vector<1x160x64xf32>
    %142 = vector.shape_cast %141 : vector<1x160x64xf32> to vector<160x64xf32>
    %c1_46 = arith.constant 1 : index
    %c0_47 = arith.constant 0 : index
    %c0_48 = arith.constant 0 : index
    %143 = vector.load %arg7[%c1_46, %c0_47, %c0_48] : memref<5x1x64xf32, #tpu.memory_space<vmem>>, vector<1x1x64xf32>
    %144 = vector.shape_cast %143 : vector<1x1x64xf32> to vector<1x64xf32>
    %cst_49 = arith.constant 0.000000e+00 : f32
    %145 = vector.broadcast %cst_49 : f32 to vector<4x32xf32>
    %146 = tpu.concatenate %145, %139, %145 in 0 : vector<4x32xf32>, vector<32x32xf32>, vector<4x32xf32> -> vector<40x32xf32>
    %147 = vector.extract_strided_slice %146 {offsets = [0, 0], sizes = [32, 32], strides = [1, 1]} : vector<40x32xf32> to vector<32x32xf32>
    %148 = vector.extract_strided_slice %146 {offsets = [2, 0], sizes = [32, 32], strides = [1, 1]} : vector<40x32xf32> to vector<32x32xf32>
    %149 = vector.extract_strided_slice %146 {offsets = [4, 0], sizes = [32, 32], strides = [1, 1]} : vector<40x32xf32> to vector<32x32xf32>
    %150 = vector.extract_strided_slice %146 {offsets = [6, 0], sizes = [32, 32], strides = [1, 1]} : vector<40x32xf32> to vector<32x32xf32>
    %151 = vector.extract_strided_slice %146 {offsets = [8, 0], sizes = [32, 32], strides = [1, 1]} : vector<40x32xf32> to vector<32x32xf32>
    %152 = tpu.concatenate %147, %148, %149, %150, %151 in 1 : vector<32x32xf32>, vector<32x32xf32>, vector<32x32xf32>, vector<32x32xf32>, vector<32x32xf32> -> vector<32x160xf32>
    %cst_50 = arith.constant dense<0.000000e+00> : vector<32x64xf32>
    %153 = tpu.matmul %152, %142, %cst_50 {dimension_numbers = #tpu.dot_dimension_numbers<[1], [0], [0], [1], [0, 0, 1, 1], [], []>} : vector<32x160xf32>, vector<160x64xf32>, vector<32x64xf32> -> vector<32x64xf32>
    %154 = vector.broadcast %144 : vector<1x64xf32> to vector<32x64xf32>
    %155 = arith.addf %153, %154 : vector<32x64xf32>
    %156 = vector.extract_strided_slice %155 {offsets = [0, 0], sizes = [32, 32], strides = [1, 1]} : vector<32x64xf32> to vector<32x32xf32>
    %157 = math.tanh %156 : vector<32x32xf32>
    %158 = vector.extract_strided_slice %155 {offsets = [0, 32], sizes = [32, 32], strides = [1, 1]} : vector<32x64xf32> to vector<32x32xf32>
    %159 = arith.negf %158 : vector<32x32xf32>
    %160 = math.exp %159 : vector<32x32xf32>
    %cst_51 = arith.constant 1.000000e+00 : f32
    %161 = vector.broadcast %cst_51 : f32 to vector<32x32xf32>
    %162 = arith.addf %161, %160 : vector<32x32xf32>
    %163 = arith.divf %161, %162 : vector<32x32xf32>
    %164 = arith.mulf %157, %163 : vector<32x32xf32>
    %c1_52 = arith.constant 1 : index
    %c0_53 = arith.constant 0 : index
    %c0_54 = arith.constant 0 : index
    %165 = vector.load %arg8[%c1_52, %c0_53, %c0_54] : memref<5x96x32xf32, #tpu.memory_space<vmem>>, vector<1x96x32xf32>
    %166 = vector.shape_cast %165 : vector<1x96x32xf32> to vector<96x32xf32>
    %c1_55 = arith.constant 1 : index
    %c0_56 = arith.constant 0 : index
    %c0_57 = arith.constant 0 : index
    %167 = vector.load %arg9[%c1_55, %c0_56, %c0_57] : memref<5x1x32xf32, #tpu.memory_space<vmem>>, vector<1x1x32xf32>
    %168 = vector.shape_cast %167 : vector<1x1x32xf32> to vector<1x32xf32>
    %cst_58 = arith.constant 0.000000e+00 : f32
    %169 = vector.broadcast %cst_58 : f32 to vector<1x32xf32>
    %170 = tpu.concatenate %169, %164, %169 in 0 : vector<1x32xf32>, vector<32x32xf32>, vector<1x32xf32> -> vector<34x32xf32>
    %171 = vector.extract_strided_slice %170 {offsets = [0, 0], sizes = [32, 32], strides = [1, 1]} : vector<34x32xf32> to vector<32x32xf32>
    %172 = vector.extract_strided_slice %170 {offsets = [1, 0], sizes = [32, 32], strides = [1, 1]} : vector<34x32xf32> to vector<32x32xf32>
    %173 = vector.extract_strided_slice %170 {offsets = [2, 0], sizes = [32, 32], strides = [1, 1]} : vector<34x32xf32> to vector<32x32xf32>
    %174 = tpu.concatenate %171, %172, %173 in 1 : vector<32x32xf32>, vector<32x32xf32>, vector<32x32xf32> -> vector<32x96xf32>
    %cst_59 = arith.constant dense<0.000000e+00> : vector<32x32xf32>
    %175 = tpu.matmul %174, %166, %cst_59 {dimension_numbers = #tpu.dot_dimension_numbers<[1], [0], [0], [1], [0, 0, 1, 1], [], []>} : vector<32x96xf32>, vector<96x32xf32>, vector<32x32xf32> -> vector<32x32xf32>
    %176 = vector.broadcast %168 : vector<1x32xf32> to vector<32x32xf32>
    %177 = arith.addf %175, %176 : vector<32x32xf32>
    %cst_60 = arith.constant dense<0.000000e+00> : vector<32xf32>
    %178 = vector.multi_reduction <add>, %177, %cst_60 [0] : vector<32x32xf32> to vector<32xf32>
    %179 = vector.shape_cast %178 : vector<32xf32> to vector<1x32xf32>
    %cst_61 = arith.constant 3.125000e-02 : f32
    %180 = vector.broadcast %cst_61 : f32 to vector<1x32xf32>
    %181 = arith.mulf %179, %180 : vector<1x32xf32>
    %182 = arith.mulf %177, %177 : vector<32x32xf32>
    %cst_62 = arith.constant dense<0.000000e+00> : vector<32xf32>
    %183 = vector.multi_reduction <add>, %182, %cst_62 [0] : vector<32x32xf32> to vector<32xf32>
    %184 = vector.shape_cast %183 : vector<32xf32> to vector<1x32xf32>
    %cst_63 = arith.constant 3.125000e-02 : f32
    %185 = vector.broadcast %cst_63 : f32 to vector<1x32xf32>
    %186 = arith.mulf %184, %185 : vector<1x32xf32>
    %187 = arith.mulf %181, %181 : vector<1x32xf32>
    %188 = arith.subf %186, %187 : vector<1x32xf32>
    %189 = vector.broadcast %181 : vector<1x32xf32> to vector<32x32xf32>
    %190 = arith.subf %177, %189 : vector<32x32xf32>
    %cst_64 = arith.constant 9.99999974E-6 : f32
    %191 = vector.broadcast %cst_64 : f32 to vector<1x32xf32>
    %192 = arith.addf %188, %191 : vector<1x32xf32>
    %193 = math.rsqrt %192 : vector<1x32xf32>
    %194 = vector.broadcast %193 : vector<1x32xf32> to vector<32x32xf32>
    %195 = arith.mulf %190, %194 : vector<32x32xf32>
    %196 = arith.addf %139, %195 : vector<32x32xf32>
    %197 = arith.addf %140, %195 : vector<32x32xf32>
    %c2 = arith.constant 2 : index
    %c0_65 = arith.constant 0 : index
    %c0_66 = arith.constant 0 : index
    %198 = vector.load %arg6[%c2, %c0_65, %c0_66] : memref<5x160x64xf32, #tpu.memory_space<vmem>>, vector<1x160x64xf32>
    %199 = vector.shape_cast %198 : vector<1x160x64xf32> to vector<160x64xf32>
    %c2_67 = arith.constant 2 : index
    %c0_68 = arith.constant 0 : index
    %c0_69 = arith.constant 0 : index
    %200 = vector.load %arg7[%c2_67, %c0_68, %c0_69] : memref<5x1x64xf32, #tpu.memory_space<vmem>>, vector<1x1x64xf32>
    %201 = vector.shape_cast %200 : vector<1x1x64xf32> to vector<1x64xf32>
    %cst_70 = arith.constant 0.000000e+00 : f32
    %202 = vector.broadcast %cst_70 : f32 to vector<8x32xf32>
    %203 = tpu.concatenate %202, %196, %202 in 0 : vector<8x32xf32>, vector<32x32xf32>, vector<8x32xf32> -> vector<48x32xf32>
    %204 = vector.extract_strided_slice %203 {offsets = [0, 0], sizes = [32, 32], strides = [1, 1]} : vector<48x32xf32> to vector<32x32xf32>
    %205 = vector.extract_strided_slice %203 {offsets = [4, 0], sizes = [32, 32], strides = [1, 1]} : vector<48x32xf32> to vector<32x32xf32>
    %206 = vector.extract_strided_slice %203 {offsets = [8, 0], sizes = [32, 32], strides = [1, 1]} : vector<48x32xf32> to vector<32x32xf32>
    %207 = vector.extract_strided_slice %203 {offsets = [12, 0], sizes = [32, 32], strides = [1, 1]} : vector<48x32xf32> to vector<32x32xf32>
    %208 = vector.extract_strided_slice %203 {offsets = [16, 0], sizes = [32, 32], strides = [1, 1]} : vector<48x32xf32> to vector<32x32xf32>
    %209 = tpu.concatenate %204, %205, %206, %207, %208 in 1 : vector<32x32xf32>, vector<32x32xf32>, vector<32x32xf32>, vector<32x32xf32>, vector<32x32xf32> -> vector<32x160xf32>
    %cst_71 = arith.constant dense<0.000000e+00> : vector<32x64xf32>
    %210 = tpu.matmul %209, %199, %cst_71 {dimension_numbers = #tpu.dot_dimension_numbers<[1], [0], [0], [1], [0, 0, 1, 1], [], []>} : vector<32x160xf32>, vector<160x64xf32>, vector<32x64xf32> -> vector<32x64xf32>
    %211 = vector.broadcast %201 : vector<1x64xf32> to vector<32x64xf32>
    %212 = arith.addf %210, %211 : vector<32x64xf32>
    %213 = vector.extract_strided_slice %212 {offsets = [0, 0], sizes = [32, 32], strides = [1, 1]} : vector<32x64xf32> to vector<32x32xf32>
    %214 = math.tanh %213 : vector<32x32xf32>
    %215 = vector.extract_strided_slice %212 {offsets = [0, 32], sizes = [32, 32], strides = [1, 1]} : vector<32x64xf32> to vector<32x32xf32>
    %216 = arith.negf %215 : vector<32x32xf32>
    %217 = math.exp %216 : vector<32x32xf32>
    %cst_72 = arith.constant 1.000000e+00 : f32
    %218 = vector.broadcast %cst_72 : f32 to vector<32x32xf32>
    %219 = arith.addf %218, %217 : vector<32x32xf32>
    %220 = arith.divf %218, %219 : vector<32x32xf32>
    %221 = arith.mulf %214, %220 : vector<32x32xf32>
    %c2_73 = arith.constant 2 : index
    %c0_74 = arith.constant 0 : index
    %c0_75 = arith.constant 0 : index
    %222 = vector.load %arg8[%c2_73, %c0_74, %c0_75] : memref<5x96x32xf32, #tpu.memory_space<vmem>>, vector<1x96x32xf32>
    %223 = vector.shape_cast %222 : vector<1x96x32xf32> to vector<96x32xf32>
    %c2_76 = arith.constant 2 : index
    %c0_77 = arith.constant 0 : index
    %c0_78 = arith.constant 0 : index
    %224 = vector.load %arg9[%c2_76, %c0_77, %c0_78] : memref<5x1x32xf32, #tpu.memory_space<vmem>>, vector<1x1x32xf32>
    %225 = vector.shape_cast %224 : vector<1x1x32xf32> to vector<1x32xf32>
    %cst_79 = arith.constant 0.000000e+00 : f32
    %226 = vector.broadcast %cst_79 : f32 to vector<1x32xf32>
    %227 = tpu.concatenate %226, %221, %226 in 0 : vector<1x32xf32>, vector<32x32xf32>, vector<1x32xf32> -> vector<34x32xf32>
    %228 = vector.extract_strided_slice %227 {offsets = [0, 0], sizes = [32, 32], strides = [1, 1]} : vector<34x32xf32> to vector<32x32xf32>
    %229 = vector.extract_strided_slice %227 {offsets = [1, 0], sizes = [32, 32], strides = [1, 1]} : vector<34x32xf32> to vector<32x32xf32>
    %230 = vector.extract_strided_slice %227 {offsets = [2, 0], sizes = [32, 32], strides = [1, 1]} : vector<34x32xf32> to vector<32x32xf32>
    %231 = tpu.concatenate %228, %229, %230 in 1 : vector<32x32xf32>, vector<32x32xf32>, vector<32x32xf32> -> vector<32x96xf32>
    %cst_80 = arith.constant dense<0.000000e+00> : vector<32x32xf32>
    %232 = tpu.matmul %231, %223, %cst_80 {dimension_numbers = #tpu.dot_dimension_numbers<[1], [0], [0], [1], [0, 0, 1, 1], [], []>} : vector<32x96xf32>, vector<96x32xf32>, vector<32x32xf32> -> vector<32x32xf32>
    %233 = vector.broadcast %225 : vector<1x32xf32> to vector<32x32xf32>
    %234 = arith.addf %232, %233 : vector<32x32xf32>
    %cst_81 = arith.constant dense<0.000000e+00> : vector<32xf32>
    %235 = vector.multi_reduction <add>, %234, %cst_81 [0] : vector<32x32xf32> to vector<32xf32>
    %236 = vector.shape_cast %235 : vector<32xf32> to vector<1x32xf32>
    %cst_82 = arith.constant 3.125000e-02 : f32
    %237 = vector.broadcast %cst_82 : f32 to vector<1x32xf32>
    %238 = arith.mulf %236, %237 : vector<1x32xf32>
    %239 = arith.mulf %234, %234 : vector<32x32xf32>
    %cst_83 = arith.constant dense<0.000000e+00> : vector<32xf32>
    %240 = vector.multi_reduction <add>, %239, %cst_83 [0] : vector<32x32xf32> to vector<32xf32>
    %241 = vector.shape_cast %240 : vector<32xf32> to vector<1x32xf32>
    %cst_84 = arith.constant 3.125000e-02 : f32
    %242 = vector.broadcast %cst_84 : f32 to vector<1x32xf32>
    %243 = arith.mulf %241, %242 : vector<1x32xf32>
    %244 = arith.mulf %238, %238 : vector<1x32xf32>
    %245 = arith.subf %243, %244 : vector<1x32xf32>
    %246 = vector.broadcast %238 : vector<1x32xf32> to vector<32x32xf32>
    %247 = arith.subf %234, %246 : vector<32x32xf32>
    %cst_85 = arith.constant 9.99999974E-6 : f32
    %248 = vector.broadcast %cst_85 : f32 to vector<1x32xf32>
    %249 = arith.addf %245, %248 : vector<1x32xf32>
    %250 = math.rsqrt %249 : vector<1x32xf32>
    %251 = vector.broadcast %250 : vector<1x32xf32> to vector<32x32xf32>
    %252 = arith.mulf %247, %251 : vector<32x32xf32>
    %253 = arith.addf %196, %252 : vector<32x32xf32>
    %254 = arith.addf %197, %252 : vector<32x32xf32>
    %c3 = arith.constant 3 : index
    %c0_86 = arith.constant 0 : index
    %c0_87 = arith.constant 0 : index
    %255 = vector.load %arg6[%c3, %c0_86, %c0_87] : memref<5x160x64xf32, #tpu.memory_space<vmem>>, vector<1x160x64xf32>
    %256 = vector.shape_cast %255 : vector<1x160x64xf32> to vector<160x64xf32>
    %c3_88 = arith.constant 3 : index
    %c0_89 = arith.constant 0 : index
    %c0_90 = arith.constant 0 : index
    %257 = vector.load %arg7[%c3_88, %c0_89, %c0_90] : memref<5x1x64xf32, #tpu.memory_space<vmem>>, vector<1x1x64xf32>
    %258 = vector.shape_cast %257 : vector<1x1x64xf32> to vector<1x64xf32>
    %cst_91 = arith.constant 0.000000e+00 : f32
    %259 = vector.broadcast %cst_91 : f32 to vector<16x32xf32>
    %260 = tpu.concatenate %259, %253, %259 in 0 : vector<16x32xf32>, vector<32x32xf32>, vector<16x32xf32> -> vector<64x32xf32>
    %261 = vector.extract_strided_slice %260 {offsets = [0, 0], sizes = [32, 32], strides = [1, 1]} : vector<64x32xf32> to vector<32x32xf32>
    %262 = vector.extract_strided_slice %260 {offsets = [8, 0], sizes = [32, 32], strides = [1, 1]} : vector<64x32xf32> to vector<32x32xf32>
    %263 = vector.extract_strided_slice %260 {offsets = [16, 0], sizes = [32, 32], strides = [1, 1]} : vector<64x32xf32> to vector<32x32xf32>
    %264 = vector.extract_strided_slice %260 {offsets = [24, 0], sizes = [32, 32], strides = [1, 1]} : vector<64x32xf32> to vector<32x32xf32>
    %265 = vector.extract_strided_slice %260 {offsets = [32, 0], sizes = [32, 32], strides = [1, 1]} : vector<64x32xf32> to vector<32x32xf32>
    %266 = tpu.concatenate %261, %262, %263, %264, %265 in 1 : vector<32x32xf32>, vector<32x32xf32>, vector<32x32xf32>, vector<32x32xf32>, vector<32x32xf32> -> vector<32x160xf32>
    %cst_92 = arith.constant dense<0.000000e+00> : vector<32x64xf32>
    %267 = tpu.matmul %266, %256, %cst_92 {dimension_numbers = #tpu.dot_dimension_numbers<[1], [0], [0], [1], [0, 0, 1, 1], [], []>} : vector<32x160xf32>, vector<160x64xf32>, vector<32x64xf32> -> vector<32x64xf32>
    %268 = vector.broadcast %258 : vector<1x64xf32> to vector<32x64xf32>
    %269 = arith.addf %267, %268 : vector<32x64xf32>
    %270 = vector.extract_strided_slice %269 {offsets = [0, 0], sizes = [32, 32], strides = [1, 1]} : vector<32x64xf32> to vector<32x32xf32>
    %271 = math.tanh %270 : vector<32x32xf32>
    %272 = vector.extract_strided_slice %269 {offsets = [0, 32], sizes = [32, 32], strides = [1, 1]} : vector<32x64xf32> to vector<32x32xf32>
    %273 = arith.negf %272 : vector<32x32xf32>
    %274 = math.exp %273 : vector<32x32xf32>
    %cst_93 = arith.constant 1.000000e+00 : f32
    %275 = vector.broadcast %cst_93 : f32 to vector<32x32xf32>
    %276 = arith.addf %275, %274 : vector<32x32xf32>
    %277 = arith.divf %275, %276 : vector<32x32xf32>
    %278 = arith.mulf %271, %277 : vector<32x32xf32>
    %c3_94 = arith.constant 3 : index
    %c0_95 = arith.constant 0 : index
    %c0_96 = arith.constant 0 : index
    %279 = vector.load %arg8[%c3_94, %c0_95, %c0_96] : memref<5x96x32xf32, #tpu.memory_space<vmem>>, vector<1x96x32xf32>
    %280 = vector.shape_cast %279 : vector<1x96x32xf32> to vector<96x32xf32>
    %c3_97 = arith.constant 3 : index
    %c0_98 = arith.constant 0 : index
    %c0_99 = arith.constant 0 : index
    %281 = vector.load %arg9[%c3_97, %c0_98, %c0_99] : memref<5x1x32xf32, #tpu.memory_space<vmem>>, vector<1x1x32xf32>
    %282 = vector.shape_cast %281 : vector<1x1x32xf32> to vector<1x32xf32>
    %cst_100 = arith.constant 0.000000e+00 : f32
    %283 = vector.broadcast %cst_100 : f32 to vector<1x32xf32>
    %284 = tpu.concatenate %283, %278, %283 in 0 : vector<1x32xf32>, vector<32x32xf32>, vector<1x32xf32> -> vector<34x32xf32>
    %285 = vector.extract_strided_slice %284 {offsets = [0, 0], sizes = [32, 32], strides = [1, 1]} : vector<34x32xf32> to vector<32x32xf32>
    %286 = vector.extract_strided_slice %284 {offsets = [1, 0], sizes = [32, 32], strides = [1, 1]} : vector<34x32xf32> to vector<32x32xf32>
    %287 = vector.extract_strided_slice %284 {offsets = [2, 0], sizes = [32, 32], strides = [1, 1]} : vector<34x32xf32> to vector<32x32xf32>
    %288 = tpu.concatenate %285, %286, %287 in 1 : vector<32x32xf32>, vector<32x32xf32>, vector<32x32xf32> -> vector<32x96xf32>
    %cst_101 = arith.constant dense<0.000000e+00> : vector<32x32xf32>
    %289 = tpu.matmul %288, %280, %cst_101 {dimension_numbers = #tpu.dot_dimension_numbers<[1], [0], [0], [1], [0, 0, 1, 1], [], []>} : vector<32x96xf32>, vector<96x32xf32>, vector<32x32xf32> -> vector<32x32xf32>
    %290 = vector.broadcast %282 : vector<1x32xf32> to vector<32x32xf32>
    %291 = arith.addf %289, %290 : vector<32x32xf32>
    %cst_102 = arith.constant dense<0.000000e+00> : vector<32xf32>
    %292 = vector.multi_reduction <add>, %291, %cst_102 [0] : vector<32x32xf32> to vector<32xf32>
    %293 = vector.shape_cast %292 : vector<32xf32> to vector<1x32xf32>
    %cst_103 = arith.constant 3.125000e-02 : f32
    %294 = vector.broadcast %cst_103 : f32 to vector<1x32xf32>
    %295 = arith.mulf %293, %294 : vector<1x32xf32>
    %296 = arith.mulf %291, %291 : vector<32x32xf32>
    %cst_104 = arith.constant dense<0.000000e+00> : vector<32xf32>
    %297 = vector.multi_reduction <add>, %296, %cst_104 [0] : vector<32x32xf32> to vector<32xf32>
    %298 = vector.shape_cast %297 : vector<32xf32> to vector<1x32xf32>
    %cst_105 = arith.constant 3.125000e-02 : f32
    %299 = vector.broadcast %cst_105 : f32 to vector<1x32xf32>
    %300 = arith.mulf %298, %299 : vector<1x32xf32>
    %301 = arith.mulf %295, %295 : vector<1x32xf32>
    %302 = arith.subf %300, %301 : vector<1x32xf32>
    %303 = vector.broadcast %295 : vector<1x32xf32> to vector<32x32xf32>
    %304 = arith.subf %291, %303 : vector<32x32xf32>
    %cst_106 = arith.constant 9.99999974E-6 : f32
    %305 = vector.broadcast %cst_106 : f32 to vector<1x32xf32>
    %306 = arith.addf %302, %305 : vector<1x32xf32>
    %307 = math.rsqrt %306 : vector<1x32xf32>
    %308 = vector.broadcast %307 : vector<1x32xf32> to vector<32x32xf32>
    %309 = arith.mulf %304, %308 : vector<32x32xf32>
    %310 = arith.addf %253, %309 : vector<32x32xf32>
    %311 = arith.addf %254, %309 : vector<32x32xf32>
    %c4 = arith.constant 4 : index
    %c0_107 = arith.constant 0 : index
    %c0_108 = arith.constant 0 : index
    %312 = vector.load %arg6[%c4, %c0_107, %c0_108] : memref<5x160x64xf32, #tpu.memory_space<vmem>>, vector<1x160x64xf32>
    %313 = vector.shape_cast %312 : vector<1x160x64xf32> to vector<160x64xf32>
    %c4_109 = arith.constant 4 : index
    %c0_110 = arith.constant 0 : index
    %c0_111 = arith.constant 0 : index
    %314 = vector.load %arg7[%c4_109, %c0_110, %c0_111] : memref<5x1x64xf32, #tpu.memory_space<vmem>>, vector<1x1x64xf32>
    %315 = vector.shape_cast %314 : vector<1x1x64xf32> to vector<1x64xf32>
    %cst_112 = arith.constant 0.000000e+00 : f32
    %316 = vector.broadcast %cst_112 : f32 to vector<32x32xf32>
    %317 = tpu.concatenate %316, %310, %316 in 0 : vector<32x32xf32>, vector<32x32xf32>, vector<32x32xf32> -> vector<96x32xf32>
    %318 = vector.extract_strided_slice %317 {offsets = [0, 0], sizes = [32, 32], strides = [1, 1]} : vector<96x32xf32> to vector<32x32xf32>
    %319 = vector.extract_strided_slice %317 {offsets = [16, 0], sizes = [32, 32], strides = [1, 1]} : vector<96x32xf32> to vector<32x32xf32>
    %320 = vector.extract_strided_slice %317 {offsets = [32, 0], sizes = [32, 32], strides = [1, 1]} : vector<96x32xf32> to vector<32x32xf32>
    %321 = vector.extract_strided_slice %317 {offsets = [48, 0], sizes = [32, 32], strides = [1, 1]} : vector<96x32xf32> to vector<32x32xf32>
    %322 = vector.extract_strided_slice %317 {offsets = [64, 0], sizes = [32, 32], strides = [1, 1]} : vector<96x32xf32> to vector<32x32xf32>
    %323 = tpu.concatenate %318, %319, %320, %321, %322 in 1 : vector<32x32xf32>, vector<32x32xf32>, vector<32x32xf32>, vector<32x32xf32>, vector<32x32xf32> -> vector<32x160xf32>
    %cst_113 = arith.constant dense<0.000000e+00> : vector<32x64xf32>
    %324 = tpu.matmul %323, %313, %cst_113 {dimension_numbers = #tpu.dot_dimension_numbers<[1], [0], [0], [1], [0, 0, 1, 1], [], []>} : vector<32x160xf32>, vector<160x64xf32>, vector<32x64xf32> -> vector<32x64xf32>
    %325 = vector.broadcast %315 : vector<1x64xf32> to vector<32x64xf32>
    %326 = arith.addf %324, %325 : vector<32x64xf32>
    %327 = vector.extract_strided_slice %326 {offsets = [0, 0], sizes = [32, 32], strides = [1, 1]} : vector<32x64xf32> to vector<32x32xf32>
    %328 = math.tanh %327 : vector<32x32xf32>
    %329 = vector.extract_strided_slice %326 {offsets = [0, 32], sizes = [32, 32], strides = [1, 1]} : vector<32x64xf32> to vector<32x32xf32>
    %330 = arith.negf %329 : vector<32x32xf32>
    %331 = math.exp %330 : vector<32x32xf32>
    %cst_114 = arith.constant 1.000000e+00 : f32
    %332 = vector.broadcast %cst_114 : f32 to vector<32x32xf32>
    %333 = arith.addf %332, %331 : vector<32x32xf32>
    %334 = arith.divf %332, %333 : vector<32x32xf32>
    %335 = arith.mulf %328, %334 : vector<32x32xf32>
    %c4_115 = arith.constant 4 : index
    %c0_116 = arith.constant 0 : index
    %c0_117 = arith.constant 0 : index
    %336 = vector.load %arg8[%c4_115, %c0_116, %c0_117] : memref<5x96x32xf32, #tpu.memory_space<vmem>>, vector<1x96x32xf32>
    %337 = vector.shape_cast %336 : vector<1x96x32xf32> to vector<96x32xf32>
    %c4_118 = arith.constant 4 : index
    %c0_119 = arith.constant 0 : index
    %c0_120 = arith.constant 0 : index
    %338 = vector.load %arg9[%c4_118, %c0_119, %c0_120] : memref<5x1x32xf32, #tpu.memory_space<vmem>>, vector<1x1x32xf32>
    %339 = vector.shape_cast %338 : vector<1x1x32xf32> to vector<1x32xf32>
    %cst_121 = arith.constant 0.000000e+00 : f32
    %340 = vector.broadcast %cst_121 : f32 to vector<1x32xf32>
    %341 = tpu.concatenate %340, %335, %340 in 0 : vector<1x32xf32>, vector<32x32xf32>, vector<1x32xf32> -> vector<34x32xf32>
    %342 = vector.extract_strided_slice %341 {offsets = [0, 0], sizes = [32, 32], strides = [1, 1]} : vector<34x32xf32> to vector<32x32xf32>
    %343 = vector.extract_strided_slice %341 {offsets = [1, 0], sizes = [32, 32], strides = [1, 1]} : vector<34x32xf32> to vector<32x32xf32>
    %344 = vector.extract_strided_slice %341 {offsets = [2, 0], sizes = [32, 32], strides = [1, 1]} : vector<34x32xf32> to vector<32x32xf32>
    %345 = tpu.concatenate %342, %343, %344 in 1 : vector<32x32xf32>, vector<32x32xf32>, vector<32x32xf32> -> vector<32x96xf32>
    %cst_122 = arith.constant dense<0.000000e+00> : vector<32x32xf32>
    %346 = tpu.matmul %345, %337, %cst_122 {dimension_numbers = #tpu.dot_dimension_numbers<[1], [0], [0], [1], [0, 0, 1, 1], [], []>} : vector<32x96xf32>, vector<96x32xf32>, vector<32x32xf32> -> vector<32x32xf32>
    %347 = vector.broadcast %339 : vector<1x32xf32> to vector<32x32xf32>
    %348 = arith.addf %346, %347 : vector<32x32xf32>
    %cst_123 = arith.constant dense<0.000000e+00> : vector<32xf32>
    %349 = vector.multi_reduction <add>, %348, %cst_123 [0] : vector<32x32xf32> to vector<32xf32>
    %350 = vector.shape_cast %349 : vector<32xf32> to vector<1x32xf32>
    %cst_124 = arith.constant 3.125000e-02 : f32
    %351 = vector.broadcast %cst_124 : f32 to vector<1x32xf32>
    %352 = arith.mulf %350, %351 : vector<1x32xf32>
    %353 = arith.mulf %348, %348 : vector<32x32xf32>
    %cst_125 = arith.constant dense<0.000000e+00> : vector<32xf32>
    %354 = vector.multi_reduction <add>, %353, %cst_125 [0] : vector<32x32xf32> to vector<32xf32>
    %355 = vector.shape_cast %354 : vector<32xf32> to vector<1x32xf32>
    %cst_126 = arith.constant 3.125000e-02 : f32
    %356 = vector.broadcast %cst_126 : f32 to vector<1x32xf32>
    %357 = arith.mulf %355, %356 : vector<1x32xf32>
    %358 = arith.mulf %352, %352 : vector<1x32xf32>
    %359 = arith.subf %357, %358 : vector<1x32xf32>
    %360 = vector.broadcast %352 : vector<1x32xf32> to vector<32x32xf32>
    %361 = arith.subf %348, %360 : vector<32x32xf32>
    %cst_127 = arith.constant 9.99999974E-6 : f32
    %362 = vector.broadcast %cst_127 : f32 to vector<1x32xf32>
    %363 = arith.addf %359, %362 : vector<1x32xf32>
    %364 = math.rsqrt %363 : vector<1x32xf32>
    %365 = vector.broadcast %364 : vector<1x32xf32> to vector<32x32xf32>
    %366 = arith.mulf %361, %365 : vector<32x32xf32>
    %367 = arith.addf %311, %366 : vector<32x32xf32>
    %c0_128 = arith.constant 0 : index
    %c0_129 = arith.constant 0 : index
    %368 = vector.load %arg10[%c0_128, %c0_129] : memref<160x32xf32, #tpu.memory_space<vmem>>, vector<160x32xf32>
    %c0_130 = arith.constant 0 : index
    %c0_131 = arith.constant 0 : index
    %369 = vector.load %arg11[%c0_130, %c0_131] : memref<1x32xf32, #tpu.memory_space<vmem>>, vector<1x32xf32>
    %cst_132 = arith.constant 0.000000e+00 : f32
    %370 = vector.broadcast %cst_132 : f32 to vector<2x32xf32>
    %371 = tpu.concatenate %370, %367, %370 in 0 : vector<2x32xf32>, vector<32x32xf32>, vector<2x32xf32> -> vector<36x32xf32>
    %372 = vector.extract_strided_slice %371 {offsets = [0, 0], sizes = [32, 32], strides = [1, 1]} : vector<36x32xf32> to vector<32x32xf32>
    %373 = vector.extract_strided_slice %371 {offsets = [1, 0], sizes = [32, 32], strides = [1, 1]} : vector<36x32xf32> to vector<32x32xf32>
    %374 = vector.extract_strided_slice %371 {offsets = [2, 0], sizes = [32, 32], strides = [1, 1]} : vector<36x32xf32> to vector<32x32xf32>
    %375 = vector.extract_strided_slice %371 {offsets = [3, 0], sizes = [32, 32], strides = [1, 1]} : vector<36x32xf32> to vector<32x32xf32>
    %376 = vector.extract_strided_slice %371 {offsets = [4, 0], sizes = [32, 32], strides = [1, 1]} : vector<36x32xf32> to vector<32x32xf32>
    %377 = tpu.concatenate %372, %373, %374, %375, %376 in 1 : vector<32x32xf32>, vector<32x32xf32>, vector<32x32xf32>, vector<32x32xf32>, vector<32x32xf32> -> vector<32x160xf32>
    %cst_133 = arith.constant dense<0.000000e+00> : vector<32x32xf32>
    %378 = tpu.matmul %377, %368, %cst_133 {dimension_numbers = #tpu.dot_dimension_numbers<[1], [0], [0], [1], [0, 0, 1, 1], [], []>} : vector<32x160xf32>, vector<160x32xf32>, vector<32x32xf32> -> vector<32x32xf32>
    %379 = vector.broadcast %369 : vector<1x32xf32> to vector<32x32xf32>
    %380 = arith.addf %378, %379 : vector<32x32xf32>
    %cst_134 = arith.constant dense<0.000000e+00> : vector<32xf32>
    %381 = vector.multi_reduction <add>, %380, %cst_134 [0] : vector<32x32xf32> to vector<32xf32>
    %382 = vector.shape_cast %381 : vector<32xf32> to vector<1x32xf32>
    %cst_135 = arith.constant 3.125000e-02 : f32
    %383 = vector.broadcast %cst_135 : f32 to vector<1x32xf32>
    %384 = arith.mulf %382, %383 : vector<1x32xf32>
    %385 = arith.mulf %380, %380 : vector<32x32xf32>
    %cst_136 = arith.constant dense<0.000000e+00> : vector<32xf32>
    %386 = vector.multi_reduction <add>, %385, %cst_136 [0] : vector<32x32xf32> to vector<32xf32>
    %387 = vector.shape_cast %386 : vector<32xf32> to vector<1x32xf32>
    %cst_137 = arith.constant 3.125000e-02 : f32
    %388 = vector.broadcast %cst_137 : f32 to vector<1x32xf32>
    %389 = arith.mulf %387, %388 : vector<1x32xf32>
    %390 = arith.mulf %384, %384 : vector<1x32xf32>
    %391 = arith.subf %389, %390 : vector<1x32xf32>
    %392 = vector.broadcast %384 : vector<1x32xf32> to vector<32x32xf32>
    %393 = arith.subf %380, %392 : vector<32x32xf32>
    %cst_138 = arith.constant 9.99999974E-6 : f32
    %394 = vector.broadcast %cst_138 : f32 to vector<1x32xf32>
    %395 = arith.addf %391, %394 : vector<1x32xf32>
    %396 = math.rsqrt %395 : vector<1x32xf32>
    %397 = vector.broadcast %396 : vector<1x32xf32> to vector<32x32xf32>
    %398 = arith.mulf %393, %397 : vector<32x32xf32>
    %399 = vector.extract_strided_slice %398 {offsets = [0, 0], sizes = [32, 16], strides = [1, 1]} : vector<32x32xf32> to vector<32x16xf32>
    %400 = vector.extract_strided_slice %398 {offsets = [0, 16], sizes = [32, 16], strides = [1, 1]} : vector<32x32xf32> to vector<32x16xf32>
    %401 = arith.negf %400 : vector<32x16xf32>
    %402 = math.exp %401 : vector<32x16xf32>
    %cst_139 = arith.constant 1.000000e+00 : f32
    %403 = vector.broadcast %cst_139 : f32 to vector<32x16xf32>
    %404 = arith.addf %403, %402 : vector<32x16xf32>
    %405 = arith.divf %403, %404 : vector<32x16xf32>
    %406 = arith.mulf %399, %405 : vector<32x16xf32>
    %c0_140 = arith.constant 0 : index
    %c0_141 = arith.constant 0 : index
    %407 = vector.load %arg12[%c0_140, %c0_141] : memref<16x16xf32, #tpu.memory_space<vmem>>, vector<16x16xf32>
    %c0_142 = arith.constant 0 : index
    %c0_143 = arith.constant 0 : index
    %408 = vector.load %arg13[%c0_142, %c0_143] : memref<1x16xf32, #tpu.memory_space<vmem>>, vector<1x16xf32>
    %cst_144 = arith.constant dense<0.000000e+00> : vector<32x16xf32>
    %409 = tpu.matmul %406, %407, %cst_144 {dimension_numbers = #tpu.dot_dimension_numbers<[1], [0], [0], [1], [0, 0, 1, 1], [], []>} : vector<32x16xf32>, vector<16x16xf32>, vector<32x16xf32> -> vector<32x16xf32>
    %410 = vector.broadcast %408 : vector<1x16xf32> to vector<32x16xf32>
    %411 = arith.addf %409, %410 : vector<32x16xf32>
    %c0_145 = arith.constant 0 : index
    %c0_146 = arith.constant 0 : index
    %c0_147 = arith.constant 0 : index
    %412 = vector.load %arg14[%c0_145, %c0_146, %c0_147] : memref<1x32x16xf32, #tpu.memory_space<vmem>>, vector<1x32x16xf32>
    %413 = vector.shape_cast %412 : vector<1x32x16xf32> to vector<32x16xf32>
    %414 = vector.shape_cast %411 : vector<32x16xf32> to vector<1x32x16xf32>
    tpu.vector_store %arg14[%c0_145, %c0_146, %c0_147], %414 {strides = array<i32>} : memref<1x32x16xf32, #tpu.memory_space<vmem>>, vector<1x32x16xf32>,
    return
  }
  func.func @transform_0(%arg0: i32) -> (i32, i32, i32) {
    %c0_i32 = arith.constant 0 : i32
    %c0_i32_0 = arith.constant 0 : i32
    %c0_i32_1 = arith.constant 0 : i32
    return %arg0, %c0_i32, %c0_i32_0 : i32, i32, i32
  }
  func.func @transform_1(%arg0: i32) -> (i32, i32) {
    %c0_i32 = arith.constant 0 : i32
    %c0_i32_0 = arith.constant 0 : i32
    %c0_i32_1 = arith.constant 0 : i32
    return %c0_i32, %c0_i32_0 : i32, i32
  }
  func.func @transform_2(%arg0: i32) -> (i32, i32) {
    %c0_i32 = arith.constant 0 : i32
    %c0_i32_0 = arith.constant 0 : i32
    %c0_i32_1 = arith.constant 0 : i32
    return %c0_i32, %c0_i32_0 : i32, i32
  }
  func.func @transform_3(%arg0: i32) -> (i32, i32) {
    %c0_i32 = arith.constant 0 : i32
    %c0_i32_0 = arith.constant 0 : i32
    %c0_i32_1 = arith.constant 0 : i32
    return %c0_i32, %c0_i32_0 : i32, i32
  }
  func.func @transform_4(%arg0: i32) -> (i32, i32) {
    %c0_i32 = arith.constant 0 : i32
    %c0_i32_0 = arith.constant 0 : i32
    %c0_i32_1 = arith.constant 0 : i32
    return %c0_i32, %c0_i32_0 : i32, i32
  }
  func.func @transform_5(%arg0: i32) -> (i32, i32, i32) {
    %c0_i32 = arith.constant 0 : i32
    %c0_i32_0 = arith.constant 0 : i32
    %c0_i32_1 = arith.constant 0 : i32
    %c0_i32_2 = arith.constant 0 : i32
    return %c0_i32, %c0_i32_0, %c0_i32_1 : i32, i32, i32
  }
  func.func @transform_6(%arg0: i32) -> (i32, i32, i32) {
    %c0_i32 = arith.constant 0 : i32
    %c0_i32_0 = arith.constant 0 : i32
    %c0_i32_1 = arith.constant 0 : i32
    %c0_i32_2 = arith.constant 0 : i32
    return %c0_i32, %c0_i32_0, %c0_i32_1 : i32, i32, i32
  }
  func.func @transform_7(%arg0: i32) -> (i32, i32, i32) {
    %c0_i32 = arith.constant 0 : i32
    %c0_i32_0 = arith.constant 0 : i32
    %c0_i32_1 = arith.constant 0 : i32
    %c0_i32_2 = arith.constant 0 : i32
    return %c0_i32, %c0_i32_0, %c0_i32_1 : i32, i32, i32
  }
  func.func @transform_8(%arg0: i32) -> (i32, i32, i32) {
    %c0_i32 = arith.constant 0 : i32
    %c0_i32_0 = arith.constant 0 : i32
    %c0_i32_1 = arith.constant 0 : i32
    %c0_i32_2 = arith.constant 0 : i32
    return %c0_i32, %c0_i32_0, %c0_i32_1 : i32, i32, i32
  }
  func.func @transform_9(%arg0: i32) -> (i32, i32) {
    %c0_i32 = arith.constant 0 : i32
    %c0_i32_0 = arith.constant 0 : i32
    %c0_i32_1 = arith.constant 0 : i32
    return %c0_i32, %c0_i32_0 : i32, i32
  }
  func.func @transform_10(%arg0: i32) -> (i32, i32) {
    %c0_i32 = arith.constant 0 : i32
    %c0_i32_0 = arith.constant 0 : i32
    %c0_i32_1 = arith.constant 0 : i32
    return %c0_i32, %c0_i32_0 : i32, i32
  }
  func.func @transform_11(%arg0: i32) -> (i32, i32) {
    %c0_i32 = arith.constant 0 : i32
    %c0_i32_0 = arith.constant 0 : i32
    %c0_i32_1 = arith.constant 0 : i32
    return %c0_i32, %c0_i32_0 : i32, i32
  }
  func.func @transform_12(%arg0: i32) -> (i32, i32) {
    %c0_i32 = arith.constant 0 : i32
    %c0_i32_0 = arith.constant 0 : i32
    %c0_i32_1 = arith.constant 0 : i32
    return %c0_i32, %c0_i32_0 : i32, i32
  }
  func.func @transform_13(%arg0: i32) -> (i32, i32, i32) {
    %c0_i32 = arith.constant 0 : i32
    %c0_i32_0 = arith.constant 0 : i32
    %c0_i32_1 = arith.constant 0 : i32
    return %arg0, %c0_i32, %c0_i32_0 : i32, i32, i32
  }
}

</mosaic_0001>

<llo_original>
// kernel: encoder_forward.1
$region0: #{encoder_forward.1}
  #allocation0 [shape = 'u32[]', space=smem, size = 0x4, offset = 0x4, fixed_abs, tag = 'smem constant byte address 0x4 - core index']
  #allocation1 [shape = 'u32[144,128]{1,0:T(1,128)}', space=vmem, size = 0x12000, scoped, tag = 'internal scratch']
  %s0 = inlined_call_operand.vmem [shape: f32[2,64,8], index: 0, kind: input, shape index: {}]
  %s1 = inlined_call_operand.vmem [shape: f32[120,64], index: 1, kind: input, shape index: {}]
  %s2 = inlined_call_operand.vmem [shape: f32[1,64], index: 2, kind: input, shape index: {}]
  %s3 = inlined_call_operand.vmem [shape: f32[256,64], index: 3, kind: input, shape index: {}]
  %s4 = inlined_call_operand.vmem [shape: f32[1,64], index: 4, kind: input, shape index: {}]
  %s5 = inlined_call_operand.vmem [shape: f32[5,160,64], index: 5, kind: input, shape index: {}]
  %s6 = inlined_call_operand.vmem [shape: f32[5,1,64], index: 6, kind: input, shape index: {}]
  %s7 = inlined_call_operand.vmem [shape: f32[5,96,32], index: 7, kind: input, shape index: {}]
  %s8 = inlined_call_operand.vmem [shape: f32[5,1,32], index: 8, kind: input, shape index: {}]
  %s9 = inlined_call_operand.vmem [shape: f32[160,32], index: 9, kind: input, shape index: {}]
  %s10 = inlined_call_operand.vmem [shape: f32[1,32], index: 10, kind: input, shape index: {}]
  %s11 = inlined_call_operand.vmem [shape: f32[16,16], index: 11, kind: input, shape index: {}]
  %s12 = inlined_call_operand.vmem [shape: f32[1,16], index: 12, kind: input, shape index: {}]
  %s13 = inlined_call_operand.vmem [shape: f32[2,32,16], index: 13, kind: output, shape index: {}]
  %s14 = sld [smem:[#allocation0]]
  $region85: #{encoder_forward.1} parent=0
    _
  %s16 = ssub.s32 1, %s14
  %s17 = scalar_select 0, %s16, %s14
  loop: start=0, step=1, limit=4
  $region2: #{encoder_forward.1} parent=0 // loop_pre_header
    _
  $region3: #{encoder_forward.1} parent=0 // loop_header
    %s19 = sphi 0, %s23
    %p20 = scmp.ge.s32.totalorder %s19, 4
    %s29 = sphi 0, %s31
    %s32 = sphi 0, %s29
    %s33 = sphi 0, %s32
    %s49 = sphi 0, %s33
    %s53 = sphi 0, %s53
    %s55 = sphi 0, %s53
    %s56 = sphi 0, %s55
    %s70 = sphi 0, %s56
    %s74 = sphi 0, %s74
    %s76 = sphi 0, %s74
    %s77 = sphi 0, %s76
    %s91 = sphi 0, %s77
    %s95 = sphi 0, %s95
    %s97 = sphi 0, %s95
    %s98 = sphi 0, %s97
    %s112 = sphi 0, %s98
    %s116 = sphi 0, %s116
    %s118 = sphi 0, %s116
    %s119 = sphi 0, %s118
    %s133 = sphi 0, %s119
    %s137 = sphi 0, %s137
    %s139 = sphi 0, %s137
    %s140 = sphi 0, %s139
    %s154 = sphi 0, %s140
    %s158 = sphi 0, %s158
    %s160 = sphi 0, %s158
    %s161 = sphi 0, %s160
    %s175 = sphi 0, %s161
    %s179 = sphi 0, %s179
    %s181 = sphi 0, %s179
    %s182 = sphi 0, %s181
    %s196 = sphi 0, %s182
    %s200 = sphi 0, %s200
    %s202 = sphi 0, %s200
    %s203 = sphi 0, %s202
    %s217 = sphi 0, %s203
    %s221 = sphi 0, %s221
    %s223 = sphi 0, %s221
    %s224 = sphi 0, %s223
    %s238 = sphi 0, %s224
    %s242 = sphi 0, %s242
    %s244 = sphi 0, %s242
    %s245 = sphi 0, %s244
    %s259 = sphi 0, %s245
    %s263 = sphi 0, %s263
    %s265 = sphi 0, %s263
    %s266 = sphi 0, %s265
    %s280 = sphi 0, %s266
    %s284 = sphi 0, %s284
    %s286 = sphi 0, %s284
    %s287 = sphi 0, %s286
    %s301 = sphi 0, %s287
    %s307 = sphi 0, %s309
    %s310 = sphi 0, %s307
    %s311 = sphi 0, %s310
    %s327 = sphi 0, %s311
  $region4: #{encoder_forward.1} parent=0 // loop_header_branch
    %22 = sbr.rel (%p20) target = $region8
  $region5: #{encoder_forward.1} parent=0 // loop_body
    %s24 = ssub.s32 %s19, 1
    %s25 = ssub.s32 %s19, 2
    %s26 = sadd.s32 %s19, 1
    %s27 = ssub.s32 %s19, %s26
    %p28 = scmp.eq.s32.totalorder %s27, 0
    %s30 = sadd.s32 %s29, 1
    %s31 = scalar_select %p28, %s29, %s30
    %p34 = pneg %p28
    %p35 = scmp.eq.s32.totalorder %s19, 1
    %p36 = por %p34, %p35
    %p37 = scmp.ne.s32.totalorder %s29, %s32
    %p38 = scmp.eq.s32.totalorder %s19, 0
    %p39 = por %p37, %p38
    %p40 = scmp.ne.s32.totalorder %s29, %s32
    %p41 = scmp.eq.s32.totalorder %s24, 1
    %p42 = por %p40, %p41
    %p43 = scmp.ne.s32.totalorder %s32, %s33
    %p44 = scmp.eq.s32.totalorder %s24, 0
    %p45 = por %p43, %p44
    %p46 = scmp.ne.s32.totalorder %s32, %s33
    %p47 = scmp.eq.s32.totalorder %s25, 1
    %p48 = por %p46, %p47
    %p50 = scmp.ne.s32.totalorder %s33, %s49
    %p51 = scmp.eq.s32.totalorder %s25, 0
    %p52 = por %p50, %p51
    %s54 = sadd.s32 %s53, 1
    %p57 = scmp.eq.s32.totalorder %s19, 1
    %p58 = scmp.ne.s32.totalorder %s53, %s55
    %p59 = scmp.eq.s32.totalorder %s19, 0
    %p60 = por %p58, %p59
    %p61 = scmp.ne.s32.totalorder %s53, %s55
    %p62 = scmp.eq.s32.totalorder %s24, 1
    %p63 = por %p61, %p62
    %p64 = scmp.ne.s32.totalorder %s55, %s56
    %p65 = scmp.eq.s32.totalorder %s24, 0
    %p66 = por %p64, %p65
    %p67 = scmp.ne.s32.totalorder %s55, %s56
    %p68 = scmp.eq.s32.totalorder %s25, 1
    %p69 = por %p67, %p68
    %p71 = scmp.ne.s32.totalorder %s56, %s70
    %p72 = scmp.eq.s32.totalorder %s25, 0
    %p73 = por %p71, %p72
    %s75 = sadd.s32 %s74, 1
    %p78 = scmp.eq.s32.totalorder %s19, 1
    %p79 = scmp.ne.s32.totalorder %s74, %s76
    %p80 = scmp.eq.s32.totalorder %s19, 0
    %p81 = por %p79, %p80
    %p82 = scmp.ne.s32.totalorder %s74, %s76
    %p83 = scmp.eq.s32.totalorder %s24, 1
    %p84 = por %p82, %p83
    %p85 = scmp.ne.s32.totalorder %s76, %s77
    %p86 = scmp.eq.s32.totalorder %s24, 0
    %p87 = por %p85, %p86
    %p88 = scmp.ne.s32.totalorder %s76, %s77
    %p89 = scmp.eq.s32.totalorder %s25, 1
    %p90 = por %p88, %p89
    %p92 = scmp.ne.s32.totalorder %s77, %s91
    %p93 = scmp.eq.s32.totalorder %s25, 0
    %p94 = por %p92, %p93
    %s96 = sadd.s32 %s95, 1
    %p99 = scmp.eq.s32.totalorder %s19, 1
    %p100 = scmp.ne.s32.totalorder %s95, %s97
    %p101 = scmp.eq.s32.totalorder %s19, 0
    %p102 = por %p100, %p101
    %p103 = scmp.ne.s32.totalorder %s95, %s97
    %p104 = scmp.eq.s32.totalorder %s24, 1
    %p105 = por %p103, %p104
    %p106 = scmp.ne.s32.totalorder %s97, %s98
    %p107 = scmp.eq.s32.totalorder %s24, 0
    %p108 = por %p106, %p107
    %p109 = scmp.ne.s32.totalorder %s97, %s98
    %p110 = scmp.eq.s32.totalorder %s25, 1
    %p111 = por %p109, %p110
    %p113 = scmp.ne.s32.totalorder %s98, %s112
    %p114 = scmp.eq.s32.totalorder %s25, 0
    %p115 = por %p113, %p114
    %s117 = sadd.s32 %s116, 1
    %p120 = scmp.eq.s32.totalorder %s19, 1
    %p121 = scmp.ne.s32.totalorder %s116, %s118
    %p122 = scmp.eq.s32.totalorder %s19, 0
    %p123 = por %p121, %p122
    %p124 = scmp.ne.s32.totalorder %s116, %s118
    %p125 = scmp.eq.s32.totalorder %s24, 1
    %p126 = por %p124, %p125
    %p127 = scmp.ne.s32.totalorder %s118, %s119
    %p128 = scmp.eq.s32.totalorder %s24, 0
    %p129 = por %p127, %p128
    %p130 = scmp.ne.s32.totalorder %s118, %s119
    %p131 = scmp.eq.s32.totalorder %s25, 1
    %p132 = por %p130, %p131
    %p134 = scmp.ne.s32.totalorder %s119, %s133
    %p135 = scmp.eq.s32.totalorder %s25, 0
    %p136 = por %p134, %p135
    %s138 = sadd.s32 %s137, 1
    %p141 = scmp.eq.s32.totalorder %s19, 1
    %p142 = scmp.ne.s32.totalorder %s137, %s139
    %p143 = scmp.eq.s32.totalorder %s19, 0
    %p144 = por %p142, %p143
    %p145 = scmp.ne.s32.totalorder %s137, %s139
    %p146 = scmp.eq.s32.totalorder %s24, 1
    %p147 = por %p145, %p146
    %p148 = scmp.ne.s32.totalorder %s139, %s140
    %p149 = scmp.eq.s32.totalorder %s24, 0
    %p150 = por %p148, %p149
    %p151 = scmp.ne.s32.totalorder %s139, %s140
    %p152 = scmp.eq.s32.totalorder %s25, 1
    %p153 = por %p151, %p152
    %p155 = scmp.ne.s32.totalorder %s140, %s154
    %p156 = scmp.eq.s32.totalorder %s25, 0
    %p157 = por %p155, %p156
    %s159 = sadd.s32 %s158, 1
    %p162 = scmp.eq.s32.totalorder %s19, 1
    %p163 = scmp.ne.s32.totalorder %s158, %s160
    %p164 = scmp.eq.s32.totalorder %s19, 0
    %p165 = por %p163, %p164
    %p166 = scmp.ne.s32.totalorder %s158, %s160
    %p167 = scmp.eq.s32.totalorder %s24, 1
    %p168 = por %p166, %p167
    %p169 = scmp.ne.s32.totalorder %s160, %s161
    %p170 = scmp.eq.s32.totalorder %s24, 0
    %p171 = por %p169, %p170
    %p172 = scmp.ne.s32.totalorder %s160, %s161
    %p173 = scmp.eq.s32.totalorder %s25, 1
    %p174 = por %p172, %p173
    %p176 = scmp.ne.s32.totalorder %s161, %s175
    %p177 = scmp.eq.s32.totalorder %s25, 0
    %p178 = por %p176, %p177
    %s180 = sadd.s32 %s179, 1
    %p183 = scmp.eq.s32.totalorder %s19, 1
    %p184 = scmp.ne.s32.totalorder %s179, %s181
    %p185 = scmp.eq.s32.totalorder %s19, 0
    %p186 = por %p184, %p185
    %p187 = scmp.ne.s32.totalorder %s179, %s181
    %p188 = scmp.eq.s32.totalorder %s24, 1
    %p189 = por %p187, %p188
    %p190 = scmp.ne.s32.totalorder %s181, %s182
    %p191 = scmp.eq.s32.totalorder %s24, 0
    %p192 = por %p190, %p191
    %p193 = scmp.ne.s32.totalorder %s181, %s182
    %p194 = scmp.eq.s32.totalorder %s25, 1
    %p195 = por %p193, %p194
    %p197 = scmp.ne.s32.totalorder %s182, %s196
    %p198 = scmp.eq.s32.totalorder %s25, 0
    %p199 = por %p197, %p198
    %s201 = sadd.s32 %s200, 1
    %p204 = scmp.eq.s32.totalorder %s19, 1
    %p205 = scmp.ne.s32.totalorder %s200, %s202
    %p206 = scmp.eq.s32.totalorder %s19, 0
    %p207 = por %p205, %p206
    %p208 = scmp.ne.s32.totalorder %s200, %s202
    %p209 = scmp.eq.s32.totalorder %s24, 1
    %p210 = por %p208, %p209
    %p211 = scmp.ne.s32.totalorder %s202, %s203
    %p212 = scmp.eq.s32.totalorder %s24, 0
    %p213 = por %p211, %p212
    %p214 = scmp.ne.s32.totalorder %s202, %s203
    %p215 = scmp.eq.s32.totalorder %s25, 1
    %p216 = por %p214, %p215
    %p218 = scmp.ne.s32.totalorder %s203, %s217
    %p219 = scmp.eq.s32.totalorder %s25, 0
    %p220 = por %p218, %p219
    %s222 = sadd.s32 %s221, 1
    %p225 = scmp.eq.s32.totalorder %s19, 1
    %p226 = scmp.ne.s32.totalorder %s221, %s223
    %p227 = scmp.eq.s32.totalorder %s19, 0
    %p228 = por %p226, %p227
    %p229 = scmp.ne.s32.totalorder %s221, %s223
    %p230 = scmp.eq.s32.totalorder %s24, 1
    %p231 = por %p229, %p230
    %p232 = scmp.ne.s32.totalorder %s223, %s224
    %p233 = scmp.eq.s32.totalorder %s24, 0
    %p234 = por %p232, %p233
    %p235 = scmp.ne.s32.totalorder %s223, %s224
    %p236 = scmp.eq.s32.totalorder %s25, 1
    %p237 = por %p235, %p236
    %p239 = scmp.ne.s32.totalorder %s224, %s238
    %p240 = scmp.eq.s32.totalorder %s25, 0
    %p241 = por %p239, %p240
    %s243 = sadd.s32 %s242, 1
    %p246 = scmp.eq.s32.totalorder %s19, 1
    %p247 = scmp.ne.s32.totalorder %s242, %s244
    %p248 = scmp.eq.s32.totalorder %s19, 0
    %p249 = por %p247, %p248
    %p250 = scmp.ne.s32.totalorder %s242, %s244
    %p251 = scmp.eq.s32.totalorder %s24, 1
    %p252 = por %p250, %p251
    %p253 = scmp.ne.s32.totalorder %s244, %s245
    %p254 = scmp.eq.s32.totalorder %s24, 0
    %p255 = por %p253, %p254
    %p256 = scmp.ne.s32.totalorder %s244, %s245
    %p257 = scmp.eq.s32.totalorder %s25, 1
    %p258 = por %p256, %p257
    %p260 = scmp.ne.s32.totalorder %s245, %s259
    %p261 = scmp.eq.s32.totalorder %s25, 0
    %p262 = por %p260, %p261
    %s264 = sadd.s32 %s263, 1
    %p267 = scmp.eq.s32.totalorder %s19, 1
    %p268 = scmp.ne.s32.totalorder %s263, %s265
    %p269 = scmp.eq.s32.totalorder %s19, 0
    %p270 = por %p268, %p269
    %p271 = scmp.ne.s32.totalorder %s263, %s265
    %p272 = scmp.eq.s32.totalorder %s24, 1
    %p273 = por %p271, %p272
    %p274 = scmp.ne.s32.totalorder %s265, %s266
    %p275 = scmp.eq.s32.totalorder %s24, 0
    %p276 = por %p274, %p275
    %p277 = scmp.ne.s32.totalorder %s265, %s266
    %p278 = scmp.eq.s32.totalorder %s25, 1
    %p279 = por %p277, %p278
    %p281 = scmp.ne.s32.totalorder %s266, %s280
    %p282 = scmp.eq.s32.totalorder %s25, 0
    %p283 = por %p281, %p282
    %s285 = sadd.s32 %s284, 1
    %p288 = scmp.eq.s32.totalorder %s19, 1
    %p289 = scmp.ne.s32.totalorder %s284, %s286
    %p290 = scmp.eq.s32.totalorder %s19, 0
    %p291 = por %p289, %p290
    %p292 = scmp.ne.s32.totalorder %s284, %s286
    %p293 = scmp.eq.s32.totalorder %s24, 1
    %p294 = por %p292, %p293
    %p295 = scmp.ne.s32.totalorder %s286, %s287
    %p296 = scmp.eq.s32.totalorder %s24, 0
    %p297 = por %p295, %p296
    %p298 = scmp.ne.s32.totalorder %s286, %s287
    %p299 = scmp.eq.s32.totalorder %s25, 1
    %p300 = por %p298, %p299
    %p302 = scmp.ne.s32.totalorder %s287, %s301
    %p303 = scmp.eq.s32.totalorder %s25, 0
    %p304 = por %p302, %p303
    %s305 = ssub.s32 %s19, %s26
    %p306 = scmp.eq.s32.totalorder %s305, 0
    %s308 = sadd.s32 %s307, 1
    %s309 = scalar_select %p306, %s307, %s308
    %p312 = pneg %p306
    %p313 = scmp.eq.s32.totalorder %s19, 1
    %p314 = por %p312, %p313
    %p315 = scmp.ne.s32.totalorder %s307, %s310
    %p316 = scmp.eq.s32.totalorder %s19, 0
    %p317 = por %p315, %p316
    %p318 = scmp.ne.s32.totalorder %s307, %s310
    %p319 = scmp.eq.s32.totalorder %s24, 1
    %p320 = por %p318, %p319
    %p321 = scmp.ne.s32.totalorder %s310, %s311
    %p322 = scmp.eq.s32.totalorder %s24, 0
    %p323 = por %p321, %p322
    %p324 = scmp.ne.s32.totalorder %s310, %s311
    %p325 = scmp.eq.s32.totalorder %s25, 1
    %p326 = por %p324, %p325
    %p328 = scmp.ne.s32.totalorder %s311, %s327
    %p329 = scmp.eq.s32.totalorder %s25, 0
    %p330 = por %p328, %p329
    %p331 = scmp.le.s32.totalorder 1, %s19
    %p332 = scmp.lt.s32.totalorder %s19, 3
    %p333 = pnand %p331, %p332
    %p334 = pneg %p333
    // Predicated region
    $region9: #{encoder_forward.1} parent=5 // pred_check
      _
    $region10: #{encoder_forward.1} parent=5 // pred_check_branch
      %336 = sbr.rel (%p333) target = $region12
    $region11: #{encoder_forward.1} parent=5 // pred_region
      %s337 = ssub.s32 %s19, 1
      // Predicated region
      $region13: #{encoder_forward.1} parent=11 // pred_check
        %p338 = pneg %p66
      $region14: #{encoder_forward.1} parent=11 // pred_check_branch
        %340 = sbr.rel (%p338) target = $region16
      $region15: #{encoder_forward.1} parent=11 // pred_region
        _
      $region16: #{encoder_forward.1} parent=11 // pred_fallthru
        _
      // Predicated region
      $region17: #{encoder_forward.1} parent=11 // pred_check
        %p341 = pneg %p87
      $region18: #{encoder_forward.1} parent=11 // pred_check_branch
        %343 = sbr.rel (%p341) target = $region20
      $region19: #{encoder_forward.1} parent=11 // pred_region
        _
      $region20: #{encoder_forward.1} parent=11 // pred_fallthru
        _
      // Predicated region
      $region21: #{encoder_forward.1} parent=11 // pred_check
        %p344 = pneg %p108
      $region22: #{encoder_forward.1} parent=11 // pred_check_branch
        %346 = sbr.rel (%p344) target = $region24
      $region23: #{encoder_forward.1} parent=11 // pred_region
        _
      $region24: #{encoder_forward.1} parent=11 // pred_fallthru
        _
      // Predicated region
      $region25: #{encoder_forward.1} parent=11 // pred_check
        %p347 = pneg %p129
      $region26: #{encoder_forward.1} parent=11 // pred_check_branch
        %349 = sbr.rel (%p347) target = $region28
      $region27: #{encoder_forward.1} parent=11 // pred_region
        _
      $region28: #{encoder_forward.1} parent=11 // pred_fallthru
        _
      // Predicated region
      $region29: #{encoder_forward.1} parent=11 // pred_check
        %p350 = pneg %p150
      $region30: #{encoder_forward.1} parent=11 // pred_check_branch
        %352 = sbr.rel (%p350) target = $region32
      $region31: #{encoder_forward.1} parent=11 // pred_region
        _
      $region32: #{encoder_forward.1} parent=11 // pred_fallthru
        _
      // Predicated region
      $region33: #{encoder_forward.1} parent=11 // pred_check
        %p353 = pneg %p171
      $region34: #{encoder_forward.1} parent=11 // pred_check_branch
        %355 = sbr.rel (%p353) target = $region36
      $region35: #{encoder_forward.1} parent=11 // pred_region
        _
      $region36: #{encoder_forward.1} parent=11 // pred_fallthru
        _
      // Predicated region
      $region37: #{encoder_forward.1} parent=11 // pred_check
        %p356 = pneg %p192
      $region38: #{encoder_forward.1} parent=11 // pred_check_branch
        %358 = sbr.rel (%p356) target = $region40
      $region39: #{encoder_forward.1} parent=11 // pred_region
        _
      $region40: #{encoder_forward.1} parent=11 // pred_fallthru
        _
      // Predicated region
      $region41: #{encoder_forward.1} parent=11 // pred_check
        %p359 = pneg %p213
      $region42: #{encoder_forward.1} parent=11 // pred_check_branch
        %361 = sbr.rel (%p359) target = $region44
      $region43: #{encoder_forward.1} parent=11 // pred_region
        _
      $region44: #{encoder_forward.1} parent=11 // pred_fallthru
        _
      // Predicated region
      $region45: #{encoder_forward.1} parent=11 // pred_check
        %p362 = pneg %p234
      $region46: #{encoder_forward.1} parent=11 // pred_check_branch
        %364 = sbr.rel (%p362) target = $region48
      $region47: #{encoder_forward.1} parent=11 // pred_region
        _
      $region48: #{encoder_forward.1} parent=11 // pred_fallthru
        _
      // Predicated region
      $region49: #{encoder_forward.1} parent=11 // pred_check
        %p365 = pneg %p255
      $region50: #{encoder_forward.1} parent=11 // pred_check_branch
        %367 = sbr.rel (%p365) target = $region52
      $region51: #{encoder_forward.1} parent=11 // pred_region
        _
      $region52: #{encoder_forward.1} parent=11 // pred_fallthru
        _
      // Predicated region
      $region53: #{encoder_forward.1} parent=11 // pred_check
        %p368 = pneg %p276
      $region54: #{encoder_forward.1} parent=11 // pred_check_branch
        %370 = sbr.rel (%p368) target = $region56
      $region55: #{encoder_forward.1} parent=11 // pred_region
        _
      $region56: #{encoder_forward.1} parent=11 // pred_fallthru
        _
      // Predicated region
      $region57: #{encoder_forward.1} parent=11 // pred_check
        %p371 = pneg %p297
      $region58: #{encoder_forward.1} parent=11 // pred_check_branch
        %373 = sbr.rel (%p371) target = $region60
      $region59: #{encoder_forward.1} parent=11 // pred_region
        _
      $region60: #{encoder_forward.1} parent=11 // pred_fallthru
        _
    $region12: #{encoder_forward.1} parent=5 // pred_fallthru
      _
    %p374 = scmp.lt.s32.totalorder %s19, 2
    // Predicated region
    $region61: #{encoder_forward.1} parent=5 // pred_check
      %p375 = pneg %p374
    $region62: #{encoder_forward.1} parent=5 // pred_check_branch
      %377 = sbr.rel (%p375) target = $region64
    $region63: #{encoder_forward.1} parent=5 // pred_region
      // Predicated region
      $region65: #{encoder_forward.1} parent=63 // pred_check
        %p378 = pneg %p39
      $region66: #{encoder_forward.1} parent=63 // pred_check_branch
        %380 = sbr.rel (%p378) target = $region68
      $region67: #{encoder_forward.1} parent=63 // pred_region
        %p381 = scmp.lt.s32.totalorder %s19, 1
        %s382 = scalar_select %p381, %s19, 1
        %s383 = smul.addr %s382, 8
        %s384 = smul.addr %s383, 8
        %s385 = scalar_lea.vmem %s0, %s384
      $region68: #{encoder_forward.1} parent=63 // pred_fallthru
        _
    $region64: #{encoder_forward.1} parent=5 // pred_fallthru
      _
    %p386 = scmp.le.s32.totalorder 1, %s19
    %p387 = scmp.lt.s32.totalorder %s19, 3
    %p388 = pnand %p386, %p387
    %p389 = pneg %p388
    // Predicated region
    $region69: #{encoder_forward.1} parent=5 // pred_check
      _
    $region70: #{encoder_forward.1} parent=5 // pred_check_branch
      %391 = sbr.rel (%p388) target = $region72
    $region71: #{encoder_forward.1} parent=5 // pred_region
      %s392 = ssub.s32 %s19, 1
      %p393 = scmp.lt.s32.totalorder %s24, 1
      %s394 = scalar_select %p393, %s24, 1
      %s395 = smul.addr %s394, 8
      %s396 = smul.addr %s395, 8
      %s397 = scalar_lea.vmem %s0, %s396
      %p398 = pneg %p45
      %p399 = pneg %p42
      %p400 = pneg %p66
      %p401 = pneg %p63
      %p402 = pneg %p87
      %p403 = pneg %p84
      %p404 = pneg %p108
      %p405 = pneg %p105
      %p406 = pneg %p129
      %p407 = pneg %p126
      %p408 = pneg %p150
      %p409 = pneg %p147
      %p410 = pneg %p171
      %p411 = pneg %p168
      %p412 = pneg %p192
      %p413 = pneg %p189
      %p414 = pneg %p213
      %p415 = pneg %p210
      %p416 = pneg %p234
      %p417 = pneg %p231
      %p418 = pneg %p255
      %p419 = pneg %p252
      %p420 = pneg %p276
      %p421 = pneg %p273
      %p422 = pneg %p297
      %p423 = pneg %p294
      %p424 = pneg %p323
      %p425 = pneg %p320
      %p426 = scmp.lt.s32.totalorder %s24, 1
      %s427 = scalar_select %p426, %s24, 1
      %s428 = smul.addr %s427, 4
      %s429 = smul.addr %s428, 8
      %s430 = scalar_lea.vmem %s13, %s429
      %p431 = scmp.lt.s32.totalorder %s24, 1
      %s432 = scalar_select %p431, %s24, 1
      %s433 = smul.addr %s432, 8
      %s434 = smul.addr %s433, 8
      %s435 = scalar_lea.vmem %s0, %s434
      %p436 = scmp.lt.s32.totalorder %s24, 1
      %s437 = scalar_select %p436, %s24, 1
      %s438 = smul.addr %s437, 4
      %s439 = smul.addr %s438, 8
      %s440 = scalar_lea.vmem %s13, %s439
      %v441 = vld [vmem:[%s435] sm:$0xff]
      %v442 = vld [vmem:[%s435 + $0x8] sm:$0xff]
      %v443 = vld [vmem:[%s435 + $0x10] sm:$0xff]
      %v444 = vld [vmem:[%s435 + $0x18] sm:$0xff]
      %v445 = vld [vmem:[%s435 + $0x20] sm:$0xff]
      %v446 = vld [vmem:[%s435 + $0x28] sm:$0xff]
      %v447 = vld [vmem:[%s435 + $0x30] sm:$0xff]
      %v448 = vld [vmem:[%s435 + $0x38] sm:$0xff]
      %v449 = vld [vmem:[%s1] sm:$0xff]
      %v450 = vld [vmem:[%s1 + $0x8] sm:$0xff]
      %v451 = vld [vmem:[%s1 + $0x10] sm:$0xff]
      %v452 = vld [vmem:[%s1 + $0x18] sm:$0xff]
      %v453 = vld [vmem:[%s1 + $0x20] sm:$0xff]
      %v454 = vld [vmem:[%s1 + $0x28] sm:$0xff]
      %v455 = vld [vmem:[%s1 + $0x30] sm:$0xff]
      %v456 = vld [vmem:[%s1 + $0x38] sm:$0xff]
      %v457 = vld [vmem:[%s1 + $0x40] sm:$0xff]
      %v458 = vld [vmem:[%s1 + $0x48] sm:$0xff]
      %v459 = vld [vmem:[%s1 + $0x50] sm:$0xff]
      %v460 = vld [vmem:[%s1 + $0x58] sm:$0xff]
      %v461 = vld [vmem:[%s1 + $0x60] sm:$0xff]
      %v462 = vld [vmem:[%s1 + $0x68] sm:$0xff]
      %v463 = vld [vmem:[%s1 + $0x70] sm:$0xff]
      %v464 = vld [vmem:[%s2] sm:$0x1]
      %vm473 = vcmask 1046528
      %v474 = vrot.slane %v441, 1
      %v475 = vrot.slane %v442, 1
      %v476 = vsel %vm473, %v474, %v475
      %v477 = vrot.slane %v443, 1
      %v478 = vsel %vm473, %v475, %v477
      %v479 = vrot.slane %v444, 1
      %v480 = vsel %vm473, %v477, %v479
      %v481 = vrot.slane %v445, 1
      %v482 = vsel %vm473, %v479, %v481
      %v483 = vrot.slane %v446, 1
      %v484 = vsel %vm473, %v481, %v483
      %v485 = vrot.slane %v447, 1
      %v486 = vsel %vm473, %v483, %v485
      %v487 = vrot.slane %v448, 1
      %v488 = vsel %vm473, %v485, %v487
      %v498 = vsel %vm473, 0.0, %v474
      %v499 = vsel %vm473, %v487, 0.0
      %v502 = vrot.slane %v498, 1
      %v503 = vrot.slane %v476, 1
      %v504 = vsel %vm473, %v502, %v503
      %v505 = vrot.slane %v478, 1
      %v506 = vsel %vm473, %v503, %v505
      %v507 = vrot.slane %v480, 1
      %v508 = vsel %vm473, %v505, %v507
      %v509 = vrot.slane %v482, 1
      %v510 = vsel %vm473, %v507, %v509
      %v511 = vrot.slane %v484, 1
      %v512 = vsel %vm473, %v509, %v511
      %v513 = vrot.slane %v486, 1
      %v514 = vsel %vm473, %v511, %v513
      %v515 = vrot.slane %v488, 1
      %v516 = vsel %vm473, %v513, %v515
      %v517 = vrot.slane %v499, 1
      %v518 = vsel %vm473, %v515, %v517
      %519 = vrot.lane.b32.xlu0 %v504, 8
      %v520 = vpop.permute.xlu0 %519
      %521 = vrot.lane.b32.xlu0 %v506, 8
      %v522 = vpop.permute.xlu0 %521
      %523 = vrot.lane.b32.xlu0 %v508, 8
      %v524 = vpop.permute.xlu0 %523
      %525 = vrot.lane.b32.xlu0 %v510, 8
      %v526 = vpop.permute.xlu0 %525
      %527 = vrot.lane.b32.xlu0 %v512, 8
      %v528 = vpop.permute.xlu0 %527
      %529 = vrot.lane.b32.xlu0 %v514, 8
      %v530 = vpop.permute.xlu0 %529
      %531 = vrot.lane.b32.xlu0 %v516, 8
      %v532 = vpop.permute.xlu0 %531
      %533 = vrot.lane.b32.xlu0 %v518, 8
      %v534 = vpop.permute.xlu0 %533
      %vm543 = vcmask 1045504
      %v544 = vrot.slane %v498, 2
      %v545 = vrot.slane %v476, 2
      %v546 = vsel %vm543, %v544, %v545
      %v547 = vrot.slane %v478, 2
      %v548 = vsel %vm543, %v545, %v547
      %v549 = vrot.slane %v480, 2
      %v550 = vsel %vm543, %v547, %v549
      %v551 = vrot.slane %v482, 2
      %v552 = vsel %vm543, %v549, %v551
      %v553 = vrot.slane %v484, 2
      %v554 = vsel %vm543, %v551, %v553
      %v555 = vrot.slane %v486, 2
      %v556 = vsel %vm543, %v553, %v555
      %v557 = vrot.slane %v488, 2
      %v558 = vsel %vm543, %v555, %v557
      %v559 = vrot.slane %v499, 2
      %v560 = vsel %vm543, %v557, %v559
      %561 = vrot.lane.b32.xlu0 %v546, 16
      %v562 = vpop.permute.xlu0 %561
      %563 = vrot.lane.b32.xlu0 %v548, 16
      %v564 = vpop.permute.xlu0 %563
      %565 = vrot.lane.b32.xlu0 %v550, 16
      %v566 = vpop.permute.xlu0 %565
      %567 = vrot.lane.b32.xlu0 %v552, 16
      %v568 = vpop.permute.xlu0 %567
      %569 = vrot.lane.b32.xlu0 %v554, 16
      %v570 = vpop.permute.xlu0 %569
      %571 = vrot.lane.b32.xlu0 %v556, 16
      %v572 = vpop.permute.xlu0 %571
      %573 = vrot.lane.b32.xlu0 %v558, 16
      %v574 = vpop.permute.xlu0 %573
      %575 = vrot.lane.b32.xlu0 %v560, 16
      %v576 = vpop.permute.xlu0 %575
      %vm585 = vcmask 1044480
      %v586 = vrot.slane %v498, 3
      %v587 = vrot.slane %v476, 3
      %v588 = vsel %vm585, %v586, %v587
      %v589 = vrot.slane %v478, 3
      %v590 = vsel %vm585, %v587, %v589
      %v591 = vrot.slane %v480, 3
      %v592 = vsel %vm585, %v589, %v591
      %v593 = vrot.slane %v482, 3
      %v594 = vsel %vm585, %v591, %v593
      %v595 = vrot.slane %v484, 3
      %v596 = vsel %vm585, %v593, %v595
      %v597 = vrot.slane %v486, 3
      %v598 = vsel %vm585, %v595, %v597
      %v599 = vrot.slane %v488, 3
      %v600 = vsel %vm585, %v597, %v599
      %v601 = vrot.slane %v499, 3
      %v602 = vsel %vm585, %v599, %v601
      %603 = vrot.lane.b32.xlu0 %v588, 24
      %v604 = vpop.permute.xlu0 %603
      %605 = vrot.lane.b32.xlu0 %v590, 24
      %v606 = vpop.permute.xlu0 %605
      %607 = vrot.lane.b32.xlu0 %v592, 24
      %v608 = vpop.permute.xlu0 %607
      %609 = vrot.lane.b32.xlu0 %v594, 24
      %v610 = vpop.permute.xlu0 %609
      %611 = vrot.lane.b32.xlu0 %v596, 24
      %v612 = vpop.permute.xlu0 %611
      %613 = vrot.lane.b32.xlu0 %v598, 24
      %v614 = vpop.permute.xlu0 %613
      %615 = vrot.lane.b32.xlu0 %v600, 24
      %v616 = vpop.permute.xlu0 %615
      %617 = vrot.lane.b32.xlu0 %v602, 24
      %v618 = vpop.permute.xlu0 %617
      %vm627 = vcmask 1043456
      %v628 = vrot.slane %v498, 4
      %v629 = vrot.slane %v476, 4
      %v630 = vsel %vm627, %v628, %v629
      %v631 = vrot.slane %v478, 4
      %v632 = vsel %vm627, %v629, %v631
      %v633 = vrot.slane %v480, 4
      %v634 = vsel %vm627, %v631, %v633
      %v635 = vrot.slane %v482, 4
      %v636 = vsel %vm627, %v633, %v635
      %v637 = vrot.slane %v484, 4
      %v638 = vsel %vm627, %v635, %v637
      %v639 = vrot.slane %v486, 4
      %v640 = vsel %vm627, %v637, %v639
      %v641 = vrot.slane %v488, 4
      %v642 = vsel %vm627, %v639, %v641
      %v643 = vrot.slane %v499, 4
      %v644 = vsel %vm627, %v641, %v643
      %645 = vrot.lane.b32.xlu0 %v630, 32
      %v646 = vpop.permute.xlu0 %645
      %647 = vrot.lane.b32.xlu0 %v632, 32
      %v648 = vpop.permute.xlu0 %647
      %649 = vrot.lane.b32.xlu0 %v634, 32
      %v650 = vpop.permute.xlu0 %649
      %651 = vrot.lane.b32.xlu0 %v636, 32
      %v652 = vpop.permute.xlu0 %651
      %653 = vrot.lane.b32.xlu0 %v638, 32
      %v654 = vpop.permute.xlu0 %653
      %655 = vrot.lane.b32.xlu0 %v640, 32
      %v656 = vpop.permute.xlu0 %655
      %657 = vrot.lane.b32.xlu0 %v642, 32
      %v658 = vpop.permute.xlu0 %657
      %659 = vrot.lane.b32.xlu0 %v644, 32
      %v660 = vpop.permute.xlu0 %659
      %vm669 = vcmask 1042432
      %v670 = vrot.slane %v498, 5
      %v671 = vrot.slane %v476, 5
      %v672 = vsel %vm669, %v670, %v671
      %v673 = vrot.slane %v478, 5
      %v674 = vsel %vm669, %v671, %v673
      %v675 = vrot.slane %v480, 5
      %v676 = vsel %vm669, %v673, %v675
      %v677 = vrot.slane %v482, 5
      %v678 = vsel %vm669, %v675, %v677
      %v679 = vrot.slane %v484, 5
      %v680 = vsel %vm669, %v677, %v679
      %v681 = vrot.slane %v486, 5
      %v682 = vsel %vm669, %v679, %v681
      %v683 = vrot.slane %v488, 5
      %v684 = vsel %vm669, %v681, %v683
      %v685 = vrot.slane %v499, 5
      %v686 = vsel %vm669, %v683, %v685
      %687 = vrot.lane.b32.xlu0 %v672, 40
      %v688 = vpop.permute.xlu0 %687
      %689 = vrot.lane.b32.xlu0 %v674, 40
      %v690 = vpop.permute.xlu0 %689
      %691 = vrot.lane.b32.xlu0 %v676, 40
      %v692 = vpop.permute.xlu0 %691
      %693 = vrot.lane.b32.xlu0 %v678, 40
      %v694 = vpop.permute.xlu0 %693
      %695 = vrot.lane.b32.xlu0 %v680, 40
      %v696 = vpop.permute.xlu0 %695
      %697 = vrot.lane.b32.xlu0 %v682, 40
      %v698 = vpop.permute.xlu0 %697
      %699 = vrot.lane.b32.xlu0 %v684, 40
      %v700 = vpop.permute.xlu0 %699
      %701 = vrot.lane.b32.xlu0 %v686, 40
      %v702 = vpop.permute.xlu0 %701
      %vm711 = vcmask 1041408
      %v712 = vrot.slane %v498, 6
      %v713 = vrot.slane %v476, 6
      %v714 = vsel %vm711, %v712, %v713
      %v715 = vrot.slane %v478, 6
      %v716 = vsel %vm711, %v713, %v715
      %v717 = vrot.slane %v480, 6
      %v718 = vsel %vm711, %v715, %v717
      %v719 = vrot.slane %v482, 6
      %v720 = vsel %vm711, %v717, %v719
      %v721 = vrot.slane %v484, 6
      %v722 = vsel %vm711, %v719, %v721
      %v723 = vrot.slane %v486, 6
      %v724 = vsel %vm711, %v721, %v723
      %v725 = vrot.slane %v488, 6
      %v726 = vsel %vm711, %v723, %v725
      %v727 = vrot.slane %v499, 6
      %v728 = vsel %vm711, %v725, %v727
      %729 = vrot.lane.b32.xlu0 %v714, 48
      %v730 = vpop.permute.xlu0 %729
      %731 = vrot.lane.b32.xlu0 %v716, 48
      %v732 = vpop.permute.xlu0 %731
      %733 = vrot.lane.b32.xlu0 %v718, 48
      %v734 = vpop.permute.xlu0 %733
      %735 = vrot.lane.b32.xlu0 %v720, 48
      %v736 = vpop.permute.xlu0 %735
      %737 = vrot.lane.b32.xlu0 %v722, 48
      %v738 = vpop.permute.xlu0 %737
      %739 = vrot.lane.b32.xlu0 %v724, 48
      %v740 = vpop.permute.xlu0 %739
      %741 = vrot.lane.b32.xlu0 %v726, 48
      %v742 = vpop.permute.xlu0 %741
      %743 = vrot.lane.b32.xlu0 %v728, 48
      %v744 = vpop.permute.xlu0 %743
      %vm753 = vcmask 1040384
      %v754 = vrot.slane %v498, 7
      %v755 = vrot.slane %v476, 7
      %v756 = vsel %vm753, %v754, %v755
      %v757 = vrot.slane %v478, 7
      %v758 = vsel %vm753, %v755, %v757
      %v759 = vrot.slane %v480, 7
      %v760 = vsel %vm753, %v757, %v759
      %v761 = vrot.slane %v482, 7
      %v762 = vsel %vm753, %v759, %v761
      %v763 = vrot.slane %v484, 7
      %v764 = vsel %vm753, %v761, %v763
      %v765 = vrot.slane %v486, 7
      %v766 = vsel %vm753, %v763, %v765
      %v767 = vrot.slane %v488, 7
      %v768 = vsel %vm753, %v765, %v767
      %v769 = vrot.slane %v499, 7
      %v770 = vsel %vm753, %v767, %v769
      %771 = vrot.lane.b32.xlu0 %v756, 56
      %v772 = vpop.permute.xlu0 %771
      %773 = vrot.lane.b32.xlu0 %v758, 56
      %v774 = vpop.permute.xlu0 %773
      %775 = vrot.lane.b32.xlu0 %v760, 56
      %v776 = vpop.permute.xlu0 %775
      %777 = vrot.lane.b32.xlu0 %v762, 56
      %v778 = vpop.permute.xlu0 %777
      %779 = vrot.lane.b32.xlu0 %v764, 56
      %v780 = vpop.permute.xlu0 %779
      %781 = vrot.lane.b32.xlu0 %v766, 56
      %v782 = vpop.permute.xlu0 %781
      %783 = vrot.lane.b32.xlu0 %v768, 56
      %v784 = vpop.permute.xlu0 %783
      %785 = vrot.lane.b32.xlu0 %v770, 56
      %v786 = vpop.permute.xlu0 %785
      %795 = vrot.lane.b32.xlu0 %v476, 64
      %v796 = vpop.permute.xlu0 %795
      %797 = vrot.lane.b32.xlu0 %v478, 64
      %v798 = vpop.permute.xlu0 %797
      %799 = vrot.lane.b32.xlu0 %v480, 64
      %v800 = vpop.permute.xlu0 %799
      %801 = vrot.lane.b32.xlu0 %v482, 64
      %v802 = vpop.permute.xlu0 %801
      %803 = vrot.lane.b32.xlu0 %v484, 64
      %v804 = vpop.permute.xlu0 %803
      %805 = vrot.lane.b32.xlu0 %v486, 64
      %v806 = vpop.permute.xlu0 %805
      %807 = vrot.lane.b32.xlu0 %v488, 64
      %v808 = vpop.permute.xlu0 %807
      %809 = vrot.lane.b32.xlu0 %v499, 64
      %v810 = vpop.permute.xlu0 %809
      %v820 = vrot.slane 0.0, 1
      %v821 = vsel %vm473, %v517, %v820
      %822 = vrot.lane.b32.xlu0 %v506, 72
      %v823 = vpop.permute.xlu0 %822
      %824 = vrot.lane.b32.xlu0 %v508, 72
      %v825 = vpop.permute.xlu0 %824
      %826 = vrot.lane.b32.xlu0 %v510, 72
      %v827 = vpop.permute.xlu0 %826
      %828 = vrot.lane.b32.xlu0 %v512, 72
      %v829 = vpop.permute.xlu0 %828
      %830 = vrot.lane.b32.xlu0 %v514, 72
      %v831 = vpop.permute.xlu0 %830
      %832 = vrot.lane.b32.xlu0 %v516, 72
      %v833 = vpop.permute.xlu0 %832
      %834 = vrot.lane.b32.xlu0 %v518, 72
      %v835 = vpop.permute.xlu0 %834
      %836 = vrot.lane.b32.xlu0 %v821, 72
      %v837 = vpop.permute.xlu0 %836
      %v846 = vrot.slane 0.0, 2
      %v847 = vsel %vm543, %v559, %v846
      %848 = vrot.lane.b32.xlu0 %v548, 80
      %v849 = vpop.permute.xlu0 %848
      %850 = vrot.lane.b32.xlu0 %v550, 80
      %v851 = vpop.permute.xlu0 %850
      %852 = vrot.lane.b32.xlu0 %v552, 80
      %v853 = vpop.permute.xlu0 %852
      %854 = vrot.lane.b32.xlu0 %v554, 80
      %v855 = vpop.permute.xlu0 %854
      %856 = vrot.lane.b32.xlu0 %v556, 80
      %v857 = vpop.permute.xlu0 %856
      %858 = vrot.lane.b32.xlu0 %v558, 80
      %v859 = vpop.permute.xlu0 %858
      %860 = vrot.lane.b32.xlu0 %v560, 80
      %v861 = vpop.permute.xlu0 %860
      %862 = vrot.lane.b32.xlu0 %v847, 80
      %v863 = vpop.permute.xlu0 %862
      %v872 = vrot.slane 0.0, 3
      %v873 = vsel %vm585, %v601, %v872
      %874 = vrot.lane.b32.xlu0 %v590, 88
      %v875 = vpop.permute.xlu0 %874
      %876 = vrot.lane.b32.xlu0 %v592, 88
      %v877 = vpop.permute.xlu0 %876
      %878 = vrot.lane.b32.xlu0 %v594, 88
      %v879 = vpop.permute.xlu0 %878
      %880 = vrot.lane.b32.xlu0 %v596, 88
      %v881 = vpop.permute.xlu0 %880
      %882 = vrot.lane.b32.xlu0 %v598, 88
      %v883 = vpop.permute.xlu0 %882
      %884 = vrot.lane.b32.xlu0 %v600, 88
      %v885 = vpop.permute.xlu0 %884
      %886 = vrot.lane.b32.xlu0 %v602, 88
      %v887 = vpop.permute.xlu0 %886
      %888 = vrot.lane.b32.xlu0 %v873, 88
      %v889 = vpop.permute.xlu0 %888
      %v898 = vrot.slane 0.0, 4
      %v899 = vsel %vm627, %v643, %v898
      %900 = vrot.lane.b32.xlu0 %v632, 96
      %v901 = vpop.permute.xlu0 %900
      %902 = vrot.lane.b32.xlu0 %v634, 96
      %v903 = vpop.permute.xlu0 %902
      %904 = vrot.lane.b32.xlu0 %v636, 96
      %v905 = vpop.permute.xlu0 %904
      %906 = vrot.lane.b32.xlu0 %v638, 96
      %v907 = vpop.permute.xlu0 %906
      %908 = vrot.lane.b32.xlu0 %v640, 96
      %v909 = vpop.permute.xlu0 %908
      %910 = vrot.lane.b32.xlu0 %v642, 96
      %v911 = vpop.permute.xlu0 %910
      %912 = vrot.lane.b32.xlu0 %v644, 96
      %v913 = vpop.permute.xlu0 %912
      %914 = vrot.lane.b32.xlu0 %v899, 96
      %v915 = vpop.permute.xlu0 %914
      %v924 = vrot.slane 0.0, 5
      %v925 = vsel %vm669, %v685, %v924
      %926 = vrot.lane.b32.xlu0 %v674, 104
      %v927 = vpop.permute.xlu0 %926
      %928 = vrot.lane.b32.xlu0 %v676, 104
      %v929 = vpop.permute.xlu0 %928
      %930 = vrot.lane.b32.xlu0 %v678, 104
      %v931 = vpop.permute.xlu0 %930
      %932 = vrot.lane.b32.xlu0 %v680, 104
      %v933 = vpop.permute.xlu0 %932
      %934 = vrot.lane.b32.xlu0 %v682, 104
      %v935 = vpop.permute.xlu0 %934
      %936 = vrot.lane.b32.xlu0 %v684, 104
      %v937 = vpop.permute.xlu0 %936
      %938 = vrot.lane.b32.xlu0 %v686, 104
      %v939 = vpop.permute.xlu0 %938
      %940 = vrot.lane.b32.xlu0 %v925, 104
      %v941 = vpop.permute.xlu0 %940
      %v950 = vrot.slane 0.0, 6
      %v951 = vsel %vm711, %v727, %v950
      %952 = vrot.lane.b32.xlu0 %v716, 112
      %v953 = vpop.permute.xlu0 %952
      %954 = vrot.lane.b32.xlu0 %v718, 112
      %v955 = vpop.permute.xlu0 %954
      %956 = vrot.lane.b32.xlu0 %v720, 112
      %v957 = vpop.permute.xlu0 %956
      %958 = vrot.lane.b32.xlu0 %v722, 112
      %v959 = vpop.permute.xlu0 %958
      %960 = vrot.lane.b32.xlu0 %v724, 112
      %v961 = vpop.permute.xlu0 %960
      %962 = vrot.lane.b32.xlu0 %v726, 112
      %v963 = vpop.permute.xlu0 %962
      %964 = vrot.lane.b32.xlu0 %v728, 112
      %v965 = vpop.permute.xlu0 %964
      %966 = vrot.lane.b32.xlu0 %v951, 112
      %v967 = vpop.permute.xlu0 %966
      %vm976 = vcmask 64512
      %v977 = vsel %vm976, %v498, %v520
      %v978 = vsel %vm976, %v476, %v522
      %v979 = vsel %vm976, %v478, %v524
      %v980 = vsel %vm976, %v480, %v526
      %v981 = vsel %vm976, %v482, %v528
      %v982 = vsel %vm976, %v484, %v530
      %v983 = vsel %vm976, %v486, %v532
      %v984 = vsel %vm976, %v488, %v534
      %vm985 = vcmask 130048
      %v986 = vsel %vm985, %v977, %v562
      %v987 = vsel %vm985, %v978, %v564
      %v988 = vsel %vm985, %v979, %v566
      %v989 = vsel %vm985, %v980, %v568
      %v990 = vsel %vm985, %v981, %v570
      %v991 = vsel %vm985, %v982, %v572
      %v992 = vsel %vm985, %v983, %v574
      %v993 = vsel %vm985, %v984, %v576
      %vm994 = vcmask 195584
      %v995 = vsel %vm994, %v986, %v604
      %v996 = vsel %vm994, %v987, %v606
      %v997 = vsel %vm994, %v988, %v608
      %v998 = vsel %vm994, %v989, %v610
      %v999 = vsel %vm994, %v990, %v612
      %v1000 = vsel %vm994, %v991, %v614
      %v1001 = vsel %vm994, %v992, %v616
      %v1002 = vsel %vm994, %v993, %v618
      %vm1003 = vcmask 261120
      %v1004 = vsel %vm1003, %v995, %v646
      %v1005 = vsel %vm1003, %v996, %v648
      %v1006 = vsel %vm1003, %v997, %v650
      %v1007 = vsel %vm1003, %v998, %v652
      %v1008 = vsel %vm1003, %v999, %v654
      %v1009 = vsel %vm1003, %v1000, %v656
      %v1010 = vsel %vm1003, %v1001, %v658
      %v1011 = vsel %vm1003, %v1002, %v660
      %vm1012 = vcmask 326656
      %v1013 = vsel %vm1012, %v1004, %v688
      %v1014 = vsel %vm1012, %v1005, %v690
      %v1015 = vsel %vm1012, %v1006, %v692
      %v1016 = vsel %vm1012, %v1007, %v694
      %v1017 = vsel %vm1012, %v1008, %v696
      %v1018 = vsel %vm1012, %v1009, %v698
      %v1019 = vsel %vm1012, %v1010, %v700
      %v1020 = vsel %vm1012, %v1011, %v702
      %vm1021 = vcmask 392192
      %v1022 = vsel %vm1021, %v1013, %v730
      %v1023 = vsel %vm1021, %v1014, %v732
      %v1024 = vsel %vm1021, %v1015, %v734
      %v1025 = vsel %vm1021, %v1016, %v736
      %v1026 = vsel %vm1021, %v1017, %v738
      %v1027 = vsel %vm1021, %v1018, %v740
      %v1028 = vsel %vm1021, %v1019, %v742
      %v1029 = vsel %vm1021, %v1020, %v744
      %vm1030 = vcmask 457728
      %v1031 = vsel %vm1030, %v1022, %v772
      %v1032 = vsel %vm1030, %v1023, %v774
      %v1033 = vsel %vm1030, %v1024, %v776
      %v1034 = vsel %vm1030, %v1025, %v778
      %v1035 = vsel %vm1030, %v1026, %v780
      %v1036 = vsel %vm1030, %v1027, %v782
      %v1037 = vsel %vm1030, %v1028, %v784
      %v1038 = vsel %vm1030, %v1029, %v786
      %vm1039 = vcmask 523264
      %v1040 = vsel %vm1039, %v1031, %v796
      %v1041 = vsel %vm1039, %v1032, %v798
      %v1042 = vsel %vm1039, %v1033, %v800
      %v1043 = vsel %vm1039, %v1034, %v802
      %v1044 = vsel %vm1039, %v1035, %v804
      %v1045 = vsel %vm1039, %v1036, %v806
      %v1046 = vsel %vm1039, %v1037, %v808
      %v1047 = vsel %vm1039, %v1038, %v810
      %vm1048 = vcmask 588800
      %v1049 = vsel %vm1048, %v1040, %v823
      %v1050 = vsel %vm1048, %v1041, %v825
      %v1051 = vsel %vm1048, %v1042, %v827
      %v1052 = vsel %vm1048, %v1043, %v829
      %v1053 = vsel %vm1048, %v1044, %v831
      %v1054 = vsel %vm1048, %v1045, %v833
      %v1055 = vsel %vm1048, %v1046, %v835
      %v1056 = vsel %vm1048, %v1047, %v837
      %vm1057 = vcmask 654336
      %v1058 = vsel %vm1057, %v1049, %v849
      %v1059 = vsel %vm1057, %v1050, %v851
      %v1060 = vsel %vm1057, %v1051, %v853
      %v1061 = vsel %vm1057, %v1052, %v855
      %v1062 = vsel %vm1057, %v1053, %v857
      %v1063 = vsel %vm1057, %v1054, %v859
      %v1064 = vsel %vm1057, %v1055, %v861
      %v1065 = vsel %vm1057, %v1056, %v863
      %vm1066 = vcmask 719872
      %v1067 = vsel %vm1066, %v1058, %v875
      %v1068 = vsel %vm1066, %v1059, %v877
      %v1069 = vsel %vm1066, %v1060, %v879
      %v1070 = vsel %vm1066, %v1061, %v881
      %v1071 = vsel %vm1066, %v1062, %v883
      %v1072 = vsel %vm1066, %v1063, %v885
      %v1073 = vsel %vm1066, %v1064, %v887
      %v1074 = vsel %vm1066, %v1065, %v889
      %vm1075 = vcmask 785408
      %v1076 = vsel %vm1075, %v1067, %v901
      %v1077 = vsel %vm1075, %v1068, %v903
      %v1078 = vsel %vm1075, %v1069, %v905
      %v1079 = vsel %vm1075, %v1070, %v907
      %v1080 = vsel %vm1075, %v1071, %v909
      %v1081 = vsel %vm1075, %v1072, %v911
      %v1082 = vsel %vm1075, %v1073, %v913
      %v1083 = vsel %vm1075, %v1074, %v915
      %vm1084 = vcmask 850944
      %v1085 = vsel %vm1084, %v1076, %v927
      %v1086 = vsel %vm1084, %v1077, %v929
      %v1087 = vsel %vm1084, %v1078, %v931
      %v1088 = vsel %vm1084, %v1079, %v933
      %v1089 = vsel %vm1084, %v1080, %v935
      %v1090 = vsel %vm1084, %v1081, %v937
      %v1091 = vsel %vm1084, %v1082, %v939
      %v1092 = vsel %vm1084, %v1083, %v941
      %vm1093 = vcmask 916480
      %v1094 = vsel %vm1093, %v1085, %v953
      %v1095 = vsel %vm1093, %v1086, %v955
      %v1096 = vsel %vm1093, %v1087, %v957
      %v1097 = vsel %vm1093, %v1088, %v959
      %v1098 = vsel %vm1093, %v1089, %v961
      %v1099 = vsel %vm1093, %v1090, %v963
      %v1100 = vsel %vm1093, %v1091, %v965
      %v1101 = vsel %vm1093, %v1092, %v967
      %v1103 = vlaneseq
      %v1104 = vshrl.u32 %v1103, 7
      %v1105 = vsub.s32 0, %v1104
      %v1106 = vrot.slane %v464, %v1105
      %vm1108 = vcmask 982016
      %v1110 = vsel %vm1108, %v1094, 0
      %v1113 = vsel %vm1108, %v1095, 0
      %v1116 = vsel %vm1108, %v1096, 0
      %v1119 = vsel %vm1108, %v1097, 0
      %v1122 = vsel %vm1108, %v1098, 0
      %v1125 = vsel %vm1108, %v1099, 0
      %v1128 = vsel %vm1108, %v1100, 0
      %v1131 = vsel %vm1108, %v1101, 0
      %1133 = vmatprep.subr.mxu0 0.0
      %1134 = vmatpush1.msra.mxu0 0.0
      %1135 = vmatprep.subr.mxu0 0.0
      %1136 = vmatpush1.msra.mxu0 %v463
      %1137 = vmatprep.subr.mxu0 0.0
      %1138 = vmatpush1.msra.mxu0 %v462
      %1139 = vmatprep.subr.mxu0 0.0
      %1140 = vmatpush1.msra.mxu0 %v461
      %1141 = vmatprep.subr.mxu0 0.0
      %1142 = vmatpush1.msra.mxu0 %v460
      %1143 = vmatprep.subr.mxu0 0.0
      %1144 = vmatpush1.msra.mxu0 %v459
      %1145 = vmatprep.subr.mxu0 0.0
      %1146 = vmatpush1.msra.mxu0 %v458
      %1147 = vmatprep.subr.mxu0 0.0
      %1148 = vmatpush1.msra.mxu0 %v457
      %1149 = vmatprep.subr.mxu0 0.0
      %1150 = vmatpush1.msra.mxu0 %v456
      %1151 = vmatprep.subr.mxu0 0.0
      %1152 = vmatpush1.msra.mxu0 %v455
      %1153 = vmatprep.subr.mxu0 0.0
      %1154 = vmatpush1.msra.mxu0 %v454
      %1155 = vmatprep.subr.mxu0 0.0
      %1156 = vmatpush1.msra.mxu0 %v453
      %1157 = vmatprep.subr.mxu0 0.0
      %1158 = vmatpush1.msra.mxu0 %v452
      %1159 = vmatprep.subr.mxu0 0.0
      %1160 = vmatpush1.msra.mxu0 %v451
      %1161 = vmatprep.subr.mxu0 0.0
      %1162 = vmatpush1.msra.mxu0 %v450
      %1163 = vmatprep.subr.mxu0 0.0
      %1164 = vmatpush1.msra.mxu0 %v449
      %1165 = vmatprep.subr.mxu0 0.0
      %1166 = vmatpush2.msra.mxu0 0.0
      %1167 = vmatprep.subr.mxu0 0.0
      %1168 = vmatpush2.msra.mxu0 0.0
      %1169 = vmatprep.subr.mxu0 0.0
      %1170 = vmatpush2.msra.mxu0 0.0
      %1171 = vmatprep.subr.mxu0 0.0
      %1172 = vmatpush2.msra.mxu0 0.0
      %1173 = vmatprep.subr.mxu0 0.0
      %1174 = vmatpush2.msra.mxu0 0.0
      %1175 = vmatprep.subr.mxu0 0.0
      %1176 = vmatpush2.msra.mxu0 0.0
      %1177 = vmatprep.subr.mxu0 0.0
      %1178 = vmatpush2.msra.mxu0 0.0
      %1179 = vmatprep.subr.mxu0 0.0
      %1180 = vmatpush2.msra.mxu0 0.0
      %1181 = vmatprep.subr.mxu0 0.0
      %1182 = vmatpush2.msra.mxu0 0.0
      %1183 = vmatprep.subr.mxu0 0.0
      %1184 = vmatpush2.msra.mxu0 0.0
      %1185 = vmatprep.subr.mxu0 0.0
      %1186 = vmatpush2.msra.mxu0 0.0
      %1187 = vmatprep.subr.mxu0 0.0
      %1188 = vmatpush2.msra.mxu0 0.0
      %1189 = vmatprep.subr.mxu0 0.0
      %1190 = vmatpush2.msra.mxu0 0.0
      %1191 = vmatprep.subr.mxu0 0.0
      %1192 = vmatpush2.msra.mxu0 0.0
      %1193 = vmatprep.subr.mxu0 0.0
      %1194 = vmatpush2.msra.mxu0 0.0
      %1195 = vmatprep.subr.mxu0 0.0
      %1196 = vmatpush2.msra.mxu0 0.0
      %1197 = vmatprep.mubr.f32.mxu0 0.0
      %1198 = vmatmul.mubr.f32.gmra.mxu0 %v1110
      %v1199 = vpop.f32.mrf.mxu0
      %v1200 = vadd.f32 %v1106, %v1199
      %v1201 = vpop.f32.mrf.mxu0
      %1202 = vmatprep.mubr.f32.mxu0 0.0
      %1203 = vmatmul.mubr.f32.gmra.mxu0 %v1113
      %v1204 = vpop.f32.mrf.mxu0
      %v1205 = vadd.f32 %v1106, %v1204
      %v1206 = vpop.f32.mrf.mxu0
      %1207 = vmatprep.mubr.f32.mxu0 0.0
      %1208 = vmatmul.mubr.f32.gmra.mxu0 %v1116
      %v1209 = vpop.f32.mrf.mxu0
      %v1210 = vadd.f32 %v1106, %v1209
      %v1211 = vpop.f32.mrf.mxu0
      %1212 = vmatprep.mubr.f32.mxu0 0.0
      %1213 = vmatmul.mubr.f32.gmra.mxu0 %v1119
      %v1214 = vpop.f32.mrf.mxu0
      %v1215 = vadd.f32 %v1106, %v1214
      %v1216 = vpop.f32.mrf.mxu0
      %1217 = vmatprep.mubr.f32.mxu0 0.0
      %1218 = vmatmul.mubr.f32.gmra.mxu0 %v1122
      %v1219 = vpop.f32.mrf.mxu0
      %v1220 = vadd.f32 %v1106, %v1219
      %v1221 = vpop.f32.mrf.mxu0
      %1222 = vmatprep.mubr.f32.mxu0 0.0
      %1223 = vmatmul.mubr.f32.gmra.mxu0 %v1125
      %v1224 = vpop.f32.mrf.mxu0
      %v1225 = vadd.f32 %v1106, %v1224
      %v1226 = vpop.f32.mrf.mxu0
      %1227 = vmatprep.mubr.f32.mxu0 0.0
      %1228 = vmatmul.mubr.f32.gmra.mxu0 %v1128
      %v1229 = vpop.f32.mrf.mxu0
      %v1230 = vadd.f32 %v1106, %v1229
      %v1231 = vpop.f32.mrf.mxu0
      %1232 = vmatprep.mubr.f32.mxu0 0.0
      %1233 = vmatmul.mubr.f32.gmra.mxu0 %v1131
      %v1234 = vpop.f32.mrf.mxu0
      %v1235 = vadd.f32 %v1106, %v1234
      %v1236 = vpop.f32.mrf.mxu0
      %1237 = vdwg.mxu0
      %v1238 = vxor.u32 %v1200, 2147483648
      %v1239 = vxor.u32 %v1205, 2147483648
      %v1240 = vxor.u32 %v1210, 2147483648
      %v1241 = vxor.u32 %v1215, 2147483648
      %v1242 = vxor.u32 %v1220, 2147483648
      %v1243 = vxor.u32 %v1225, 2147483648
      %v1244 = vxor.u32 %v1230, 2147483648
      %v1245 = vxor.u32 %v1235, 2147483648
      %v1246 = vmul.f32 %v1238, 1.442695
      %v1247 = vpow.pop %v1246
      %v1248 = vmul.f32 %v1239, 1.442695
      %v1249 = vpow.pop %v1248
      %v1250 = vmul.f32 %v1240, 1.442695
      %v1251 = vpow.pop %v1250
      %v1252 = vmul.f32 %v1241, 1.442695
      %v1253 = vpow.pop %v1252
      %v1254 = vmul.f32 %v1242, 1.442695
      %v1255 = vpow.pop %v1254
      %v1256 = vmul.f32 %v1243, 1.442695
      %v1257 = vpow.pop %v1256
      %v1258 = vmul.f32 %v1244, 1.442695
      %v1259 = vpow.pop %v1258
      %v1260 = vmul.f32 %v1245, 1.442695
      %v1261 = vpow.pop %v1260
      %v1262 = vadd.f32 %v1247, 1.0
      %v1263 = vadd.f32 %v1249, 1.0
      %v1264 = vadd.f32 %v1251, 1.0
      %v1265 = vadd.f32 %v1253, 1.0
      %v1266 = vadd.f32 %v1255, 1.0
      %v1267 = vadd.f32 %v1257, 1.0
      %v1268 = vadd.f32 %v1259, 1.0
      %v1269 = vadd.f32 %v1261, 1.0
      %v1270 = vrcp.pop %v1262
      %v1271 = vmul.f32 1.0, %v1270
      %v1272 = vrcp.pop %v1263
      %v1273 = vmul.f32 1.0, %v1272
      %v1274 = vrcp.pop %v1264
      %v1275 = vmul.f32 1.0, %v1274
      %v1276 = vrcp.pop %v1265
      %v1277 = vmul.f32 1.0, %v1276
      %v1278 = vrcp.pop %v1266
      %v1279 = vmul.f32 1.0, %v1278
      %v1280 = vrcp.pop %v1267
      %v1281 = vmul.f32 1.0, %v1280
      %v1282 = vrcp.pop %v1268
      %v1283 = vmul.f32 1.0, %v1282
      %v1284 = vrcp.pop %v1269
      %v1285 = vmul.f32 1.0, %v1284
      %1294 = vrot.lane.b32.xlu0 %v1271, 96
      %v1295 = vpop.permute.xlu0 %1294
      %1296 = vrot.lane.b32.xlu0 %v1273, 96
      %v1297 = vpop.permute.xlu0 %1296
      %1298 = vrot.lane.b32.xlu0 %v1275, 96
      %v1299 = vpop.permute.xlu0 %1298
      %1300 = vrot.lane.b32.xlu0 %v1277, 96
      %v1301 = vpop.permute.xlu0 %1300
      %1302 = vrot.lane.b32.xlu0 %v1279, 96
      %v1303 = vpop.permute.xlu0 %1302
      %1304 = vrot.lane.b32.xlu0 %v1281, 96
      %v1305 = vpop.permute.xlu0 %1304
      %1306 = vrot.lane.b32.xlu0 %v1283, 96
      %v1307 = vpop.permute.xlu0 %1306
      %1308 = vrot.lane.b32.xlu0 %v1285, 96
      %v1309 = vpop.permute.xlu0 %1308
      %v1318 = vmul.f32 %v1200, %v1295
      %v1319 = vmul.f32 %v1205, %v1297
      %v1320 = vmul.f32 %v1210, %v1299
      %v1321 = vmul.f32 %v1215, %v1301
      %v1322 = vmul.f32 %v1220, %v1303
      %v1323 = vmul.f32 %v1225, %v1305
      %v1324 = vmul.f32 %v1230, %v1307
      %v1325 = vmul.f32 %v1235, %v1309
      %v1326 = vld [vmem:[%s3] sm:$0xff]
      %v1327 = vld [vmem:[%s3 + $0x8] sm:$0xff]
      %v1328 = vld [vmem:[%s3 + $0x10] sm:$0xff]
      %v1329 = vld [vmem:[%s3 + $0x18] sm:$0xff]
      %v1330 = vld [vmem:[%s3 + $0x20] sm:$0xff]
      %v1331 = vld [vmem:[%s3 + $0x28] sm:$0xff]
      %v1332 = vld [vmem:[%s3 + $0x30] sm:$0xff]
      %v1333 = vld [vmem:[%s3 + $0x38] sm:$0xff]
      %v1334 = vld [vmem:[%s3 + $0x40] sm:$0xff]
      %v1335 = vld [vmem:[%s3 + $0x48] sm:$0xff]
      %v1336 = vld [vmem:[%s3 + $0x50] sm:$0xff]
      %v1337 = vld [vmem:[%s3 + $0x58] sm:$0xff]
      %v1338 = vld [vmem:[%s3 + $0x60] sm:$0xff]
      %v1339 = vld [vmem:[%s3 + $0x68] sm:$0xff]
      %v1340 = vld [vmem:[%s3 + $0x70] sm:$0xff]
      %v1341 = vld [vmem:[%s3 + $0x78] sm:$0xff]
      %v1342 = vld [vmem:[%s3 + $0x80] sm:$0xff]
      %v1343 = vld [vmem:[%s3 + $0x88] sm:$0xff]
      %v1344 = vld [vmem:[%s3 + $0x90] sm:$0xff]
      %v1345 = vld [vmem:[%s3 + $0x98] sm:$0xff]
      %v1346 = vld [vmem:[%s3 + $0xa0] sm:$0xff]
      %v1347 = vld [vmem:[%s3 + $0xa8] sm:$0xff]
      %v1348 = vld [vmem:[%s3 + $0xb0] sm:$0xff]
      %v1349 = vld [vmem:[%s3 + $0xb8] sm:$0xff]
      %v1350 = vld [vmem:[%s3 + $0xc0] sm:$0xff]
      %v1351 = vld [vmem:[%s3 + $0xc8] sm:$0xff]
      %v1352 = vld [vmem:[%s3 + $0xd0] sm:$0xff]
      %v1353 = vld [vmem:[%s3 + $0xd8] sm:$0xff]
      %v1354 = vld [vmem:[%s3 + $0xe0] sm:$0xff]
      %v1355 = vld [vmem:[%s3 + $0xe8] sm:$0xff]
      %v1356 = vld [vmem:[%s3 + $0xf0] sm:$0xff]
      %v1357 = vld [vmem:[%s3 + $0xf8] sm:$0xff]
      %v1358 = vld [vmem:[%s4] sm:$0x1]
      %v1367 = vrot.slane %v1318, 5
      %v1368 = vrot.slane %v1319, 5
      %v1369 = vsel %vm669, %v1367, %v1368
      %v1370 = vrot.slane %v1320, 5
      %v1371 = vsel %vm669, %v1368, %v1370
      %v1372 = vrot.slane %v1321, 5
      %v1373 = vsel %vm669, %v1370, %v1372
      %v1374 = vrot.slane %v1322, 5
      %v1375 = vsel %vm669, %v1372, %v1374
      %v1376 = vrot.slane %v1323, 5
      %v1377 = vsel %vm669, %v1374, %v1376
      %v1378 = vrot.slane %v1324, 5
      %v1379 = vsel %vm669, %v1376, %v1378
      %v1380 = vrot.slane %v1325, 5
      %v1381 = vsel %vm669, %v1378, %v1380
      %v1391 = vsel %vm669, 0.0, %v1367
      %v1392 = vsel %vm669, %v1380, 0.0
      %v1394 = vrot.slane %v1391, 1
      %v1395 = vrot.slane %v1369, 1
      %v1396 = vsel %vm473, %v1394, %v1395
      %v1397 = vrot.slane %v1371, 1
      %v1398 = vsel %vm473, %v1395, %v1397
      %v1399 = vrot.slane %v1373, 1
      %v1400 = vsel %vm473, %v1397, %v1399
      %v1401 = vrot.slane %v1375, 1
      %v1402 = vsel %vm473, %v1399, %v1401
      %v1403 = vrot.slane %v1377, 1
      %v1404 = vsel %vm473, %v1401, %v1403
      %v1405 = vrot.slane %v1379, 1
      %v1406 = vsel %vm473, %v1403, %v1405
      %v1407 = vrot.slane %v1381, 1
      %v1408 = vsel %vm473, %v1405, %v1407
      %1409 = vrot.lane.b32.xlu0 %v1396, 32
      %v1410 = vpop.permute.xlu0 %1409
      %1411 = vrot.lane.b32.xlu0 %v1398, 32
      %v1412 = vpop.permute.xlu0 %1411
      %1413 = vrot.lane.b32.xlu0 %v1400, 32
      %v1414 = vpop.permute.xlu0 %1413
      %1415 = vrot.lane.b32.xlu0 %v1402, 32
      %v1416 = vpop.permute.xlu0 %1415
      %1417 = vrot.lane.b32.xlu0 %v1404, 32
      %v1418 = vpop.permute.xlu0 %1417
      %1419 = vrot.lane.b32.xlu0 %v1406, 32
      %v1420 = vpop.permute.xlu0 %1419
      %1421 = vrot.lane.b32.xlu0 %v1408, 32
      %v1422 = vpop.permute.xlu0 %1421
      %1423 = vrot.lane.b32.xlu0 %v1407, 32
      %v1424 = vpop.permute.xlu0 %1423
      %v1434 = vrot.slane %v1391, 2
      %v1435 = vrot.slane %v1369, 2
      %v1436 = vsel %vm543, %v1434, %v1435
      %v1437 = vrot.slane %v1371, 2
      %v1438 = vsel %vm543, %v1435, %v1437
      %v1439 = vrot.slane %v1373, 2
      %v1440 = vsel %vm543, %v1437, %v1439
      %v1441 = vrot.slane %v1375, 2
      %v1442 = vsel %vm543, %v1439, %v1441
      %v1443 = vrot.slane %v1377, 2
      %v1444 = vsel %vm543, %v1441, %v1443
      %v1445 = vrot.slane %v1379, 2
      %v1446 = vsel %vm543, %v1443, %v1445
      %v1447 = vrot.slane %v1381, 2
      %v1448 = vsel %vm543, %v1445, %v1447
      %v1449 = vrot.slane %v1392, 2
      %v1450 = vsel %vm543, %v1447, %v1449
      %1451 = vrot.lane.b32.xlu0 %v1436, 64
      %v1452 = vpop.permute.xlu0 %1451
      %1453 = vrot.lane.b32.xlu0 %v1438, 64
      %v1454 = vpop.permute.xlu0 %1453
      %1455 = vrot.lane.b32.xlu0 %v1440, 64
      %v1456 = vpop.permute.xlu0 %1455
      %1457 = vrot.lane.b32.xlu0 %v1442, 64
      %v1458 = vpop.permute.xlu0 %1457
      %1459 = vrot.lane.b32.xlu0 %v1444, 64
      %v1460 = vpop.permute.xlu0 %1459
      %1461 = vrot.lane.b32.xlu0 %v1446, 64
      %v1462 = vpop.permute.xlu0 %1461
      %1463 = vrot.lane.b32.xlu0 %v1448, 64
      %v1464 = vpop.permute.xlu0 %1463
      %1465 = vrot.lane.b32.xlu0 %v1450, 64
      %v1466 = vpop.permute.xlu0 %1465
      %v1475 = vrot.slane %v1391, 3
      %v1476 = vrot.slane %v1369, 3
      %v1477 = vsel %vm585, %v1475, %v1476
      %v1478 = vrot.slane %v1371, 3
      %v1479 = vsel %vm585, %v1476, %v1478
      %v1480 = vrot.slane %v1373, 3
      %v1481 = vsel %vm585, %v1478, %v1480
      %v1482 = vrot.slane %v1375, 3
      %v1483 = vsel %vm585, %v1480, %v1482
      %v1484 = vrot.slane %v1377, 3
      %v1485 = vsel %vm585, %v1482, %v1484
      %v1486 = vrot.slane %v1379, 3
      %v1487 = vsel %vm585, %v1484, %v1486
      %v1488 = vrot.slane %v1381, 3
      %v1489 = vsel %vm585, %v1486, %v1488
      %v1490 = vrot.slane %v1392, 3
      %v1491 = vsel %vm585, %v1488, %v1490
      %1492 = vrot.lane.b32.xlu0 %v1477, 96
      %v1493 = vpop.permute.xlu0 %1492
      %1494 = vrot.lane.b32.xlu0 %v1479, 96
      %v1495 = vpop.permute.xlu0 %1494
      %1496 = vrot.lane.b32.xlu0 %v1481, 96
      %v1497 = vpop.permute.xlu0 %1496
      %1498 = vrot.lane.b32.xlu0 %v1483, 96
      %v1499 = vpop.permute.xlu0 %1498
      %1500 = vrot.lane.b32.xlu0 %v1485, 96
      %v1501 = vpop.permute.xlu0 %1500
      %1502 = vrot.lane.b32.xlu0 %v1487, 96
      %v1503 = vpop.permute.xlu0 %1502
      %1504 = vrot.lane.b32.xlu0 %v1489, 96
      %v1505 = vpop.permute.xlu0 %1504
      %1506 = vrot.lane.b32.xlu0 %v1491, 96
      %v1507 = vpop.permute.xlu0 %1506
      %v1516 = vrot.slane %v1391, 4
      %v1517 = vrot.slane %v1369, 4
      %v1518 = vsel %vm627, %v1516, %v1517
      %v1519 = vrot.slane %v1371, 4
      %v1520 = vsel %vm627, %v1517, %v1519
      %v1521 = vrot.slane %v1373, 4
      %v1522 = vsel %vm627, %v1519, %v1521
      %v1523 = vrot.slane %v1375, 4
      %v1524 = vsel %vm627, %v1521, %v1523
      %v1525 = vrot.slane %v1377, 4
      %v1526 = vsel %vm627, %v1523, %v1525
      %v1527 = vrot.slane %v1379, 4
      %v1528 = vsel %vm627, %v1525, %v1527
      %v1529 = vrot.slane %v1381, 4
      %v1530 = vsel %vm627, %v1527, %v1529
      %v1531 = vrot.slane %v1392, 4
      %v1532 = vsel %vm627, %v1529, %v1531
      %v1541 = vrot.slane %v1391, 5
      %v1542 = vrot.slane %v1369, 5
      %v1543 = vsel %vm669, %v1541, %v1542
      %v1544 = vrot.slane %v1371, 5
      %v1545 = vsel %vm669, %v1542, %v1544
      %v1546 = vrot.slane %v1373, 5
      %v1547 = vsel %vm669, %v1544, %v1546
      %v1548 = vrot.slane %v1375, 5
      %v1549 = vsel %vm669, %v1546, %v1548
      %v1550 = vrot.slane %v1377, 5
      %v1551 = vsel %vm669, %v1548, %v1550
      %v1552 = vrot.slane %v1379, 5
      %v1553 = vsel %vm669, %v1550, %v1552
      %v1554 = vrot.slane %v1381, 5
      %v1555 = vsel %vm669, %v1552, %v1554
      %v1556 = vrot.slane %v1392, 5
      %v1557 = vsel %vm669, %v1554, %v1556
      %1558 = vrot.lane.b32.xlu0 %v1543, 32
      %v1559 = vpop.permute.xlu0 %1558
      %1560 = vrot.lane.b32.xlu0 %v1545, 32
      %v1561 = vpop.permute.xlu0 %1560
      %1562 = vrot.lane.b32.xlu0 %v1547, 32
      %v1563 = vpop.permute.xlu0 %1562
      %1564 = vrot.lane.b32.xlu0 %v1549, 32
      %v1565 = vpop.permute.xlu0 %1564
      %1566 = vrot.lane.b32.xlu0 %v1551, 32
      %v1567 = vpop.permute.xlu0 %1566
      %1568 = vrot.lane.b32.xlu0 %v1553, 32
      %v1569 = vpop.permute.xlu0 %1568
      %1570 = vrot.lane.b32.xlu0 %v1555, 32
      %v1571 = vpop.permute.xlu0 %1570
      %1572 = vrot.lane.b32.xlu0 %v1557, 32
      %v1573 = vpop.permute.xlu0 %1572
      %v1582 = vrot.slane %v1391, 6
      %v1583 = vrot.slane %v1369, 6
      %v1584 = vsel %vm711, %v1582, %v1583
      %v1585 = vrot.slane %v1371, 6
      %v1586 = vsel %vm711, %v1583, %v1585
      %v1587 = vrot.slane %v1373, 6
      %v1588 = vsel %vm711, %v1585, %v1587
      %v1589 = vrot.slane %v1375, 6
      %v1590 = vsel %vm711, %v1587, %v1589
      %v1591 = vrot.slane %v1377, 6
      %v1592 = vsel %vm711, %v1589, %v1591
      %v1593 = vrot.slane %v1379, 6
      %v1594 = vsel %vm711, %v1591, %v1593
      %v1595 = vrot.slane %v1381, 6
      %v1596 = vsel %vm711, %v1593, %v1595
      %v1597 = vrot.slane %v1392, 6
      %v1598 = vsel %vm711, %v1595, %v1597
      %1599 = vrot.lane.b32.xlu0 %v1584, 64
      %v1600 = vpop.permute.xlu0 %1599
      %1601 = vrot.lane.b32.xlu0 %v1586, 64
      %v1602 = vpop.permute.xlu0 %1601
      %1603 = vrot.lane.b32.xlu0 %v1588, 64
      %v1604 = vpop.permute.xlu0 %1603
      %1605 = vrot.lane.b32.xlu0 %v1590, 64
      %v1606 = vpop.permute.xlu0 %1605
      %1607 = vrot.lane.b32.xlu0 %v1592, 64
      %v1608 = vpop.permute.xlu0 %1607
      %1609 = vrot.lane.b32.xlu0 %v1594, 64
      %v1610 = vpop.permute.xlu0 %1609
      %1611 = vrot.lane.b32.xlu0 %v1596, 64
      %v1612 = vpop.permute.xlu0 %1611
      %1613 = vrot.lane.b32.xlu0 %v1598, 64
      %v1614 = vpop.permute.xlu0 %1613
      %v1623 = vrot.slane %v1391, 7
      %v1624 = vrot.slane %v1369, 7
      %v1625 = vsel %vm753, %v1623, %v1624
      %v1626 = vrot.slane %v1371, 7
      %v1627 = vsel %vm753, %v1624, %v1626
      %v1628 = vrot.slane %v1373, 7
      %v1629 = vsel %vm753, %v1626, %v1628
      %v1630 = vrot.slane %v1375, 7
      %v1631 = vsel %vm753, %v1628, %v1630
      %v1632 = vrot.slane %v1377, 7
      %v1633 = vsel %vm753, %v1630, %v1632
      %v1634 = vrot.slane %v1379, 7
      %v1635 = vsel %vm753, %v1632, %v1634
      %v1636 = vrot.slane %v1381, 7
      %v1637 = vsel %vm753, %v1634, %v1636
      %v1638 = vrot.slane %v1392, 7
      %v1639 = vsel %vm753, %v1636, %v1638
      %1640 = vrot.lane.b32.xlu0 %v1625, 96
      %v1641 = vpop.permute.xlu0 %1640
      %1642 = vrot.lane.b32.xlu0 %v1627, 96
      %v1643 = vpop.permute.xlu0 %1642
      %1644 = vrot.lane.b32.xlu0 %v1629, 96
      %v1645 = vpop.permute.xlu0 %1644
      %1646 = vrot.lane.b32.xlu0 %v1631, 96
      %v1647 = vpop.permute.xlu0 %1646
      %1648 = vrot.lane.b32.xlu0 %v1633, 96
      %v1649 = vpop.permute.xlu0 %1648
      %1650 = vrot.lane.b32.xlu0 %v1635, 96
      %v1651 = vpop.permute.xlu0 %1650
      %1652 = vrot.lane.b32.xlu0 %v1637, 96
      %v1653 = vpop.permute.xlu0 %1652
      %1654 = vrot.lane.b32.xlu0 %v1639, 96
      %v1655 = vpop.permute.xlu0 %1654
      %v1664 = vsel %vm1003, %v1391, %v1410
      %v1665 = vsel %vm1003, %v1369, %v1412
      %v1666 = vsel %vm1003, %v1371, %v1414
      %v1667 = vsel %vm1003, %v1373, %v1416
      %v1668 = vsel %vm1003, %v1375, %v1418
      %v1669 = vsel %vm1003, %v1377, %v1420
      %v1670 = vsel %vm1003, %v1379, %v1422
      %v1671 = vsel %vm1003, %v1381, %v1424
      %v1672 = vsel %vm1039, %v1664, %v1452
      %v1673 = vsel %vm1039, %v1665, %v1454
      %v1674 = vsel %vm1039, %v1666, %v1456
      %v1675 = vsel %vm1039, %v1667, %v1458
      %v1676 = vsel %vm1039, %v1668, %v1460
      %v1677 = vsel %vm1039, %v1669, %v1462
      %v1678 = vsel %vm1039, %v1670, %v1464
      %v1679 = vsel %vm1039, %v1671, %v1466
      %v1680 = vsel %vm1075, %v1672, %v1493
      %v1681 = vsel %vm1075, %v1673, %v1495
      %v1682 = vsel %vm1075, %v1674, %v1497
      %v1683 = vsel %vm1075, %v1675, %v1499
      %v1684 = vsel %vm1075, %v1676, %v1501
      %v1685 = vsel %vm1075, %v1677, %v1503
      %v1686 = vsel %vm1075, %v1678, %v1505
      %v1687 = vsel %vm1075, %v1679, %v1507
      %v1688 = vsel %vm1003, %v1518, %v1559
      %v1689 = vsel %vm1003, %v1520, %v1561
      %v1690 = vsel %vm1003, %v1522, %v1563
      %v1691 = vsel %vm1003, %v1524, %v1565
      %v1692 = vsel %vm1003, %v1526, %v1567
      %v1693 = vsel %vm1003, %v1528, %v1569
      %v1694 = vsel %vm1003, %v1530, %v1571
      %v1695 = vsel %vm1003, %v1532, %v1573
      %v1696 = vsel %vm1039, %v1688, %v1600
      %v1697 = vsel %vm1039, %v1689, %v1602
      %v1698 = vsel %vm1039, %v1690, %v1604
      %v1699 = vsel %vm1039, %v1691, %v1606
      %v1700 = vsel %vm1039, %v1692, %v1608
      %v1701 = vsel %vm1039, %v1693, %v1610
      %v1702 = vsel %vm1039, %v1694, %v1612
      %v1703 = vsel %vm1039, %v1695, %v1614
      %v1704 = vsel %vm1075, %v1696, %v1641
      %v1705 = vsel %vm1075, %v1697, %v1643
      %v1706 = vsel %vm1075, %v1698, %v1645
      %v1707 = vsel %vm1075, %v1699, %v1647
      %v1708 = vsel %vm1075, %v1700, %v1649
      %v1709 = vsel %vm1075, %v1701, %v1651
      %v1710 = vsel %vm1075, %v1702, %v1653
      %v1711 = vsel %vm1075, %v1703, %v1655
      %v1713 = vlaneseq
      %v1714 = vshrl.u32 %v1713, 7
      %v1715 = vsub.s32 0, %v1714
      %v1716 = vrot.slane %v1358, %v1715
      %1718 = vmatprep.subr.mxu0 0.0
      %1719 = vmatpush1.msra.mxu0 %v1341
      %1720 = vmatprep.subr.mxu0 0.0
      %1721 = vmatpush1.msra.mxu0 %v1340
      %1722 = vmatprep.subr.mxu0 0.0
      %1723 = vmatpush1.msra.mxu0 %v1339
      %1724 = vmatprep.subr.mxu0 0.0
      %1725 = vmatpush1.msra.mxu0 %v1338
      %1726 = vmatprep.subr.mxu0 0.0
      %1727 = vmatpush1.msra.mxu0 %v1337
      %1728 = vmatprep.subr.mxu0 0.0
      %1729 = vmatpush1.msra.mxu0 %v1336
      %1730 = vmatprep.subr.mxu0 0.0
      %1731 = vmatpush1.msra.mxu0 %v1335
      %1732 = vmatprep.subr.mxu0 0.0
      %1733 = vmatpush1.msra.mxu0 %v1334
      %1734 = vmatprep.subr.mxu0 0.0
      %1735 = vmatpush1.msra.mxu0 %v1333
      %1736 = vmatprep.subr.mxu0 0.0
      %1737 = vmatpush1.msra.mxu0 %v1332
      %1738 = vmatprep.subr.mxu0 0.0
      %1739 = vmatpush1.msra.mxu0 %v1331
      %1740 = vmatprep.subr.mxu0 0.0
      %1741 = vmatpush1.msra.mxu0 %v1330
      %1742 = vmatprep.subr.mxu0 0.0
      %1743 = vmatpush1.msra.mxu0 %v1329
      %1744 = vmatprep.subr.mxu0 0.0
      %1745 = vmatpush1.msra.mxu0 %v1328
      %1746 = vmatprep.subr.mxu0 0.0
      %1747 = vmatpush1.msra.mxu0 %v1327
      %1748 = vmatprep.subr.mxu0 0.0
      %1749 = vmatpush1.msra.mxu0 %v1326
      %1750 = vmatprep.subr.mxu0 0.0
      %1751 = vmatpush2.msra.mxu0 %v1357
      %1752 = vmatprep.subr.mxu0 0.0
      %1753 = vmatpush2.msra.mxu0 %v1356
      %1754 = vmatprep.subr.mxu0 0.0
      %1755 = vmatpush2.msra.mxu0 %v1355
      %1756 = vmatprep.subr.mxu0 0.0
      %1757 = vmatpush2.msra.mxu0 %v1354
      %1758 = vmatprep.subr.mxu0 0.0
      %1759 = vmatpush2.msra.mxu0 %v1353
      %1760 = vmatprep.subr.mxu0 0.0
      %1761 = vmatpush2.msra.mxu0 %v1352
      %1762 = vmatprep.subr.mxu0 0.0
      %1763 = vmatpush2.msra.mxu0 %v1351
      %1764 = vmatprep.subr.mxu0 0.0
      %1765 = vmatpush2.msra.mxu0 %v1350
      %1766 = vmatprep.subr.mxu0 0.0
      %1767 = vmatpush2.msra.mxu0 %v1349
      %1768 = vmatprep.subr.mxu0 0.0
      %1769 = vmatpush2.msra.mxu0 %v1348
      %1770 = vmatprep.subr.mxu0 0.0
      %1771 = vmatpush2.msra.mxu0 %v1347
      %1772 = vmatprep.subr.mxu0 0.0
      %1773 = vmatpush2.msra.mxu0 %v1346
      %1774 = vmatprep.subr.mxu0 0.0
      %1775 = vmatpush2.msra.mxu0 %v1345
      %1776 = vmatprep.subr.mxu0 0.0
      %1777 = vmatpush2.msra.mxu0 %v1344
      %1778 = vmatprep.subr.mxu0 0.0
      %1779 = vmatpush2.msra.mxu0 %v1343
      %1780 = vmatprep.subr.mxu0 0.0
      %1781 = vmatpush2.msra.mxu0 %v1342
      %1782 = vmatprep.mubr.f32.mxu0 %v1704
      %1783 = vmatmul.mubr.f32.gmra.mxu0 %v1680
      %v1784 = vpop.f32.mrf.mxu0
      %v1785 = vadd.f32 %v1716, %v1784
      %v1786 = vpop.f32.mrf.mxu0
      %1787 = vmatprep.mubr.f32.mxu0 %v1705
      %1788 = vmatmul.mubr.f32.gmra.mxu0 %v1681
      %v1789 = vpop.f32.mrf.mxu0
      %v1790 = vadd.f32 %v1716, %v1789
      %v1791 = vpop.f32.mrf.mxu0
      %1792 = vmatprep.mubr.f32.mxu0 %v1706
      %1793 = vmatmul.mubr.f32.gmra.mxu0 %v1682
      %v1794 = vpop.f32.mrf.mxu0
      %v1795 = vadd.f32 %v1716, %v1794
      %v1796 = vpop.f32.mrf.mxu0
      %1797 = vmatprep.mubr.f32.mxu0 %v1707
      %1798 = vmatmul.mubr.f32.gmra.mxu0 %v1683
      %v1799 = vpop.f32.mrf.mxu0
      %v1800 = vadd.f32 %v1716, %v1799
      %v1801 = vpop.f32.mrf.mxu0
      %1802 = vmatprep.mubr.f32.mxu0 %v1708
      %1803 = vmatmul.mubr.f32.gmra.mxu0 %v1684
      %v1804 = vpop.f32.mrf.mxu0
      %v1805 = vadd.f32 %v1716, %v1804
      %v1806 = vpop.f32.mrf.mxu0
      %1807 = vmatprep.mubr.f32.mxu0 %v1709
      %1808 = vmatmul.mubr.f32.gmra.mxu0 %v1685
      %v1809 = vpop.f32.mrf.mxu0
      %v1810 = vadd.f32 %v1716, %v1809
      %v1811 = vpop.f32.mrf.mxu0
      %1812 = vmatprep.mubr.f32.mxu0 %v1710
      %1813 = vmatmul.mubr.f32.gmra.mxu0 %v1686
      %v1814 = vpop.f32.mrf.mxu0
      %v1815 = vadd.f32 %v1716, %v1814
      %v1816 = vpop.f32.mrf.mxu0
      %1817 = vmatprep.mubr.f32.mxu0 %v1711
      %1818 = vmatmul.mubr.f32.gmra.mxu0 %v1687
      %v1819 = vpop.f32.mrf.mxu0
      %v1820 = vadd.f32 %v1716, %v1819
      %v1821 = vpop.f32.mrf.mxu0
      %1822 = vdwg.mxu0
      %v1823 = vlaneseq
      %v1824 = vshrl.u32 %v1823, 7
      %v1825 = vadd.s32 %v1824, 8
      %v1826 = vadd.s32 %v1824, 16
      %v1827 = vadd.s32 %v1824, 24
      %v1828 = vlaneseq
      %v1829 = vand.u32 %v1828, 127
      %v1830 = vmul.u32 %v1824, 2
      %v1831 = vmul.u32 %v1825, 2
      %v1832 = vmul.u32 %v1826, 2
      %v1833 = vmul.u32 %v1827, 2
      %vm1834 = vcmp.eq.s32.totalorder %v1829, %v1830
      %vm1835 = vcmp.eq.s32.totalorder %v1829, %v1831
      %vm1836 = vcmp.eq.s32.totalorder %v1829, %v1832
      %vm1837 = vcmp.eq.s32.totalorder %v1829, %v1833
      %v1838 = vsel %vm1834, 1, 0
      %v1839 = vsel %vm1835, 1, 0
      %v1840 = vsel %vm1836, 1, 0
      %v1841 = vsel %vm1837, 1, 0
      %v1842 = vcvt.s32.f32 %v1838
      %v1843 = vcvt.s32.f32 %v1839
      %v1844 = vcvt.s32.f32 %v1840
      %v1845 = vcvt.s32.f32 %v1841
      %vm1846 = vcmask 515072
      %v1848 = vsel %vm1846, %v1842, 0
      %v1851 = vsel %vm1846, %v1843, 0
      %v1854 = vsel %vm1846, %v1844, 0
      %v1857 = vsel %vm1846, %v1845, 0
      %v1860 = vsel %vm473, %v1820, 0
      %1862 = vmatprep.subr.mxu0 0.0
      %1863 = vmatpush1.msra.mxu0 0.0
      %1864 = vmatprep.subr.mxu0 0.0
      %1865 = vmatpush1.msra.mxu0 0.0
      %1866 = vmatprep.subr.mxu0 0.0
      %1867 = vmatpush1.msra.mxu0 0.0
      %1868 = vmatprep.subr.mxu0 0.0
      %1869 = vmatpush1.msra.mxu0 0.0
      %1870 = vmatprep.subr.mxu0 0.0
      %1871 = vmatpush1.msra.mxu0 0.0
      %1872 = vmatprep.subr.mxu0 0.0
      %1873 = vmatpush1.msra.mxu0 0.0
      %1874 = vmatprep.subr.mxu0 0.0
      %1875 = vmatpush1.msra.mxu0 0.0
      %1876 = vmatprep.subr.mxu0 0.0
      %1877 = vmatpush1.msra.mxu0 0.0
      %1878 = vmatprep.subr.mxu0 0.0
      %1879 = vmatpush1.msra.mxu0 %v1860
      %1880 = vmatprep.subr.mxu0 0.0
      %1881 = vmatpush1.msra.mxu0 %v1815
      %1882 = vmatprep.subr.mxu0 0.0
      %1883 = vmatpush1.msra.mxu0 %v1810
      %1884 = vmatprep.subr.mxu0 0.0
      %1885 = vmatpush1.msra.mxu0 %v1805
      %1886 = vmatprep.subr.mxu0 0.0
      %1887 = vmatpush1.msra.mxu0 %v1800
      %1888 = vmatprep.subr.mxu0 0.0
      %1889 = vmatpush1.msra.mxu0 %v1795
      %1890 = vmatprep.subr.mxu0 0.0
      %1891 = vmatpush1.msra.mxu0 %v1790
      %1892 = vmatprep.subr.mxu0 0.0
      %1893 = vmatpush1.msra.mxu0 %v1785
      %1894 = vmatprep.subr.mxu0 0.0
      %1895 = vmatpush2.msra.mxu0 0.0
      %1896 = vmatprep.subr.mxu0 0.0
      %1897 = vmatpush2.msra.mxu0 0.0
      %1898 = vmatprep.subr.mxu0 0.0
      %1899 = vmatpush2.msra.mxu0 0.0
      %1900 = vmatprep.subr.mxu0 0.0
      %1901 = vmatpush2.msra.mxu0 0.0
      %1902 = vmatprep.subr.mxu0 0.0
      %1903 = vmatpush2.msra.mxu0 0.0
      %1904 = vmatprep.subr.mxu0 0.0
      %1905 = vmatpush2.msra.mxu0 0.0
      %1906 = vmatprep.subr.mxu0 0.0
      %1907 = vmatpush2.msra.mxu0 0.0
      %1908 = vmatprep.subr.mxu0 0.0
      %1909 = vmatpush2.msra.mxu0 0.0
      %1910 = vmatprep.subr.mxu0 0.0
      %1911 = vmatpush2.msra.mxu0 0.0
      %1912 = vmatprep.subr.mxu0 0.0
      %1913 = vmatpush2.msra.mxu0 0.0
      %1914 = vmatprep.subr.mxu0 0.0
      %1915 = vmatpush2.msra.mxu0 0.0
      %1916 = vmatprep.subr.mxu0 0.0
      %1917 = vmatpush2.msra.mxu0 0.0
      %1918 = vmatprep.subr.mxu0 0.0
      %1919 = vmatpush2.msra.mxu0 0.0
      %1920 = vmatprep.subr.mxu0 0.0
      %1921 = vmatpush2.msra.mxu0 0.0
      %1922 = vmatprep.subr.mxu0 0.0
      %1923 = vmatpush2.msra.mxu0 0.0
      %1924 = vmatprep.subr.mxu0 0.0
      %1925 = vmatpush2.msra.mxu0 0.0
      %1926 = vmatprep.mubr.f32.mxu0 0.0
      %1927 = vmatmul.mubr.f32.gmra.mxu0 %v1848
      %v1928 = vpop.f32.mrf.mxu0
      %v1929 = vadd.f32 0.0, %v1928
      %v1930 = vpop.f32.mrf.mxu0
      %1931 = vmatprep.mubr.f32.mxu0 0.0
      %1932 = vmatmul.mubr.f32.gmra.mxu0 %v1851
      %v1933 = vpop.f32.mrf.mxu0
      %v1934 = vadd.f32 0.0, %v1933
      %v1935 = vpop.f32.mrf.mxu0
      %1936 = vmatprep.mubr.f32.mxu0 0.0
      %1937 = vmatmul.mubr.f32.gmra.mxu0 %v1854
      %v1938 = vpop.f32.mrf.mxu0
      %v1939 = vadd.f32 0.0, %v1938
      %v1940 = vpop.f32.mrf.mxu0
      %1941 = vmatprep.mubr.f32.mxu0 0.0
      %1942 = vmatmul.mubr.f32.gmra.mxu0 %v1857
      %v1943 = vpop.f32.mrf.mxu0
      %v1944 = vadd.f32 0.0, %v1943
      %v1945 = vpop.f32.mrf.mxu0
      %1946 = vdwg.mxu0
      %v1947 = vsel %vm1039, %v1929, 0.0
      %v1948 = vsel %vm1039, %v1934, 0.0
      %v1949 = vadd.f32 %v1947, %v1948
      %v1950 = vsel %vm1039, %v1939, 0.0
      %v1951 = vadd.f32 %v1949, %v1950
      %v1952 = vsel %vm1039, %v1944, 0.0
      %v1953 = vadd.f32 %v1951, %v1952
      %v1954 = vrot.slane %v1953, 4
      %v1955 = vadd.f32 %v1953, %v1954
      %v1956 = vrot.slane %v1955, 2
      %v1957 = vadd.f32 %v1955, %v1956
      %v1958 = vrot.slane %v1957, 1
      %v1959 = vadd.f32 %v1957, %v1958
      %v1960 = vmul.f32 %v1959, 0.03125
      %v1961 = vmul.f32 %v1929, %v1929
      %v1962 = vmul.f32 %v1934, %v1934
      %v1963 = vmul.f32 %v1939, %v1939
      %v1964 = vmul.f32 %v1944, %v1944
      %v1965 = vsel %vm1039, %v1961, 0.0
      %v1966 = vsel %vm1039, %v1962, 0.0
      %v1967 = vadd.f32 %v1965, %v1966
      %v1968 = vsel %vm1039, %v1963, 0.0
      %v1969 = vadd.f32 %v1967, %v1968
      %v1970 = vsel %vm1039, %v1964, 0.0
      %v1971 = vadd.f32 %v1969, %v1970
      %v1972 = vrot.slane %v1971, 4
      %v1973 = vadd.f32 %v1971, %v1972
      %v1974 = vrot.slane %v1973, 2
      %v1975 = vadd.f32 %v1973, %v1974
      %v1976 = vrot.slane %v1975, 1
      %v1977 = vadd.f32 %v1975, %v1976
      %v1978 = vmul.f32 %v1977, 0.03125
      %v1979 = vmul.f32 %v1960, %v1960
      %v1980 = vsub.f32 %v1978, %v1979
      %v1981 = vsub.f32 %v1929, %v1960
      %v1982 = vsub.f32 %v1934, %v1960
      %v1983 = vsub.f32 %v1939, %v1960
      %v1984 = vsub.f32 %v1944, %v1960
      %v1985 = vadd.f32 %v1980, 1e-05
      %v1986 = vrsqrt.pop %v1985
      %v1987 = vmul.f32 %v1981, %v1986
      %v1988 = vmul.f32 %v1982, %v1986
      %v1989 = vmul.f32 %v1983, %v1986
      %v1990 = vmul.f32 %v1984, %v1986
      %v1991 = vxor.u32 %v1987, 2147483648
      %v1992 = vxor.u32 %v1988, 2147483648
      %v1993 = vxor.u32 %v1989, 2147483648
      %v1994 = vxor.u32 %v1990, 2147483648
      %v1995 = vmul.f32 %v1991, 1.442695
      %v1996 = vpow.pop %v1995
      %v1997 = vmul.f32 %v1992, 1.442695
      %v1998 = vpow.pop %v1997
      %v1999 = vmul.f32 %v1993, 1.442695
      %v2000 = vpow.pop %v1999
      %v2001 = vmul.f32 %v1994, 1.442695
      %v2002 = vpow.pop %v2001
      %v2003 = vadd.f32 %v1996, 1.0
      %v2004 = vadd.f32 %v1998, 1.0
      %v2005 = vadd.f32 %v2000, 1.0
      %v2006 = vadd.f32 %v2002, 1.0
      %v2007 = vrcp.pop %v2003
      %v2008 = vmul.f32 1.0, %v2007
      %v2009 = vrcp.pop %v2004
      %v2010 = vmul.f32 1.0, %v2009
      %v2011 = vrcp.pop %v2005
      %v2012 = vmul.f32 1.0, %v2011
      %v2013 = vrcp.pop %v2006
      %v2014 = vmul.f32 1.0, %v2013
      %2019 = vrot.lane.b32.xlu0 %v2008, 96
      %v2020 = vpop.permute.xlu0 %2019
      %2021 = vrot.lane.b32.xlu0 %v2010, 96
      %v2022 = vpop.permute.xlu0 %2021
      %2023 = vrot.lane.b32.xlu0 %v2012, 96
      %v2024 = vpop.permute.xlu0 %2023
      %2025 = vrot.lane.b32.xlu0 %v2014, 96
      %v2026 = vpop.permute.xlu0 %2025
      %v2031 = vmul.f32 %v1987, %v2020
      %v2032 = vmul.f32 %v1988, %v2022
      %v2033 = vmul.f32 %v1989, %v2024
      %v2034 = vmul.f32 %v1990, %v2026
      %v2035 = vld [vmem:[%s5] sm:$0xff]
      %v2036 = vld [vmem:[%s5 + $0x8] sm:$0xff]
      %v2037 = vld [vmem:[%s5 + $0x10] sm:$0xff]
      %v2038 = vld [vmem:[%s5 + $0x18] sm:$0xff]
      %v2039 = vld [vmem:[%s5 + $0x20] sm:$0xff]
      %v2040 = vld [vmem:[%s5 + $0x28] sm:$0xff]
      %v2041 = vld [vmem:[%s5 + $0x30] sm:$0xff]
      %v2042 = vld [vmem:[%s5 + $0x38] sm:$0xff]
      %v2043 = vld [vmem:[%s5 + $0x40] sm:$0xff]
      %v2044 = vld [vmem:[%s5 + $0x48] sm:$0xff]
      %v2045 = vld [vmem:[%s5 + $0x50] sm:$0xff]
      %v2046 = vld [vmem:[%s5 + $0x58] sm:$0xff]
      %v2047 = vld [vmem:[%s5 + $0x60] sm:$0xff]
      %v2048 = vld [vmem:[%s5 + $0x68] sm:$0xff]
      %v2049 = vld [vmem:[%s5 + $0x70] sm:$0xff]
      %v2050 = vld [vmem:[%s5 + $0x78] sm:$0xff]
      %v2051 = vld [vmem:[%s5 + $0x80] sm:$0xff]
      %v2052 = vld [vmem:[%s5 + $0x88] sm:$0xff]
      %v2053 = vld [vmem:[%s5 + $0x90] sm:$0xff]
      %v2054 = vld [vmem:[%s5 + $0x98] sm:$0xff]
      %v2055 = vld [vmem:[%s6] sm:$0x1]
      %v2060 = vrot.slane %v2031, 6
      %v2061 = vrot.slane %v2032, 6
      %v2062 = vsel %vm711, %v2060, %v2061
      %v2063 = vrot.slane %v2033, 6
      %v2064 = vsel %vm711, %v2061, %v2063
      %v2065 = vrot.slane %v2034, 6
      %v2066 = vsel %vm711, %v2063, %v2065
      %v2072 = vsel %vm711, 0.0, %v2060
      %v2073 = vsel %vm711, %v2065, 0.0
      %v2076 = vrot.slane %v2072, 1
      %v2077 = vrot.slane %v2062, 1
      %v2078 = vsel %vm473, %v2076, %v2077
      %v2079 = vrot.slane %v2064, 1
      %v2080 = vsel %vm473, %v2077, %v2079
      %v2081 = vrot.slane %v2066, 1
      %v2082 = vsel %vm473, %v2079, %v2081
      %v2083 = vrot.slane %v2073, 1
      %v2084 = vsel %vm473, %v2081, %v2083
      %2085 = vrot.lane.b32.xlu0 %v2078, 32
      %v2086 = vpop.permute.xlu0 %2085
      %2087 = vrot.lane.b32.xlu0 %v2080, 32
      %v2088 = vpop.permute.xlu0 %2087
      %2089 = vrot.lane.b32.xlu0 %v2082, 32
      %v2090 = vpop.permute.xlu0 %2089
      %2091 = vrot.lane.b32.xlu0 %v2084, 32
      %v2092 = vpop.permute.xlu0 %2091
      %v2097 = vrot.slane %v2072, 2
      %v2098 = vrot.slane %v2062, 2
      %v2099 = vsel %vm543, %v2097, %v2098
      %v2100 = vrot.slane %v2064, 2
      %v2101 = vsel %vm543, %v2098, %v2100
      %v2102 = vrot.slane %v2066, 2
      %v2103 = vsel %vm543, %v2100, %v2102
      %v2104 = vrot.slane %v2073, 2
      %v2105 = vsel %vm543, %v2102, %v2104
      %2106 = vrot.lane.b32.xlu0 %v2099, 64
      %v2107 = vpop.permute.xlu0 %2106
      %2108 = vrot.lane.b32.xlu0 %v2101, 64
      %v2109 = vpop.permute.xlu0 %2108
      %2110 = vrot.lane.b32.xlu0 %v2103, 64
      %v2111 = vpop.permute.xlu0 %2110
      %2112 = vrot.lane.b32.xlu0 %v2105, 64
      %v2113 = vpop.permute.xlu0 %2112
      %v2118 = vrot.slane %v2072, 3
      %v2119 = vrot.slane %v2062, 3
      %v2120 = vsel %vm585, %v2118, %v2119
      %v2121 = vrot.slane %v2064, 3
      %v2122 = vsel %vm585, %v2119, %v2121
      %v2123 = vrot.slane %v2066, 3
      %v2124 = vsel %vm585, %v2121, %v2123
      %v2125 = vrot.slane %v2073, 3
      %v2126 = vsel %vm585, %v2123, %v2125
      %2127 = vrot.lane.b32.xlu0 %v2120, 96
      %v2128 = vpop.permute.xlu0 %2127
      %2129 = vrot.lane.b32.xlu0 %v2122, 96
      %v2130 = vpop.permute.xlu0 %2129
      %2131 = vrot.lane.b32.xlu0 %v2124, 96
      %v2132 = vpop.permute.xlu0 %2131
      %2133 = vrot.lane.b32.xlu0 %v2126, 96
      %v2134 = vpop.permute.xlu0 %2133
      %v2139 = vrot.slane %v2072, 4
      %v2140 = vrot.slane %v2062, 4
      %v2141 = vsel %vm627, %v2139, %v2140
      %v2142 = vrot.slane %v2064, 4
      %v2143 = vsel %vm627, %v2140, %v2142
      %v2144 = vrot.slane %v2066, 4
      %v2145 = vsel %vm627, %v2142, %v2144
      %v2146 = vrot.slane %v2073, 4
      %v2147 = vsel %vm627, %v2144, %v2146
      %v2148 = vsel %vm1003, %v2072, %v2086
      %v2149 = vsel %vm1003, %v2062, %v2088
      %v2150 = vsel %vm1003, %v2064, %v2090
      %v2151 = vsel %vm1003, %v2066, %v2092
      %v2152 = vsel %vm1039, %v2148, %v2107
      %v2153 = vsel %vm1039, %v2149, %v2109
      %v2154 = vsel %vm1039, %v2150, %v2111
      %v2155 = vsel %vm1039, %v2151, %v2113
      %v2156 = vsel %vm1075, %v2152, %v2128
      %v2157 = vsel %vm1075, %v2153, %v2130
      %v2158 = vsel %vm1075, %v2154, %v2132
      %v2159 = vsel %vm1075, %v2155, %v2134
      %v2161 = vlaneseq
      %v2162 = vshrl.u32 %v2161, 7
      %v2163 = vsub.s32 0, %v2162
      %v2164 = vrot.slane %v2055, %v2163
      %v2166 = vsel %vm1003, %v2141, 0
      %v2168 = vsel %vm1003, %v2143, 0
      %v2170 = vsel %vm1003, %v2145, 0
      %v2172 = vsel %vm1003, %v2147, 0
      %2174 = vmatprep.subr.mxu0 0.0
      %2175 = vmatpush1.msra.mxu0 %v2050
      %2176 = vmatprep.subr.mxu0 0.0
      %2177 = vmatpush1.msra.mxu0 %v2049
      %2178 = vmatprep.subr.mxu0 0.0
      %2179 = vmatpush1.msra.mxu0 %v2048
      %2180 = vmatprep.subr.mxu0 0.0
      %2181 = vmatpush1.msra.mxu0 %v2047
      %2182 = vmatprep.subr.mxu0 0.0
      %2183 = vmatpush1.msra.mxu0 %v2046
      %2184 = vmatprep.subr.mxu0 0.0
      %2185 = vmatpush1.msra.mxu0 %v2045
      %2186 = vmatprep.subr.mxu0 0.0
      %2187 = vmatpush1.msra.mxu0 %v2044
      %2188 = vmatprep.subr.mxu0 0.0
      %2189 = vmatpush1.msra.mxu0 %v2043
      %2190 = vmatprep.subr.mxu0 0.0
      %2191 = vmatpush1.msra.mxu0 %v2042
      %2192 = vmatprep.subr.mxu0 0.0
      %2193 = vmatpush1.msra.mxu0 %v2041
      %2194 = vmatprep.subr.mxu0 0.0
      %2195 = vmatpush1.msra.mxu0 %v2040
      %2196 = vmatprep.subr.mxu0 0.0
      %2197 = vmatpush1.msra.mxu0 %v2039
      %2198 = vmatprep.subr.mxu0 0.0
      %2199 = vmatpush1.msra.mxu0 %v2038
      %2200 = vmatprep.subr.mxu0 0.0
      %2201 = vmatpush1.msra.mxu0 %v2037
      %2202 = vmatprep.subr.mxu0 0.0
      %2203 = vmatpush1.msra.mxu0 %v2036
      %2204 = vmatprep.subr.mxu0 0.0
      %2205 = vmatpush1.msra.mxu0 %v2035
      %2206 = vmatprep.subr.mxu0 0.0
      %2207 = vmatpush2.msra.mxu0 0.0
      %2208 = vmatprep.subr.mxu0 0.0
      %2209 = vmatpush2.msra.mxu0 0.0
      %2210 = vmatprep.subr.mxu0 0.0
      %2211 = vmatpush2.msra.mxu0 0.0
      %2212 = vmatprep.subr.mxu0 0.0
      %2213 = vmatpush2.msra.mxu0 0.0
      %2214 = vmatprep.subr.mxu0 0.0
      %2215 = vmatpush2.msra.mxu0 0.0
      %2216 = vmatprep.subr.mxu0 0.0
      %2217 = vmatpush2.msra.mxu0 0.0
      %2218 = vmatprep.subr.mxu0 0.0
      %2219 = vmatpush2.msra.mxu0 0.0
      %2220 = vmatprep.subr.mxu0 0.0
      %2221 = vmatpush2.msra.mxu0 0.0
      %2222 = vmatprep.subr.mxu0 0.0
      %2223 = vmatpush2.msra.mxu0 0.0
      %2224 = vmatprep.subr.mxu0 0.0
      %2225 = vmatpush2.msra.mxu0 0.0
      %2226 = vmatprep.subr.mxu0 0.0
      %2227 = vmatpush2.msra.mxu0 0.0
      %2228 = vmatprep.subr.mxu0 0.0
      %2229 = vmatpush2.msra.mxu0 0.0
      %2230 = vmatprep.subr.mxu0 0.0
      %2231 = vmatpush2.msra.mxu0 %v2054
      %2232 = vmatprep.subr.mxu0 0.0
      %2233 = vmatpush2.msra.mxu0 %v2053
      %2234 = vmatprep.subr.mxu0 0.0
      %2235 = vmatpush2.msra.mxu0 %v2052
      %2236 = vmatprep.subr.mxu0 0.0
      %2237 = vmatpush2.msra.mxu0 %v2051
      %2238 = vmatprep.mubr.f32.mxu0 %v2166
      %2239 = vmatmul.mubr.f32.gmra.mxu0 %v2156
      %v2240 = vpop.f32.mrf.mxu0
      %v2241 = vadd.f32 %v2164, %v2240
      %v2242 = vpop.f32.mrf.mxu0
      %2243 = vmatprep.mubr.f32.mxu0 %v2168
      %2244 = vmatmul.mubr.f32.gmra.mxu0 %v2157
      %v2245 = vpop.f32.mrf.mxu0
      %v2246 = vadd.f32 %v2164, %v2245
      %v2247 = vpop.f32.mrf.mxu0
      %2248 = vmatprep.mubr.f32.mxu0 %v2170
      %2249 = vmatmul.mubr.f32.gmra.mxu0 %v2158
      %v2250 = vpop.f32.mrf.mxu0
      %v2251 = vadd.f32 %v2164, %v2250
      %v2252 = vpop.f32.mrf.mxu0
      %2253 = vmatprep.mubr.f32.mxu0 %v2172
      %2254 = vmatmul.mubr.f32.gmra.mxu0 %v2159
      %v2255 = vpop.f32.mrf.mxu0
      %v2256 = vadd.f32 %v2164, %v2255
      %v2257 = vpop.f32.mrf.mxu0
      %2258 = vdwg.mxu0
      %v2259 = vtanh.pop %v2241
      %v2260 = vtanh.pop %v2246
      %v2261 = vtanh.pop %v2251
      %v2262 = vtanh.pop %v2256
      %v2263 = vxor.u32 %v2241, 2147483648
      %v2264 = vxor.u32 %v2246, 2147483648
      %v2265 = vxor.u32 %v2251, 2147483648
      %v2266 = vxor.u32 %v2256, 2147483648
      %v2267 = vmul.f32 %v2263, 1.442695
      %v2268 = vpow.pop %v2267
      %v2269 = vmul.f32 %v2264, 1.442695
      %v2270 = vpow.pop %v2269
      %v2271 = vmul.f32 %v2265, 1.442695
      %v2272 = vpow.pop %v2271
      %v2273 = vmul.f32 %v2266, 1.442695
      %v2274 = vpow.pop %v2273
      %v2275 = vadd.f32 %v2268, 1.0
      %v2276 = vadd.f32 %v2270, 1.0
      %v2277 = vadd.f32 %v2272, 1.0
      %v2278 = vadd.f32 %v2274, 1.0
      %v2279 = vrcp.pop %v2275
      %v2280 = vmul.f32 1.0, %v2279
      %v2281 = vrcp.pop %v2276
      %v2282 = vmul.f32 1.0, %v2281
      %v2283 = vrcp.pop %v2277
      %v2284 = vmul.f32 1.0, %v2283
      %v2285 = vrcp.pop %v2278
      %v2286 = vmul.f32 1.0, %v2285
      %2291 = vrot.lane.b32.xlu0 %v2280, 96
      %v2292 = vpop.permute.xlu0 %2291
      %2293 = vrot.lane.b32.xlu0 %v2282, 96
      %v2294 = vpop.permute.xlu0 %2293
      %2295 = vrot.lane.b32.xlu0 %v2284, 96
      %v2296 = vpop.permute.xlu0 %2295
      %2297 = vrot.lane.b32.xlu0 %v2286, 96
      %v2298 = vpop.permute.xlu0 %2297
      %v2303 = vmul.f32 %v2259, %v2292
      %v2304 = vmul.f32 %v2260, %v2294
      %v2305 = vmul.f32 %v2261, %v2296
      %v2306 = vmul.f32 %v2262, %v2298
      %v2307 = vld [vmem:[%s7] sm:$0xff]
      %v2308 = vld [vmem:[%s7 + $0x8] sm:$0xff]
      %v2309 = vld [vmem:[%s7 + $0x10] sm:$0xff]
      %v2310 = vld [vmem:[%s7 + $0x18] sm:$0xff]
      %v2311 = vld [vmem:[%s7 + $0x20] sm:$0xff]
      %v2312 = vld [vmem:[%s7 + $0x28] sm:$0xff]
      %v2313 = vld [vmem:[%s7 + $0x30] sm:$0xff]
      %v2314 = vld [vmem:[%s7 + $0x38] sm:$0xff]
      %v2315 = vld [vmem:[%s7 + $0x40] sm:$0xff]
      %v2316 = vld [vmem:[%s7 + $0x48] sm:$0xff]
      %v2317 = vld [vmem:[%s7 + $0x50] sm:$0xff]
      %v2318 = vld [vmem:[%s7 + $0x58] sm:$0xff]
      %v2319 = vld [vmem:[%s8] sm:$0x1]
      %v2324 = vrot.slane %v2303, 7
      %v2325 = vrot.slane %v2304, 7
      %v2326 = vsel %vm753, %v2324, %v2325
      %v2327 = vrot.slane %v2305, 7
      %v2328 = vsel %vm753, %v2325, %v2327
      %v2329 = vrot.slane %v2306, 7
      %v2330 = vsel %vm753, %v2327, %v2329
      %v2336 = vsel %vm753, 0.0, %v2324
      %v2337 = vsel %vm753, %v2329, 0.0
      %v2340 = vrot.slane %v2336, 1
      %v2341 = vrot.slane %v2326, 1
      %v2342 = vsel %vm473, %v2340, %v2341
      %v2343 = vrot.slane %v2328, 1
      %v2344 = vsel %vm473, %v2341, %v2343
      %v2345 = vrot.slane %v2330, 1
      %v2346 = vsel %vm473, %v2343, %v2345
      %v2347 = vrot.slane %v2337, 1
      %v2348 = vsel %vm473, %v2345, %v2347
      %2349 = vrot.lane.b32.xlu0 %v2342, 32
      %v2350 = vpop.permute.xlu0 %2349
      %2351 = vrot.lane.b32.xlu0 %v2344, 32
      %v2352 = vpop.permute.xlu0 %2351
      %2353 = vrot.lane.b32.xlu0 %v2346, 32
      %v2354 = vpop.permute.xlu0 %2353
      %2355 = vrot.lane.b32.xlu0 %v2348, 32
      %v2356 = vpop.permute.xlu0 %2355
      %v2361 = vrot.slane %v2336, 2
      %v2362 = vrot.slane %v2326, 2
      %v2363 = vsel %vm543, %v2361, %v2362
      %v2364 = vrot.slane %v2328, 2
      %v2365 = vsel %vm543, %v2362, %v2364
      %v2366 = vrot.slane %v2330, 2
      %v2367 = vsel %vm543, %v2364, %v2366
      %v2368 = vrot.slane %v2337, 2
      %v2369 = vsel %vm543, %v2366, %v2368
      %2370 = vrot.lane.b32.xlu0 %v2363, 64
      %v2371 = vpop.permute.xlu0 %2370
      %2372 = vrot.lane.b32.xlu0 %v2365, 64
      %v2373 = vpop.permute.xlu0 %2372
      %2374 = vrot.lane.b32.xlu0 %v2367, 64
      %v2375 = vpop.permute.xlu0 %2374
      %2376 = vrot.lane.b32.xlu0 %v2369, 64
      %v2377 = vpop.permute.xlu0 %2376
      %v2382 = vsel %vm1003, %v2336, %v2350
      %v2383 = vsel %vm1003, %v2326, %v2352
      %v2384 = vsel %vm1003, %v2328, %v2354
      %v2385 = vsel %vm1003, %v2330, %v2356
      %v2386 = vsel %vm1039, %v2382, %v2371
      %v2387 = vsel %vm1039, %v2383, %v2373
      %v2388 = vsel %vm1039, %v2384, %v2375
      %v2389 = vsel %vm1039, %v2385, %v2377
      %v2391 = vlaneseq
      %v2392 = vshrl.u32 %v2391, 7
      %v2393 = vsub.s32 0, %v2392
      %v2394 = vrot.slane %v2319, %v2393
      %v2397 = vsel %vm1075, %v2386, 0
      %v2400 = vsel %vm1075, %v2387, 0
      %v2403 = vsel %vm1075, %v2388, 0
      %v2406 = vsel %vm1075, %v2389, 0
      %2408 = vmatprep.subr.mxu0 0.0
      %2409 = vmatpush1.msra.mxu0 0.0
      %2410 = vmatprep.subr.mxu0 0.0
      %2411 = vmatpush1.msra.mxu0 0.0
      %2412 = vmatprep.subr.mxu0 0.0
      %2413 = vmatpush1.msra.mxu0 0.0
      %2414 = vmatprep.subr.mxu0 0.0
      %2415 = vmatpush1.msra.mxu0 0.0
      %2416 = vmatprep.subr.mxu0 0.0
      %2417 = vmatpush1.msra.mxu0 %v2318
      %2418 = vmatprep.subr.mxu0 0.0
      %2419 = vmatpush1.msra.mxu0 %v2317
      %2420 = vmatprep.subr.mxu0 0.0
      %2421 = vmatpush1.msra.mxu0 %v2316
      %2422 = vmatprep.subr.mxu0 0.0
      %2423 = vmatpush1.msra.mxu0 %v2315
      %2424 = vmatprep.subr.mxu0 0.0
      %2425 = vmatpush1.msra.mxu0 %v2314
      %2426 = vmatprep.subr.mxu0 0.0
      %2427 = vmatpush1.msra.mxu0 %v2313
      %2428 = vmatprep.subr.mxu0 0.0
      %2429 = vmatpush1.msra.mxu0 %v2312
      %2430 = vmatprep.subr.mxu0 0.0
      %2431 = vmatpush1.msra.mxu0 %v2311
      %2432 = vmatprep.subr.mxu0 0.0
      %2433 = vmatpush1.msra.mxu0 %v2310
      %2434 = vmatprep.subr.mxu0 0.0
      %2435 = vmatpush1.msra.mxu0 %v2309
      %2436 = vmatprep.subr.mxu0 0.0
      %2437 = vmatpush1.msra.mxu0 %v2308
      %2438 = vmatprep.subr.mxu0 0.0
      %2439 = vmatpush1.msra.mxu0 %v2307
      %2440 = vmatprep.subr.mxu0 0.0
      %2441 = vmatpush2.msra.mxu0 0.0
      %2442 = vmatprep.subr.mxu0 0.0
      %2443 = vmatpush2.msra.mxu0 0.0
      %2444 = vmatprep.subr.mxu0 0.0
      %2445 = vmatpush2.msra.mxu0 0.0
      %2446 = vmatprep.subr.mxu0 0.0
      %2447 = vmatpush2.msra.mxu0 0.0
      %2448 = vmatprep.subr.mxu0 0.0
      %2449 = vmatpush2.msra.mxu0 0.0
      %2450 = vmatprep.subr.mxu0 0.0
      %2451 = vmatpush2.msra.mxu0 0.0
      %2452 = vmatprep.subr.mxu0 0.0
      %2453 = vmatpush2.msra.mxu0 0.0
      %2454 = vmatprep.subr.mxu0 0.0
      %2455 = vmatpush2.msra.mxu0 0.0
      %2456 = vmatprep.subr.mxu0 0.0
      %2457 = vmatpush2.msra.mxu0 0.0
      %2458 = vmatprep.subr.mxu0 0.0
      %2459 = vmatpush2.msra.mxu0 0.0
      %2460 = vmatprep.subr.mxu0 0.0
      %2461 = vmatpush2.msra.mxu0 0.0
      %2462 = vmatprep.subr.mxu0 0.0
      %2463 = vmatpush2.msra.mxu0 0.0
      %2464 = vmatprep.subr.mxu0 0.0
      %2465 = vmatpush2.msra.mxu0 0.0
      %2466 = vmatprep.subr.mxu0 0.0
      %2467 = vmatpush2.msra.mxu0 0.0
      %2468 = vmatprep.subr.mxu0 0.0
      %2469 = vmatpush2.msra.mxu0 0.0
      %2470 = vmatprep.subr.mxu0 0.0
      %2471 = vmatpush2.msra.mxu0 0.0
      %2472 = vmatprep.mubr.f32.mxu0 0.0
      %2473 = vmatmul.mubr.f32.gmra.mxu0 %v2397
      %v2474 = vpop.f32.mrf.mxu0
      %v2475 = vadd.f32 %v2394, %v2474
      %v2476 = vpop.f32.mrf.mxu0
      %2477 = vmatprep.mubr.f32.mxu0 0.0
      %2478 = vmatmul.mubr.f32.gmra.mxu0 %v2400
      %v2479 = vpop.f32.mrf.mxu0
      %v2480 = vadd.f32 %v2394, %v2479
      %v2481 = vpop.f32.mrf.mxu0
      %2482 = vmatprep.mubr.f32.mxu0 0.0
      %2483 = vmatmul.mubr.f32.gmra.mxu0 %v2403
      %v2484 = vpop.f32.mrf.mxu0
      %v2485 = vadd.f32 %v2394, %v2484
      %v2486 = vpop.f32.mrf.mxu0
      %2487 = vmatprep.mubr.f32.mxu0 0.0
      %2488 = vmatmul.mubr.f32.gmra.mxu0 %v2406
      %v2489 = vpop.f32.mrf.mxu0
      %v2490 = vadd.f32 %v2394, %v2489
      %v2491 = vpop.f32.mrf.mxu0
      %2492 = vdwg.mxu0
      %v2493 = vsel %vm1003, %v2475, 0.0
      %v2494 = vsel %vm1003, %v2480, 0.0
      %v2495 = vadd.f32 %v2493, %v2494
      %v2496 = vsel %vm1003, %v2485, 0.0
      %v2497 = vadd.f32 %v2495, %v2496
      %v2498 = vsel %vm1003, %v2490, 0.0
      %v2499 = vadd.f32 %v2497, %v2498
      %v2500 = vrot.slane %v2499, 4
      %v2501 = vadd.f32 %v2499, %v2500
      %v2502 = vrot.slane %v2501, 2
      %v2503 = vadd.f32 %v2501, %v2502
      %v2504 = vrot.slane %v2503, 1
      %v2505 = vadd.f32 %v2503, %v2504
      %v2506 = vmul.f32 %v2505, 0.03125
      %v2507 = vmul.f32 %v2475, %v2475
      %v2508 = vmul.f32 %v2480, %v2480
      %v2509 = vmul.f32 %v2485, %v2485
      %v2510 = vmul.f32 %v2490, %v2490
      %v2511 = vsel %vm1003, %v2507, 0.0
      %v2512 = vsel %vm1003, %v2508, 0.0
      %v2513 = vadd.f32 %v2511, %v2512
      %v2514 = vsel %vm1003, %v2509, 0.0
      %v2515 = vadd.f32 %v2513, %v2514
      %v2516 = vsel %vm1003, %v2510, 0.0
      %v2517 = vadd.f32 %v2515, %v2516
      %v2518 = vrot.slane %v2517, 4
      %v2519 = vadd.f32 %v2517, %v2518
      %v2520 = vrot.slane %v2519, 2
      %v2521 = vadd.f32 %v2519, %v2520
      %v2522 = vrot.slane %v2521, 1
      %v2523 = vadd.f32 %v2521, %v2522
      %v2524 = vmul.f32 %v2523, 0.03125
      %v2525 = vmul.f32 %v2506, %v2506
      %v2526 = vsub.f32 %v2524, %v2525
      %v2527 = vsub.f32 %v2475, %v2506
      %v2528 = vsub.f32 %v2480, %v2506
      %v2529 = vsub.f32 %v2485, %v2506
      %v2530 = vsub.f32 %v2490, %v2506
      %v2531 = vadd.f32 %v2526, 1e-05
      %v2532 = vrsqrt.pop %v2531
      %v2533 = vmul.f32 %v2527, %v2532
      %v2534 = vmul.f32 %v2528, %v2532
      %v2535 = vmul.f32 %v2529, %v2532
      %v2536 = vmul.f32 %v2530, %v2532
      %v2537 = vadd.f32 %v2031, %v2533
      %v2538 = vadd.f32 %v2032, %v2534
      %v2539 = vadd.f32 %v2033, %v2535
      %v2540 = vadd.f32 %v2034, %v2536
      %v2541 = vadd.f32 %v2533, 0.0
      %v2542 = vadd.f32 %v2534, 0.0
      %v2543 = vadd.f32 %v2535, 0.0
      %v2544 = vadd.f32 %v2536, 0.0
      %s2545 = scalar_lea.vmem %s5, 160
      %v2546 = vld [vmem:[%s2545] sm:$0xff]
      %v2547 = vld [vmem:[%s2545 + $0x8] sm:$0xff]
      %v2548 = vld [vmem:[%s2545 + $0x10] sm:$0xff]
      %v2549 = vld [vmem:[%s2545 + $0x18] sm:$0xff]
      %v2550 = vld [vmem:[%s2545 + $0x20] sm:$0xff]
      %v2551 = vld [vmem:[%s2545 + $0x28] sm:$0xff]
      %v2552 = vld [vmem:[%s2545 + $0x30] sm:$0xff]
      %v2553 = vld [vmem:[%s2545 + $0x38] sm:$0xff]
      %v2554 = vld [vmem:[%s2545 + $0x40] sm:$0xff]
      %v2555 = vld [vmem:[%s2545 + $0x48] sm:$0xff]
      %v2556 = vld [vmem:[%s2545 + $0x50] sm:$0xff]
      %v2557 = vld [vmem:[%s2545 + $0x58] sm:$0xff]
      %v2558 = vld [vmem:[%s2545 + $0x60] sm:$0xff]
      %v2559 = vld [vmem:[%s2545 + $0x68] sm:$0xff]
      %v2560 = vld [vmem:[%s2545 + $0x70] sm:$0xff]
      %v2561 = vld [vmem:[%s2545 + $0x78] sm:$0xff]
      %v2562 = vld [vmem:[%s2545 + $0x80] sm:$0xff]
      %v2563 = vld [vmem:[%s2545 + $0x88] sm:$0xff]
      %v2564 = vld [vmem:[%s2545 + $0x90] sm:$0xff]
      %v2565 = vld [vmem:[%s2545 + $0x98] sm:$0xff]
      %s2566 = scalar_lea.vmem %s6, 1
      %v2567 = vld [vmem:[%s2566] sm:$0x1]
      %v2572 = vrot.slane %v2537, 4
      %v2573 = vrot.slane %v2538, 4
      %v2574 = vsel %vm627, %v2572, %v2573
      %v2575 = vrot.slane %v2539, 4
      %v2576 = vsel %vm627, %v2573, %v2575
      %v2577 = vrot.slane %v2540, 4
      %v2578 = vsel %vm627, %v2575, %v2577
      %v2584 = vsel %vm627, 0.0, %v2572
      %v2585 = vsel %vm627, %v2577, 0.0
      %v2588 = vrot.slane %v2584, 2
      %v2589 = vrot.slane %v2574, 2
      %v2590 = vsel %vm543, %v2588, %v2589
      %v2591 = vrot.slane %v2576, 2
      %v2592 = vsel %vm543, %v2589, %v2591
      %v2593 = vrot.slane %v2578, 2
      %v2594 = vsel %vm543, %v2591, %v2593
      %v2595 = vrot.slane %v2585, 2
      %v2596 = vsel %vm543, %v2593, %v2595
      %2597 = vrot.lane.b32.xlu0 %v2590, 32
      %v2598 = vpop.permute.xlu0 %2597
      %2599 = vrot.lane.b32.xlu0 %v2592, 32
      %v2600 = vpop.permute.xlu0 %2599
      %2601 = vrot.lane.b32.xlu0 %v2594, 32
      %v2602 = vpop.permute.xlu0 %2601
      %2603 = vrot.lane.b32.xlu0 %v2596, 32
      %v2604 = vpop.permute.xlu0 %2603
      %v2609 = vrot.slane %v2584, 4
      %v2610 = vrot.slane %v2574, 4
      %v2611 = vsel %vm627, %v2609, %v2610
      %v2612 = vrot.slane %v2576, 4
      %v2613 = vsel %vm627, %v2610, %v2612
      %v2614 = vrot.slane %v2578, 4
      %v2615 = vsel %vm627, %v2612, %v2614
      %v2616 = vrot.slane %v2585, 4
      %v2617 = vsel %vm627, %v2614, %v2616
      %2618 = vrot.lane.b32.xlu0 %v2611, 64
      %v2619 = vpop.permute.xlu0 %2618
      %2620 = vrot.lane.b32.xlu0 %v2613, 64
      %v2621 = vpop.permute.xlu0 %2620
      %2622 = vrot.lane.b32.xlu0 %v2615, 64
      %v2623 = vpop.permute.xlu0 %2622
      %2624 = vrot.lane.b32.xlu0 %v2617, 64
      %v2625 = vpop.permute.xlu0 %2624
      %v2630 = vrot.slane %v2584, 6
      %v2631 = vrot.slane %v2574, 6
      %v2632 = vsel %vm711, %v2630, %v2631
      %v2633 = vrot.slane %v2576, 6
      %v2634 = vsel %vm711, %v2631, %v2633
      %v2635 = vrot.slane %v2578, 6
      %v2636 = vsel %vm711, %v2633, %v2635
      %v2637 = vrot.slane %v2585, 6
      %v2638 = vsel %vm711, %v2635, %v2637
      %2639 = vrot.lane.b32.xlu0 %v2632, 96
      %v2640 = vpop.permute.xlu0 %2639
      %2641 = vrot.lane.b32.xlu0 %v2634, 96
      %v2642 = vpop.permute.xlu0 %2641
      %2643 = vrot.lane.b32.xlu0 %v2636, 96
      %v2644 = vpop.permute.xlu0 %2643
      %2645 = vrot.lane.b32.xlu0 %v2638, 96
      %v2646 = vpop.permute.xlu0 %2645
      %v2651 = vsel %vm1003, %v2584, %v2598
      %v2652 = vsel %vm1003, %v2574, %v2600
      %v2653 = vsel %vm1003, %v2576, %v2602
      %v2654 = vsel %vm1003, %v2578, %v2604
      %v2655 = vsel %vm1039, %v2651, %v2619
      %v2656 = vsel %vm1039, %v2652, %v2621
      %v2657 = vsel %vm1039, %v2653, %v2623
      %v2658 = vsel %vm1039, %v2654, %v2625
      %v2659 = vsel %vm1075, %v2655, %v2640
      %v2660 = vsel %vm1075, %v2656, %v2642
      %v2661 = vsel %vm1075, %v2657, %v2644
      %v2662 = vsel %vm1075, %v2658, %v2646
      %v2664 = vlaneseq
      %v2665 = vshrl.u32 %v2664, 7
      %v2666 = vsub.s32 0, %v2665
      %v2667 = vrot.slane %v2567, %v2666
      %v2669 = vsel %vm1003, %v2574, 0
      %v2671 = vsel %vm1003, %v2576, 0
      %v2673 = vsel %vm1003, %v2578, 0
      %v2675 = vsel %vm1003, %v2585, 0
      %2677 = vmatprep.subr.mxu0 0.0
      %2678 = vmatpush1.msra.mxu0 %v2561
      %2679 = vmatprep.subr.mxu0 0.0
      %2680 = vmatpush1.msra.mxu0 %v2560
      %2681 = vmatprep.subr.mxu0 0.0
      %2682 = vmatpush1.msra.mxu0 %v2559
      %2683 = vmatprep.subr.mxu0 0.0
      %2684 = vmatpush1.msra.mxu0 %v2558
      %2685 = vmatprep.subr.mxu0 0.0
      %2686 = vmatpush1.msra.mxu0 %v2557
      %2687 = vmatprep.subr.mxu0 0.0
      %2688 = vmatpush1.msra.mxu0 %v2556
      %2689 = vmatprep.subr.mxu0 0.0
      %2690 = vmatpush1.msra.mxu0 %v2555
      %2691 = vmatprep.subr.mxu0 0.0
      %2692 = vmatpush1.msra.mxu0 %v2554
      %2693 = vmatprep.subr.mxu0 0.0
      %2694 = vmatpush1.msra.mxu0 %v2553
      %2695 = vmatprep.subr.mxu0 0.0
      %2696 = vmatpush1.msra.mxu0 %v2552
      %2697 = vmatprep.subr.mxu0 0.0
      %2698 = vmatpush1.msra.mxu0 %v2551
      %2699 = vmatprep.subr.mxu0 0.0
      %2700 = vmatpush1.msra.mxu0 %v2550
      %2701 = vmatprep.subr.mxu0 0.0
      %2702 = vmatpush1.msra.mxu0 %v2549
      %2703 = vmatprep.subr.mxu0 0.0
      %2704 = vmatpush1.msra.mxu0 %v2548
      %2705 = vmatprep.subr.mxu0 0.0
      %2706 = vmatpush1.msra.mxu0 %v2547
      %2707 = vmatprep.subr.mxu0 0.0
      %2708 = vmatpush1.msra.mxu0 %v2546
      %2709 = vmatprep.subr.mxu0 0.0
      %2710 = vmatpush2.msra.mxu0 0.0
      %2711 = vmatprep.subr.mxu0 0.0
      %2712 = vmatpush2.msra.mxu0 0.0
      %2713 = vmatprep.subr.mxu0 0.0
      %2714 = vmatpush2.msra.mxu0 0.0
      %2715 = vmatprep.subr.mxu0 0.0
      %2716 = vmatpush2.msra.mxu0 0.0
      %2717 = vmatprep.subr.mxu0 0.0
      %2718 = vmatpush2.msra.mxu0 0.0
      %2719 = vmatprep.subr.mxu0 0.0
      %2720 = vmatpush2.msra.mxu0 0.0
      %2721 = vmatprep.subr.mxu0 0.0
      %2722 = vmatpush2.msra.mxu0 0.0
      %2723 = vmatprep.subr.mxu0 0.0
      %2724 = vmatpush2.msra.mxu0 0.0
      %2725 = vmatprep.subr.mxu0 0.0
      %2726 = vmatpush2.msra.mxu0 0.0
      %2727 = vmatprep.subr.mxu0 0.0
      %2728 = vmatpush2.msra.mxu0 0.0
      %2729 = vmatprep.subr.mxu0 0.0
      %2730 = vmatpush2.msra.mxu0 0.0
      %2731 = vmatprep.subr.mxu0 0.0
      %2732 = vmatpush2.msra.mxu0 0.0
      %2733 = vmatprep.subr.mxu0 0.0
      %2734 = vmatpush2.msra.mxu0 %v2565
      %2735 = vmatprep.subr.mxu0 0.0
      %2736 = vmatpush2.msra.mxu0 %v2564
      %2737 = vmatprep.subr.mxu0 0.0
      %2738 = vmatpush2.msra.mxu0 %v2563
      %2739 = vmatprep.subr.mxu0 0.0
      %2740 = vmatpush2.msra.mxu0 %v2562
      %2741 = vmatprep.mubr.f32.mxu0 %v2669
      %2742 = vmatmul.mubr.f32.gmra.mxu0 %v2659
      %v2743 = vpop.f32.mrf.mxu0
      %v2744 = vadd.f32 %v2667, %v2743
      %v2745 = vpop.f32.mrf.mxu0
      %2746 = vmatprep.mubr.f32.mxu0 %v2671
      %2747 = vmatmul.mubr.f32.gmra.mxu0 %v2660
      %v2748 = vpop.f32.mrf.mxu0
      %v2749 = vadd.f32 %v2667, %v2748
      %v2750 = vpop.f32.mrf.mxu0
      %2751 = vmatprep.mubr.f32.mxu0 %v2673
      %2752 = vmatmul.mubr.f32.gmra.mxu0 %v2661
      %v2753 = vpop.f32.mrf.mxu0
      %v2754 = vadd.f32 %v2667, %v2753
      %v2755 = vpop.f32.mrf.mxu0
      %2756 = vmatprep.mubr.f32.mxu0 %v2675
      %2757 = vmatmul.mubr.f32.gmra.mxu0 %v2662
      %v2758 = vpop.f32.mrf.mxu0
      %v2759 = vadd.f32 %v2667, %v2758
      %v2760 = vpop.f32.mrf.mxu0
      %2761 = vdwg.mxu0
      %v2762 = vtanh.pop %v2744
      %v2763 = vtanh.pop %v2749
      %v2764 = vtanh.pop %v2754
      %v2765 = vtanh.pop %v2759
      %v2766 = vxor.u32 %v2744, 2147483648
      %v2767 = vxor.u32 %v2749, 2147483648
      %v2768 = vxor.u32 %v2754, 2147483648
      %v2769 = vxor.u32 %v2759, 2147483648
      %v2770 = vmul.f32 %v2766, 1.442695
      %v2771 = vpow.pop %v2770
      %v2772 = vmul.f32 %v2767, 1.442695
      %v2773 = vpow.pop %v2772
      %v2774 = vmul.f32 %v2768, 1.442695
      %v2775 = vpow.pop %v2774
      %v2776 = vmul.f32 %v2769, 1.442695
      %v2777 = vpow.pop %v2776
      %v2778 = vadd.f32 %v2771, 1.0
      %v2779 = vadd.f32 %v2773, 1.0
      %v2780 = vadd.f32 %v2775, 1.0
      %v2781 = vadd.f32 %v2777, 1.0
      %v2782 = vrcp.pop %v2778
      %v2783 = vmul.f32 1.0, %v2782
      %v2784 = vrcp.pop %v2779
      %v2785 = vmul.f32 1.0, %v2784
      %v2786 = vrcp.pop %v2780
      %v2787 = vmul.f32 1.0, %v2786
      %v2788 = vrcp.pop %v2781
      %v2789 = vmul.f32 1.0, %v2788
      %2794 = vrot.lane.b32.xlu0 %v2783, 96
      %v2795 = vpop.permute.xlu0 %2794
      %2796 = vrot.lane.b32.xlu0 %v2785, 96
      %v2797 = vpop.permute.xlu0 %2796
      %2798 = vrot.lane.b32.xlu0 %v2787, 96
      %v2799 = vpop.permute.xlu0 %2798
      %2800 = vrot.lane.b32.xlu0 %v2789, 96
      %v2801 = vpop.permute.xlu0 %2800
      %v2806 = vmul.f32 %v2762, %v2795
      %v2807 = vmul.f32 %v2763, %v2797
      %v2808 = vmul.f32 %v2764, %v2799
      %v2809 = vmul.f32 %v2765, %v2801
      %s2810 = scalar_lea.vmem %s7, 96
      %v2811 = vld [vmem:[%s2810] sm:$0xff]
      %v2812 = vld [vmem:[%s2810 + $0x8] sm:$0xff]
      %v2813 = vld [vmem:[%s2810 + $0x10] sm:$0xff]
      %v2814 = vld [vmem:[%s2810 + $0x18] sm:$0xff]
      %v2815 = vld [vmem:[%s2810 + $0x20] sm:$0xff]
      %v2816 = vld [vmem:[%s2810 + $0x28] sm:$0xff]
      %v2817 = vld [vmem:[%s2810 + $0x30] sm:$0xff]
      %v2818 = vld [vmem:[%s2810 + $0x38] sm:$0xff]
      %v2819 = vld [vmem:[%s2810 + $0x40] sm:$0xff]
      %v2820 = vld [vmem:[%s2810 + $0x48] sm:$0xff]
      %v2821 = vld [vmem:[%s2810 + $0x50] sm:$0xff]
      %v2822 = vld [vmem:[%s2810 + $0x58] sm:$0xff]
      %s2823 = scalar_lea.vmem %s8, 1
      %v2824 = vld [vmem:[%s2823] sm:$0x1]
      %v2829 = vrot.slane %v2806, 7
      %v2830 = vrot.slane %v2807, 7
      %v2831 = vsel %vm753, %v2829, %v2830
      %v2832 = vrot.slane %v2808, 7
      %v2833 = vsel %vm753, %v2830, %v2832
      %v2834 = vrot.slane %v2809, 7
      %v2835 = vsel %vm753, %v2832, %v2834
      %v2841 = vsel %vm753, 0.0, %v2829
      %v2842 = vsel %vm753, %v2834, 0.0
      %v2845 = vrot.slane %v2841, 1
      %v2846 = vrot.slane %v2831, 1
      %v2847 = vsel %vm473, %v2845, %v2846
      %v2848 = vrot.slane %v2833, 1
      %v2849 = vsel %vm473, %v2846, %v2848
      %v2850 = vrot.slane %v2835, 1
      %v2851 = vsel %vm473, %v2848, %v2850
      %v2852 = vrot.slane %v2842, 1
      %v2853 = vsel %vm473, %v2850, %v2852
      %2854 = vrot.lane.b32.xlu0 %v2847, 32
      %v2855 = vpop.permute.xlu0 %2854
      %2856 = vrot.lane.b32.xlu0 %v2849, 32
      %v2857 = vpop.permute.xlu0 %2856
      %2858 = vrot.lane.b32.xlu0 %v2851, 32
      %v2859 = vpop.permute.xlu0 %2858
      %2860 = vrot.lane.b32.xlu0 %v2853, 32
      %v2861 = vpop.permute.xlu0 %2860
      %v2866 = vrot.slane %v2841, 2
      %v2867 = vrot.slane %v2831, 2
      %v2868 = vsel %vm543, %v2866, %v2867
      %v2869 = vrot.slane %v2833, 2
      %v2870 = vsel %vm543, %v2867, %v2869
      %v2871 = vrot.slane %v2835, 2
      %v2872 = vsel %vm543, %v2869, %v2871
      %v2873 = vrot.slane %v2842, 2
      %v2874 = vsel %vm543, %v2871, %v2873
      %2875 = vrot.lane.b32.xlu0 %v2868, 64
      %v2876 = vpop.permute.xlu0 %2875
      %2877 = vrot.lane.b32.xlu0 %v2870, 64
      %v2878 = vpop.permute.xlu0 %2877
      %2879 = vrot.lane.b32.xlu0 %v2872, 64
      %v2880 = vpop.permute.xlu0 %2879
      %2881 = vrot.lane.b32.xlu0 %v2874, 64
      %v2882 = vpop.permute.xlu0 %2881
      %v2887 = vsel %vm1003, %v2841, %v2855
      %v2888 = vsel %vm1003, %v2831, %v2857
      %v2889 = vsel %vm1003, %v2833, %v2859
      %v2890 = vsel %vm1003, %v2835, %v2861
      %v2891 = vsel %vm1039, %v2887, %v2876
      %v2892 = vsel %vm1039, %v2888, %v2878
      %v2893 = vsel %vm1039, %v2889, %v2880
      %v2894 = vsel %vm1039, %v2890, %v2882
      %v2896 = vlaneseq
      %v2897 = vshrl.u32 %v2896, 7
      %v2898 = vsub.s32 0, %v2897
      %v2899 = vrot.slane %v2824, %v2898
      %v2902 = vsel %vm1075, %v2891, 0
      %v2905 = vsel %vm1075, %v2892, 0
      %v2908 = vsel %vm1075, %v2893, 0
      %v2911 = vsel %vm1075, %v2894, 0
      %2913 = vmatprep.subr.mxu0 0.0
      %2914 = vmatpush1.msra.mxu0 0.0
      %2915 = vmatprep.subr.mxu0 0.0
      %2916 = vmatpush1.msra.mxu0 0.0
      %2917 = vmatprep.subr.mxu0 0.0
      %2918 = vmatpush1.msra.mxu0 0.0
      %2919 = vmatprep.subr.mxu0 0.0
      %2920 = vmatpush1.msra.mxu0 0.0
      %2921 = vmatprep.subr.mxu0 0.0
      %2922 = vmatpush1.msra.mxu0 %v2822
      %2923 = vmatprep.subr.mxu0 0.0
      %2924 = vmatpush1.msra.mxu0 %v2821
      %2925 = vmatprep.subr.mxu0 0.0
      %2926 = vmatpush1.msra.mxu0 %v2820
      %2927 = vmatprep.subr.mxu0 0.0
      %2928 = vmatpush1.msra.mxu0 %v2819
      %2929 = vmatprep.subr.mxu0 0.0
      %2930 = vmatpush1.msra.mxu0 %v2818
      %2931 = vmatprep.subr.mxu0 0.0
      %2932 = vmatpush1.msra.mxu0 %v2817
      %2933 = vmatprep.subr.mxu0 0.0
      %2934 = vmatpush1.msra.mxu0 %v2816
      %2935 = vmatprep.subr.mxu0 0.0
      %2936 = vmatpush1.msra.mxu0 %v2815
      %2937 = vmatprep.subr.mxu0 0.0
      %2938 = vmatpush1.msra.mxu0 %v2814
      %2939 = vmatprep.subr.mxu0 0.0
      %2940 = vmatpush1.msra.mxu0 %v2813
      %2941 = vmatprep.subr.mxu0 0.0
      %2942 = vmatpush1.msra.mxu0 %v2812
      %2943 = vmatprep.subr.mxu0 0.0
      %2944 = vmatpush1.msra.mxu0 %v2811
      %2945 = vmatprep.subr.mxu0 0.0
      %2946 = vmatpush2.msra.mxu0 0.0
      %2947 = vmatprep.subr.mxu0 0.0
      %2948 = vmatpush2.msra.mxu0 0.0
      %2949 = vmatprep.subr.mxu0 0.0
      %2950 = vmatpush2.msra.mxu0 0.0
      %2951 = vmatprep.subr.mxu0 0.0
      %2952 = vmatpush2.msra.mxu0 0.0
      %2953 = vmatprep.subr.mxu0 0.0
      %2954 = vmatpush2.msra.mxu0 0.0
      %2955 = vmatprep.subr.mxu0 0.0
      %2956 = vmatpush2.msra.mxu0 0.0
      %2957 = vmatprep.subr.mxu0 0.0
      %2958 = vmatpush2.msra.mxu0 0.0
      %2959 = vmatprep.subr.mxu0 0.0
      %2960 = vmatpush2.msra.mxu0 0.0
      %2961 = vmatprep.subr.mxu0 0.0
      %2962 = vmatpush2.msra.mxu0 0.0
      %2963 = vmatprep.subr.mxu0 0.0
      %2964 = vmatpush2.msra.mxu0 0.0
      %2965 = vmatprep.subr.mxu0 0.0
      %2966 = vmatpush2.msra.mxu0 0.0
      %2967 = vmatprep.subr.mxu0 0.0
      %2968 = vmatpush2.msra.mxu0 0.0
      %2969 = vmatprep.subr.mxu0 0.0
      %2970 = vmatpush2.msra.mxu0 0.0
      %2971 = vmatprep.subr.mxu0 0.0
      %2972 = vmatpush2.msra.mxu0 0.0
      %2973 = vmatprep.subr.mxu0 0.0
      %2974 = vmatpush2.msra.mxu0 0.0
      %2975 = vmatprep.subr.mxu0 0.0
      %2976 = vmatpush2.msra.mxu0 0.0
      %2977 = vmatprep.mubr.f32.mxu0 0.0
      %2978 = vmatmul.mubr.f32.gmra.mxu0 %v2902
      %v2979 = vpop.f32.mrf.mxu0
      %v2980 = vadd.f32 %v2899, %v2979
      %v2981 = vpop.f32.mrf.mxu0
      %2982 = vmatprep.mubr.f32.mxu0 0.0
      %2983 = vmatmul.mubr.f32.gmra.mxu0 %v2905
      %v2984 = vpop.f32.mrf.mxu0
      %v2985 = vadd.f32 %v2899, %v2984
      %v2986 = vpop.f32.mrf.mxu0
      %2987 = vmatprep.mubr.f32.mxu0 0.0
      %2988 = vmatmul.mubr.f32.gmra.mxu0 %v2908
      %v2989 = vpop.f32.mrf.mxu0
      %v2990 = vadd.f32 %v2899, %v2989
      %v2991 = vpop.f32.mrf.mxu0
      %2992 = vmatprep.mubr.f32.mxu0 0.0
      %2993 = vmatmul.mubr.f32.gmra.mxu0 %v2911
      %v2994 = vpop.f32.mrf.mxu0
      %v2995 = vadd.f32 %v2899, %v2994
      %v2996 = vpop.f32.mrf.mxu0
      %2997 = vdwg.mxu0
      %v2998 = vsel %vm1003, %v2980, 0.0
      %v2999 = vsel %vm1003, %v2985, 0.0
      %v3000 = vadd.f32 %v2998, %v2999
      %v3001 = vsel %vm1003, %v2990, 0.0
      %v3002 = vadd.f32 %v3000, %v3001
      %v3003 = vsel %vm1003, %v2995, 0.0
      %v3004 = vadd.f32 %v3002, %v3003
      %v3005 = vrot.slane %v3004, 4
      %v3006 = vadd.f32 %v3004, %v3005
      %v3007 = vrot.slane %v3006, 2
      %v3008 = vadd.f32 %v3006, %v3007
      %v3009 = vrot.slane %v3008, 1
      %v3010 = vadd.f32 %v3008, %v3009
      %v3011 = vmul.f32 %v3010, 0.03125
      %v3012 = vmul.f32 %v2980, %v2980
      %v3013 = vmul.f32 %v2985, %v2985
      %v3014 = vmul.f32 %v2990, %v2990
      %v3015 = vmul.f32 %v2995, %v2995
      %v3016 = vsel %vm1003, %v3012, 0.0
      %v3017 = vsel %vm1003, %v3013, 0.0
      %v3018 = vadd.f32 %v3016, %v3017
      %v3019 = vsel %vm1003, %v3014, 0.0
      %v3020 = vadd.f32 %v3018, %v3019
      %v3021 = vsel %vm1003, %v3015, 0.0
      %v3022 = vadd.f32 %v3020, %v3021
      %v3023 = vrot.slane %v3022, 4
      %v3024 = vadd.f32 %v3022, %v3023
      %v3025 = vrot.slane %v3024, 2
      %v3026 = vadd.f32 %v3024, %v3025
      %v3027 = vrot.slane %v3026, 1
      %v3028 = vadd.f32 %v3026, %v3027
      %v3029 = vmul.f32 %v3028, 0.03125
      %v3030 = vmul.f32 %v3011, %v3011
      %v3031 = vsub.f32 %v3029, %v3030
      %v3032 = vsub.f32 %v2980, %v3011
      %v3033 = vsub.f32 %v2985, %v3011
      %v3034 = vsub.f32 %v2990, %v3011
      %v3035 = vsub.f32 %v2995, %v3011
      %v3036 = vadd.f32 %v3031, 1e-05
      %v3037 = vrsqrt.pop %v3036
      %v3038 = vmul.f32 %v3032, %v3037
      %v3039 = vmul.f32 %v3033, %v3037
      %v3040 = vmul.f32 %v3034, %v3037
      %v3041 = vmul.f32 %v3035, %v3037
      %v3042 = vadd.f32 %v2537, %v3038
      %v3043 = vadd.f32 %v2538, %v3039
      %v3044 = vadd.f32 %v2539, %v3040
      %v3045 = vadd.f32 %v2540, %v3041
      %v3046 = vadd.f32 %v2541, %v3038
      %v3047 = vadd.f32 %v2542, %v3039
      %v3048 = vadd.f32 %v2543, %v3040
      %v3049 = vadd.f32 %v2544, %v3041
      %s3050 = scalar_lea.vmem %s5, 320
      %v3051 = vld [vmem:[%s3050] sm:$0xff]
      %v3052 = vld [vmem:[%s3050 + $0x8] sm:$0xff]
      %v3053 = vld [vmem:[%s3050 + $0x10] sm:$0xff]
      %v3054 = vld [vmem:[%s3050 + $0x18] sm:$0xff]
      %v3055 = vld [vmem:[%s3050 + $0x20] sm:$0xff]
      %v3056 = vld [vmem:[%s3050 + $0x28] sm:$0xff]
      %v3057 = vld [vmem:[%s3050 + $0x30] sm:$0xff]
      %v3058 = vld [vmem:[%s3050 + $0x38] sm:$0xff]
      %v3059 = vld [vmem:[%s3050 + $0x40] sm:$0xff]
      %v3060 = vld [vmem:[%s3050 + $0x48] sm:$0xff]
      %v3061 = vld [vmem:[%s3050 + $0x50] sm:$0xff]
      %v3062 = vld [vmem:[%s3050 + $0x58] sm:$0xff]
      %v3063 = vld [vmem:[%s3050 + $0x60] sm:$0xff]
      %v3064 = vld [vmem:[%s3050 + $0x68] sm:$0xff]
      %v3065 = vld [vmem:[%s3050 + $0x70] sm:$0xff]
      %v3066 = vld [vmem:[%s3050 + $0x78] sm:$0xff]
      %v3067 = vld [vmem:[%s3050 + $0x80] sm:$0xff]
      %v3068 = vld [vmem:[%s3050 + $0x88] sm:$0xff]
      %v3069 = vld [vmem:[%s3050 + $0x90] sm:$0xff]
      %v3070 = vld [vmem:[%s3050 + $0x98] sm:$0xff]
      %s3071 = scalar_lea.vmem %s6, 2
      %v3072 = vld [vmem:[%s3071] sm:$0x1]
      %v3077 = vrot.slane %v3042, 4
      %v3078 = vsel %vm627, %v898, %v3077
      %v3079 = vrot.slane %v3043, 4
      %v3080 = vsel %vm627, %v3077, %v3079
      %v3081 = vrot.slane %v3044, 4
      %v3082 = vsel %vm627, %v3079, %v3081
      %v3083 = vrot.slane %v3045, 4
      %v3084 = vsel %vm627, %v3081, %v3083
      %3085 = vrot.lane.b32.xlu0 %v3078, 32
      %v3086 = vpop.permute.xlu0 %3085
      %3087 = vrot.lane.b32.xlu0 %v3080, 32
      %v3088 = vpop.permute.xlu0 %3087
      %3089 = vrot.lane.b32.xlu0 %v3082, 32
      %v3090 = vpop.permute.xlu0 %3089
      %3091 = vrot.lane.b32.xlu0 %v3084, 32
      %v3092 = vpop.permute.xlu0 %3091
      %3097 = vrot.lane.b32.xlu0 %v3042, 64
      %v3098 = vpop.permute.xlu0 %3097
      %3099 = vrot.lane.b32.xlu0 %v3043, 64
      %v3100 = vpop.permute.xlu0 %3099
      %3101 = vrot.lane.b32.xlu0 %v3044, 64
      %v3102 = vpop.permute.xlu0 %3101
      %3103 = vrot.lane.b32.xlu0 %v3045, 64
      %v3104 = vpop.permute.xlu0 %3103
      %v3109 = vsel %vm627, %v3083, %v898
      %3110 = vrot.lane.b32.xlu0 %v3080, 96
      %v3111 = vpop.permute.xlu0 %3110
      %3112 = vrot.lane.b32.xlu0 %v3082, 96
      %v3113 = vpop.permute.xlu0 %3112
      %3114 = vrot.lane.b32.xlu0 %v3084, 96
      %v3115 = vpop.permute.xlu0 %3114
      %3116 = vrot.lane.b32.xlu0 %v3109, 96
      %v3117 = vpop.permute.xlu0 %3116
      %v3122 = vsel %vm1003, 0.0, %v3086
      %v3123 = vsel %vm1003, %v3042, %v3088
      %v3124 = vsel %vm1003, %v3043, %v3090
      %v3125 = vsel %vm1003, %v3044, %v3092
      %v3126 = vsel %vm1039, %v3122, %v3098
      %v3127 = vsel %vm1039, %v3123, %v3100
      %v3128 = vsel %vm1039, %v3124, %v3102
      %v3129 = vsel %vm1039, %v3125, %v3104
      %v3130 = vsel %vm1075, %v3126, %v3111
      %v3131 = vsel %vm1075, %v3127, %v3113
      %v3132 = vsel %vm1075, %v3128, %v3115
      %v3133 = vsel %vm1075, %v3129, %v3117
      %v3135 = vlaneseq
      %v3136 = vshrl.u32 %v3135, 7
      %v3137 = vsub.s32 0, %v3136
      %v3138 = vrot.slane %v3072, %v3137
      %v3140 = vsel %vm1003, %v3043, 0
      %v3142 = vsel %vm1003, %v3044, 0
      %v3144 = vsel %vm1003, %v3045, 0
      %v3146 = vsel %vm1003, 0.0, 0
      %3148 = vmatprep.subr.mxu0 0.0
      %3149 = vmatpush1.msra.mxu0 %v3066
      %3150 = vmatprep.subr.mxu0 0.0
      %3151 = vmatpush1.msra.mxu0 %v3065
      %3152 = vmatprep.subr.mxu0 0.0
      %3153 = vmatpush1.msra.mxu0 %v3064
      %3154 = vmatprep.subr.mxu0 0.0
      %3155 = vmatpush1.msra.mxu0 %v3063
      %3156 = vmatprep.subr.mxu0 0.0
      %3157 = vmatpush1.msra.mxu0 %v3062
      %3158 = vmatprep.subr.mxu0 0.0
      %3159 = vmatpush1.msra.mxu0 %v3061
      %3160 = vmatprep.subr.mxu0 0.0
      %3161 = vmatpush1.msra.mxu0 %v3060
      %3162 = vmatprep.subr.mxu0 0.0
      %3163 = vmatpush1.msra.mxu0 %v3059
      %3164 = vmatprep.subr.mxu0 0.0
      %3165 = vmatpush1.msra.mxu0 %v3058
      %3166 = vmatprep.subr.mxu0 0.0
      %3167 = vmatpush1.msra.mxu0 %v3057
      %3168 = vmatprep.subr.mxu0 0.0
      %3169 = vmatpush1.msra.mxu0 %v3056
      %3170 = vmatprep.subr.mxu0 0.0
      %3171 = vmatpush1.msra.mxu0 %v3055
      %3172 = vmatprep.subr.mxu0 0.0
      %3173 = vmatpush1.msra.mxu0 %v3054
      %3174 = vmatprep.subr.mxu0 0.0
      %3175 = vmatpush1.msra.mxu0 %v3053
      %3176 = vmatprep.subr.mxu0 0.0
      %3177 = vmatpush1.msra.mxu0 %v3052
      %3178 = vmatprep.subr.mxu0 0.0
      %3179 = vmatpush1.msra.mxu0 %v3051
      %3180 = vmatprep.subr.mxu0 0.0
      %3181 = vmatpush2.msra.mxu0 0.0
      %3182 = vmatprep.subr.mxu0 0.0
      %3183 = vmatpush2.msra.mxu0 0.0
      %3184 = vmatprep.subr.mxu0 0.0
      %3185 = vmatpush2.msra.mxu0 0.0
      %3186 = vmatprep.subr.mxu0 0.0
      %3187 = vmatpush2.msra.mxu0 0.0
      %3188 = vmatprep.subr.mxu0 0.0
      %3189 = vmatpush2.msra.mxu0 0.0
      %3190 = vmatprep.subr.mxu0 0.0
      %3191 = vmatpush2.msra.mxu0 0.0
      %3192 = vmatprep.subr.mxu0 0.0
      %3193 = vmatpush2.msra.mxu0 0.0
      %3194 = vmatprep.subr.mxu0 0.0
      %3195 = vmatpush2.msra.mxu0 0.0
      %3196 = vmatprep.subr.mxu0 0.0
      %3197 = vmatpush2.msra.mxu0 0.0
      %3198 = vmatprep.subr.mxu0 0.0
      %3199 = vmatpush2.msra.mxu0 0.0
      %3200 = vmatprep.subr.mxu0 0.0
      %3201 = vmatpush2.msra.mxu0 0.0
      %3202 = vmatprep.subr.mxu0 0.0
      %3203 = vmatpush2.msra.mxu0 0.0
      %3204 = vmatprep.subr.mxu0 0.0
      %3205 = vmatpush2.msra.mxu0 %v3070
      %3206 = vmatprep.subr.mxu0 0.0
      %3207 = vmatpush2.msra.mxu0 %v3069
      %3208 = vmatprep.subr.mxu0 0.0
      %3209 = vmatpush2.msra.mxu0 %v3068
      %3210 = vmatprep.subr.mxu0 0.0
      %3211 = vmatpush2.msra.mxu0 %v3067
      %3212 = vmatprep.mubr.f32.mxu0 %v3140
      %3213 = vmatmul.mubr.f32.gmra.mxu0 %v3130
      %v3214 = vpop.f32.mrf.mxu0
      %v3215 = vadd.f32 %v3138, %v3214
      %v3216 = vpop.f32.mrf.mxu0
      %3217 = vmatprep.mubr.f32.mxu0 %v3142
      %3218 = vmatmul.mubr.f32.gmra.mxu0 %v3131
      %v3219 = vpop.f32.mrf.mxu0
      %v3220 = vadd.f32 %v3138, %v3219
      %v3221 = vpop.f32.mrf.mxu0
      %3222 = vmatprep.mubr.f32.mxu0 %v3144
      %3223 = vmatmul.mubr.f32.gmra.mxu0 %v3132
      %v3224 = vpop.f32.mrf.mxu0
      %v3225 = vadd.f32 %v3138, %v3224
      %v3226 = vpop.f32.mrf.mxu0
      %3227 = vmatprep.mubr.f32.mxu0 %v3146
      %3228 = vmatmul.mubr.f32.gmra.mxu0 %v3133
      %v3229 = vpop.f32.mrf.mxu0
      %v3230 = vadd.f32 %v3138, %v3229
      %v3231 = vpop.f32.mrf.mxu0
      %3232 = vdwg.mxu0
      %v3233 = vtanh.pop %v3215
      %v3234 = vtanh.pop %v3220
      %v3235 = vtanh.pop %v3225
      %v3236 = vtanh.pop %v3230
      %v3237 = vxor.u32 %v3215, 2147483648
      %v3238 = vxor.u32 %v3220, 2147483648
      %v3239 = vxor.u32 %v3225, 2147483648
      %v3240 = vxor.u32 %v3230, 2147483648
      %v3241 = vmul.f32 %v3237, 1.442695
      %v3242 = vpow.pop %v3241
      %v3243 = vmul.f32 %v3238, 1.442695
      %v3244 = vpow.pop %v3243
      %v3245 = vmul.f32 %v3239, 1.442695
      %v3246 = vpow.pop %v3245
      %v3247 = vmul.f32 %v3240, 1.442695
      %v3248 = vpow.pop %v3247
      %v3249 = vadd.f32 %v3242, 1.0
      %v3250 = vadd.f32 %v3244, 1.0
      %v3251 = vadd.f32 %v3246, 1.0
      %v3252 = vadd.f32 %v3248, 1.0
      %v3253 = vrcp.pop %v3249
      %v3254 = vmul.f32 1.0, %v3253
      %v3255 = vrcp.pop %v3250
      %v3256 = vmul.f32 1.0, %v3255
      %v3257 = vrcp.pop %v3251
      %v3258 = vmul.f32 1.0, %v3257
      %v3259 = vrcp.pop %v3252
      %v3260 = vmul.f32 1.0, %v3259
      %3265 = vrot.lane.b32.xlu0 %v3254, 96
      %v3266 = vpop.permute.xlu0 %3265
      %3267 = vrot.lane.b32.xlu0 %v3256, 96
      %v3268 = vpop.permute.xlu0 %3267
      %3269 = vrot.lane.b32.xlu0 %v3258, 96
      %v3270 = vpop.permute.xlu0 %3269
      %3271 = vrot.lane.b32.xlu0 %v3260, 96
      %v3272 = vpop.permute.xlu0 %3271
      %v3277 = vmul.f32 %v3233, %v3266
      %v3278 = vmul.f32 %v3234, %v3268
      %v3279 = vmul.f32 %v3235, %v3270
      %v3280 = vmul.f32 %v3236, %v3272
      %s3281 = scalar_lea.vmem %s7, 192
      %v3282 = vld [vmem:[%s3281] sm:$0xff]
      %v3283 = vld [vmem:[%s3281 + $0x8] sm:$0xff]
      %v3284 = vld [vmem:[%s3281 + $0x10] sm:$0xff]
      %v3285 = vld [vmem:[%s3281 + $0x18] sm:$0xff]
      %v3286 = vld [vmem:[%s3281 + $0x20] sm:$0xff]
      %v3287 = vld [vmem:[%s3281 + $0x28] sm:$0xff]
      %v3288 = vld [vmem:[%s3281 + $0x30] sm:$0xff]
      %v3289 = vld [vmem:[%s3281 + $0x38] sm:$0xff]
      %v3290 = vld [vmem:[%s3281 + $0x40] sm:$0xff]
      %v3291 = vld [vmem:[%s3281 + $0x48] sm:$0xff]
      %v3292 = vld [vmem:[%s3281 + $0x50] sm:$0xff]
      %v3293 = vld [vmem:[%s3281 + $0x58] sm:$0xff]
      %s3294 = scalar_lea.vmem %s8, 2
      %v3295 = vld [vmem:[%s3294] sm:$0x1]
      %v3300 = vrot.slane %v3277, 7
      %v3301 = vrot.slane %v3278, 7
      %v3302 = vsel %vm753, %v3300, %v3301
      %v3303 = vrot.slane %v3279, 7
      %v3304 = vsel %vm753, %v3301, %v3303
      %v3305 = vrot.slane %v3280, 7
      %v3306 = vsel %vm753, %v3303, %v3305
      %v3312 = vsel %vm753, 0.0, %v3300
      %v3313 = vsel %vm753, %v3305, 0.0
      %v3316 = vrot.slane %v3312, 1
      %v3317 = vrot.slane %v3302, 1
      %v3318 = vsel %vm473, %v3316, %v3317
      %v3319 = vrot.slane %v3304, 1
      %v3320 = vsel %vm473, %v3317, %v3319
      %v3321 = vrot.slane %v3306, 1
      %v3322 = vsel %vm473, %v3319, %v3321
      %v3323 = vrot.slane %v3313, 1
      %v3324 = vsel %vm473, %v3321, %v3323
      %3325 = vrot.lane.b32.xlu0 %v3318, 32
      %v3326 = vpop.permute.xlu0 %3325
      %3327 = vrot.lane.b32.xlu0 %v3320, 32
      %v3328 = vpop.permute.xlu0 %3327
      %3329 = vrot.lane.b32.xlu0 %v3322, 32
      %v3330 = vpop.permute.xlu0 %3329
      %3331 = vrot.lane.b32.xlu0 %v3324, 32
      %v3332 = vpop.permute.xlu0 %3331
      %v3337 = vrot.slane %v3312, 2
      %v3338 = vrot.slane %v3302, 2
      %v3339 = vsel %vm543, %v3337, %v3338
      %v3340 = vrot.slane %v3304, 2
      %v3341 = vsel %vm543, %v3338, %v3340
      %v3342 = vrot.slane %v3306, 2
      %v3343 = vsel %vm543, %v3340, %v3342
      %v3344 = vrot.slane %v3313, 2
      %v3345 = vsel %vm543, %v3342, %v3344
      %3346 = vrot.lane.b32.xlu0 %v3339, 64
      %v3347 = vpop.permute.xlu0 %3346
      %3348 = vrot.lane.b32.xlu0 %v3341, 64
      %v3349 = vpop.permute.xlu0 %3348
      %3350 = vrot.lane.b32.xlu0 %v3343, 64
      %v3351 = vpop.permute.xlu0 %3350
      %3352 = vrot.lane.b32.xlu0 %v3345, 64
      %v3353 = vpop.permute.xlu0 %3352
      %v3358 = vsel %vm1003, %v3312, %v3326
      %v3359 = vsel %vm1003, %v3302, %v3328
      %v3360 = vsel %vm1003, %v3304, %v3330
      %v3361 = vsel %vm1003, %v3306, %v3332
      %v3362 = vsel %vm1039, %v3358, %v3347
      %v3363 = vsel %vm1039, %v3359, %v3349
      %v3364 = vsel %vm1039, %v3360, %v3351
      %v3365 = vsel %vm1039, %v3361, %v3353
      %v3367 = vlaneseq
      %v3368 = vshrl.u32 %v3367, 7
      %v3369 = vsub.s32 0, %v3368
      %v3370 = vrot.slane %v3295, %v3369
      %v3373 = vsel %vm1075, %v3362, 0
      %v3376 = vsel %vm1075, %v3363, 0
      %v3379 = vsel %vm1075, %v3364, 0
      %v3382 = vsel %vm1075, %v3365, 0
      %3384 = vmatprep.subr.mxu0 0.0
      %3385 = vmatpush1.msra.mxu0 0.0
      %3386 = vmatprep.subr.mxu0 0.0
      %3387 = vmatpush1.msra.mxu0 0.0
      %3388 = vmatprep.subr.mxu0 0.0
      %3389 = vmatpush1.msra.mxu0 0.0
      %3390 = vmatprep.subr.mxu0 0.0
      %3391 = vmatpush1.msra.mxu0 0.0
      %3392 = vmatprep.subr.mxu0 0.0
      %3393 = vmatpush1.msra.mxu0 %v3293
      %3394 = vmatprep.subr.mxu0 0.0
      %3395 = vmatpush1.msra.mxu0 %v3292
      %3396 = vmatprep.subr.mxu0 0.0
      %3397 = vmatpush1.msra.mxu0 %v3291
      %3398 = vmatprep.subr.mxu0 0.0
      %3399 = vmatpush1.msra.mxu0 %v3290
      %3400 = vmatprep.subr.mxu0 0.0
      %3401 = vmatpush1.msra.mxu0 %v3289
      %3402 = vmatprep.subr.mxu0 0.0
      %3403 = vmatpush1.msra.mxu0 %v3288
      %3404 = vmatprep.subr.mxu0 0.0
      %3405 = vmatpush1.msra.mxu0 %v3287
      %3406 = vmatprep.subr.mxu0 0.0
      %3407 = vmatpush1.msra.mxu0 %v3286
      %3408 = vmatprep.subr.mxu0 0.0
      %3409 = vmatpush1.msra.mxu0 %v3285
      %3410 = vmatprep.subr.mxu0 0.0
      %3411 = vmatpush1.msra.mxu0 %v3284
      %3412 = vmatprep.subr.mxu0 0.0
      %3413 = vmatpush1.msra.mxu0 %v3283
      %3414 = vmatprep.subr.mxu0 0.0
      %3415 = vmatpush1.msra.mxu0 %v3282
      %3416 = vmatprep.subr.mxu0 0.0
      %3417 = vmatpush2.msra.mxu0 0.0
      %3418 = vmatprep.subr.mxu0 0.0
      %3419 = vmatpush2.msra.mxu0 0.0
      %3420 = vmatprep.subr.mxu0 0.0
      %3421 = vmatpush2.msra.mxu0 0.0
      %3422 = vmatprep.subr.mxu0 0.0
      %3423 = vmatpush2.msra.mxu0 0.0
      %3424 = vmatprep.subr.mxu0 0.0
      %3425 = vmatpush2.msra.mxu0 0.0
      %3426 = vmatprep.subr.mxu0 0.0
      %3427 = vmatpush2.msra.mxu0 0.0
      %3428 = vmatprep.subr.mxu0 0.0
      %3429 = vmatpush2.msra.mxu0 0.0
      %3430 = vmatprep.subr.mxu0 0.0
      %3431 = vmatpush2.msra.mxu0 0.0
      %3432 = vmatprep.subr.mxu0 0.0
      %3433 = vmatpush2.msra.mxu0 0.0
      %3434 = vmatprep.subr.mxu0 0.0
      %3435 = vmatpush2.msra.mxu0 0.0
      %3436 = vmatprep.subr.mxu0 0.0
      %3437 = vmatpush2.msra.mxu0 0.0
      %3438 = vmatprep.subr.mxu0 0.0
      %3439 = vmatpush2.msra.mxu0 0.0
      %3440 = vmatprep.subr.mxu0 0.0
      %3441 = vmatpush2.msra.mxu0 0.0
      %3442 = vmatprep.subr.mxu0 0.0
      %3443 = vmatpush2.msra.mxu0 0.0
      %3444 = vmatprep.subr.mxu0 0.0
      %3445 = vmatpush2.msra.mxu0 0.0
      %3446 = vmatprep.subr.mxu0 0.0
      %3447 = vmatpush2.msra.mxu0 0.0
      %3448 = vmatprep.mubr.f32.mxu0 0.0
      %3449 = vmatmul.mubr.f32.gmra.mxu0 %v3373
      %v3450 = vpop.f32.mrf.mxu0
      %v3451 = vadd.f32 %v3370, %v3450
      %v3452 = vpop.f32.mrf.mxu0
      %3453 = vmatprep.mubr.f32.mxu0 0.0
      %3454 = vmatmul.mubr.f32.gmra.mxu0 %v3376
      %v3455 = vpop.f32.mrf.mxu0
      %v3456 = vadd.f32 %v3370, %v3455
      %v3457 = vpop.f32.mrf.mxu0
      %3458 = vmatprep.mubr.f32.mxu0 0.0
      %3459 = vmatmul.mubr.f32.gmra.mxu0 %v3379
      %v3460 = vpop.f32.mrf.mxu0
      %v3461 = vadd.f32 %v3370, %v3460
      %v3462 = vpop.f32.mrf.mxu0
      %3463 = vmatprep.mubr.f32.mxu0 0.0
      %3464 = vmatmul.mubr.f32.gmra.mxu0 %v3382
      %v3465 = vpop.f32.mrf.mxu0
      %v3466 = vadd.f32 %v3370, %v3465
      %v3467 = vpop.f32.mrf.mxu0
      %3468 = vdwg.mxu0
      %v3469 = vsel %vm1003, %v3451, 0.0
      %v3470 = vsel %vm1003, %v3456, 0.0
      %v3471 = vadd.f32 %v3469, %v3470
      %v3472 = vsel %vm1003, %v3461, 0.0
      %v3473 = vadd.f32 %v3471, %v3472
      %v3474 = vsel %vm1003, %v3466, 0.0
      %v3475 = vadd.f32 %v3473, %v3474
      %v3476 = vrot.slane %v3475, 4
      %v3477 = vadd.f32 %v3475, %v3476
      %v3478 = vrot.slane %v3477, 2
      %v3479 = vadd.f32 %v3477, %v3478
      %v3480 = vrot.slane %v3479, 1
      %v3481 = vadd.f32 %v3479, %v3480
      %v3482 = vmul.f32 %v3481, 0.03125
      %v3483 = vmul.f32 %v3451, %v3451
      %v3484 = vmul.f32 %v3456, %v3456
      %v3485 = vmul.f32 %v3461, %v3461
      %v3486 = vmul.f32 %v3466, %v3466
      %v3487 = vsel %vm1003, %v3483, 0.0
      %v3488 = vsel %vm1003, %v3484, 0.0
      %v3489 = vadd.f32 %v3487, %v3488
      %v3490 = vsel %vm1003, %v3485, 0.0
      %v3491 = vadd.f32 %v3489, %v3490
      %v3492 = vsel %vm1003, %v3486, 0.0
      %v3493 = vadd.f32 %v3491, %v3492
      %v3494 = vrot.slane %v3493, 4
      %v3495 = vadd.f32 %v3493, %v3494
      %v3496 = vrot.slane %v3495, 2
      %v3497 = vadd.f32 %v3495, %v3496
      %v3498 = vrot.slane %v3497, 1
      %v3499 = vadd.f32 %v3497, %v3498
      %v3500 = vmul.f32 %v3499, 0.03125
      %v3501 = vmul.f32 %v3482, %v3482
      %v3502 = vsub.f32 %v3500, %v3501
      %v3503 = vsub.f32 %v3451, %v3482
      %v3504 = vsub.f32 %v3456, %v3482
      %v3505 = vsub.f32 %v3461, %v3482
      %v3506 = vsub.f32 %v3466, %v3482
      %v3507 = vadd.f32 %v3502, 1e-05
      %v3508 = vrsqrt.pop %v3507
      %v3509 = vmul.f32 %v3503, %v3508
      %v3510 = vmul.f32 %v3504, %v3508
      %v3511 = vmul.f32 %v3505, %v3508
      %v3512 = vmul.f32 %v3506, %v3508
      %v3513 = vadd.f32 %v3042, %v3509
      %v3514 = vadd.f32 %v3043, %v3510
      %v3515 = vadd.f32 %v3044, %v3511
      %v3516 = vadd.f32 %v3045, %v3512
      %v3517 = vadd.f32 %v3046, %v3509
      %v3518 = vadd.f32 %v3047, %v3510
      %v3519 = vadd.f32 %v3048, %v3511
      %v3520 = vadd.f32 %v3049, %v3512
      %s3521 = scalar_lea.vmem %s5, 480
      %v3522 = vld [vmem:[%s3521] sm:$0xff]
      %v3523 = vld [vmem:[%s3521 + $0x8] sm:$0xff]
      %v3524 = vld [vmem:[%s3521 + $0x10] sm:$0xff]
      %v3525 = vld [vmem:[%s3521 + $0x18] sm:$0xff]
      %v3526 = vld [vmem:[%s3521 + $0x20] sm:$0xff]
      %v3527 = vld [vmem:[%s3521 + $0x28] sm:$0xff]
      %v3528 = vld [vmem:[%s3521 + $0x30] sm:$0xff]
      %v3529 = vld [vmem:[%s3521 + $0x38] sm:$0xff]
      %v3530 = vld [vmem:[%s3521 + $0x40] sm:$0xff]
      %v3531 = vld [vmem:[%s3521 + $0x48] sm:$0xff]
      %v3532 = vld [vmem:[%s3521 + $0x50] sm:$0xff]
      %v3533 = vld [vmem:[%s3521 + $0x58] sm:$0xff]
      %v3534 = vld [vmem:[%s3521 + $0x60] sm:$0xff]
      %v3535 = vld [vmem:[%s3521 + $0x68] sm:$0xff]
      %v3536 = vld [vmem:[%s3521 + $0x70] sm:$0xff]
      %v3537 = vld [vmem:[%s3521 + $0x78] sm:$0xff]
      %v3538 = vld [vmem:[%s3521 + $0x80] sm:$0xff]
      %v3539 = vld [vmem:[%s3521 + $0x88] sm:$0xff]
      %v3540 = vld [vmem:[%s3521 + $0x90] sm:$0xff]
      %v3541 = vld [vmem:[%s3521 + $0x98] sm:$0xff]
      %s3542 = scalar_lea.vmem %s6, 3
      %v3543 = vld [vmem:[%s3542] sm:$0x1]
      %3547 = vrot.lane.b32.xlu0 0.0, 32
      %v3548 = vpop.permute.xlu0 %3547
      %3549 = vrot.lane.b32.xlu0 %v3513, 32
      %v3550 = vpop.permute.xlu0 %3549
      %3551 = vrot.lane.b32.xlu0 %v3514, 32
      %v3552 = vpop.permute.xlu0 %3551
      %3553 = vrot.lane.b32.xlu0 %v3515, 32
      %v3554 = vpop.permute.xlu0 %3553
      %3560 = vrot.lane.b32.xlu0 %v3513, 64
      %v3561 = vpop.permute.xlu0 %3560
      %3562 = vrot.lane.b32.xlu0 %v3514, 64
      %v3563 = vpop.permute.xlu0 %3562
      %3564 = vrot.lane.b32.xlu0 %v3515, 64
      %v3565 = vpop.permute.xlu0 %3564
      %3566 = vrot.lane.b32.xlu0 %v3516, 64
      %v3567 = vpop.permute.xlu0 %3566
      %3572 = vrot.lane.b32.xlu0 %v3514, 96
      %v3573 = vpop.permute.xlu0 %3572
      %3574 = vrot.lane.b32.xlu0 %v3515, 96
      %v3575 = vpop.permute.xlu0 %3574
      %3576 = vrot.lane.b32.xlu0 %v3516, 96
      %v3577 = vpop.permute.xlu0 %3576
      %3578 = vrot.lane.b32.xlu0 0.0, 96
      %v3579 = vpop.permute.xlu0 %3578
      %v3584 = vsel %vm1003, 0.0, %v3548
      %v3585 = vsel %vm1003, 0.0, %v3550
      %v3586 = vsel %vm1003, %v3513, %v3552
      %v3587 = vsel %vm1003, %v3514, %v3554
      %v3588 = vsel %vm1039, %v3584, %v3561
      %v3589 = vsel %vm1039, %v3585, %v3563
      %v3590 = vsel %vm1039, %v3586, %v3565
      %v3591 = vsel %vm1039, %v3587, %v3567
      %v3592 = vsel %vm1075, %v3588, %v3573
      %v3593 = vsel %vm1075, %v3589, %v3575
      %v3594 = vsel %vm1075, %v3590, %v3577
      %v3595 = vsel %vm1075, %v3591, %v3579
      %v3597 = vlaneseq
      %v3598 = vshrl.u32 %v3597, 7
      %v3599 = vsub.s32 0, %v3598
      %v3600 = vrot.slane %v3543, %v3599
      %v3602 = vsel %vm1003, %v3515, 0
      %v3604 = vsel %vm1003, %v3516, 0
      %3606 = vmatprep.subr.mxu0 0.0
      %3607 = vmatpush1.msra.mxu0 %v3537
      %3608 = vmatprep.subr.mxu0 0.0
      %3609 = vmatpush1.msra.mxu0 %v3536
      %3610 = vmatprep.subr.mxu0 0.0
      %3611 = vmatpush1.msra.mxu0 %v3535
      %3612 = vmatprep.subr.mxu0 0.0
      %3613 = vmatpush1.msra.mxu0 %v3534
      %3614 = vmatprep.subr.mxu0 0.0
      %3615 = vmatpush1.msra.mxu0 %v3533
      %3616 = vmatprep.subr.mxu0 0.0
      %3617 = vmatpush1.msra.mxu0 %v3532
      %3618 = vmatprep.subr.mxu0 0.0
      %3619 = vmatpush1.msra.mxu0 %v3531
      %3620 = vmatprep.subr.mxu0 0.0
      %3621 = vmatpush1.msra.mxu0 %v3530
      %3622 = vmatprep.subr.mxu0 0.0
      %3623 = vmatpush1.msra.mxu0 %v3529
      %3624 = vmatprep.subr.mxu0 0.0
      %3625 = vmatpush1.msra.mxu0 %v3528
      %3626 = vmatprep.subr.mxu0 0.0
      %3627 = vmatpush1.msra.mxu0 %v3527
      %3628 = vmatprep.subr.mxu0 0.0
      %3629 = vmatpush1.msra.mxu0 %v3526
      %3630 = vmatprep.subr.mxu0 0.0
      %3631 = vmatpush1.msra.mxu0 %v3525
      %3632 = vmatprep.subr.mxu0 0.0
      %3633 = vmatpush1.msra.mxu0 %v3524
      %3634 = vmatprep.subr.mxu0 0.0
      %3635 = vmatpush1.msra.mxu0 %v3523
      %3636 = vmatprep.subr.mxu0 0.0
      %3637 = vmatpush1.msra.mxu0 %v3522
      %3638 = vmatprep.subr.mxu0 0.0
      %3639 = vmatpush2.msra.mxu0 0.0
      %3640 = vmatprep.subr.mxu0 0.0
      %3641 = vmatpush2.msra.mxu0 0.0
      %3642 = vmatprep.subr.mxu0 0.0
      %3643 = vmatpush2.msra.mxu0 0.0
      %3644 = vmatprep.subr.mxu0 0.0
      %3645 = vmatpush2.msra.mxu0 0.0
      %3646 = vmatprep.subr.mxu0 0.0
      %3647 = vmatpush2.msra.mxu0 0.0
      %3648 = vmatprep.subr.mxu0 0.0
      %3649 = vmatpush2.msra.mxu0 0.0
      %3650 = vmatprep.subr.mxu0 0.0
      %3651 = vmatpush2.msra.mxu0 0.0
      %3652 = vmatprep.subr.mxu0 0.0
      %3653 = vmatpush2.msra.mxu0 0.0
      %3654 = vmatprep.subr.mxu0 0.0
      %3655 = vmatpush2.msra.mxu0 0.0
      %3656 = vmatprep.subr.mxu0 0.0
      %3657 = vmatpush2.msra.mxu0 0.0
      %3658 = vmatprep.subr.mxu0 0.0
      %3659 = vmatpush2.msra.mxu0 0.0
      %3660 = vmatprep.subr.mxu0 0.0
      %3661 = vmatpush2.msra.mxu0 0.0
      %3662 = vmatprep.subr.mxu0 0.0
      %3663 = vmatpush2.msra.mxu0 %v3541
      %3664 = vmatprep.subr.mxu0 0.0
      %3665 = vmatpush2.msra.mxu0 %v3540
      %3666 = vmatprep.subr.mxu0 0.0
      %3667 = vmatpush2.msra.mxu0 %v3539
      %3668 = vmatprep.subr.mxu0 0.0
      %3669 = vmatpush2.msra.mxu0 %v3538
      %3670 = vmatprep.mubr.f32.mxu0 %v3602
      %3671 = vmatmul.mubr.f32.gmra.mxu0 %v3592
      %v3672 = vpop.f32.mrf.mxu0
      %v3673 = vadd.f32 %v3600, %v3672
      %v3674 = vpop.f32.mrf.mxu0
      %3675 = vmatprep.mubr.f32.mxu0 %v3604
      %3676 = vmatmul.mubr.f32.gmra.mxu0 %v3593
      %v3677 = vpop.f32.mrf.mxu0
      %v3678 = vadd.f32 %v3600, %v3677
      %v3679 = vpop.f32.mrf.mxu0
      %3680 = vmatprep.mubr.f32.mxu0 %v3146
      %3681 = vmatmul.mubr.f32.gmra.mxu0 %v3594
      %v3682 = vpop.f32.mrf.mxu0
      %v3683 = vadd.f32 %v3600, %v3682
      %v3684 = vpop.f32.mrf.mxu0
      %3685 = vmatprep.mubr.f32.mxu0 %v3146
      %3686 = vmatmul.mubr.f32.gmra.mxu0 %v3595
      %v3687 = vpop.f32.mrf.mxu0
      %v3688 = vadd.f32 %v3600, %v3687
      %v3689 = vpop.f32.mrf.mxu0
      %3690 = vdwg.mxu0
      %v3691 = vtanh.pop %v3673
      %v3692 = vtanh.pop %v3678
      %v3693 = vtanh.pop %v3683
      %v3694 = vtanh.pop %v3688
      %v3695 = vxor.u32 %v3673, 2147483648
      %v3696 = vxor.u32 %v3678, 2147483648
      %v3697 = vxor.u32 %v3683, 2147483648
      %v3698 = vxor.u32 %v3688, 2147483648
      %v3699 = vmul.f32 %v3695, 1.442695
      %v3700 = vpow.pop %v3699
      %v3701 = vmul.f32 %v3696, 1.442695
      %v3702 = vpow.pop %v3701
      %v3703 = vmul.f32 %v3697, 1.442695
      %v3704 = vpow.pop %v3703
      %v3705 = vmul.f32 %v3698, 1.442695
      %v3706 = vpow.pop %v3705
      %v3707 = vadd.f32 %v3700, 1.0
      %v3708 = vadd.f32 %v3702, 1.0
      %v3709 = vadd.f32 %v3704, 1.0
      %v3710 = vadd.f32 %v3706, 1.0
      %v3711 = vrcp.pop %v3707
      %v3712 = vmul.f32 1.0, %v3711
      %v3713 = vrcp.pop %v3708
      %v3714 = vmul.f32 1.0, %v3713
      %v3715 = vrcp.pop %v3709
      %v3716 = vmul.f32 1.0, %v3715
      %v3717 = vrcp.pop %v3710
      %v3718 = vmul.f32 1.0, %v3717
      %3723 = vrot.lane.b32.xlu0 %v3712, 96
      %v3724 = vpop.permute.xlu0 %3723
      %3725 = vrot.lane.b32.xlu0 %v3714, 96
      %v3726 = vpop.permute.xlu0 %3725
      %3727 = vrot.lane.b32.xlu0 %v3716, 96
      %v3728 = vpop.permute.xlu0 %3727
      %3729 = vrot.lane.b32.xlu0 %v3718, 96
      %v3730 = vpop.permute.xlu0 %3729
      %v3735 = vmul.f32 %v3691, %v3724
      %v3736 = vmul.f32 %v3692, %v3726
      %v3737 = vmul.f32 %v3693, %v3728
      %v3738 = vmul.f32 %v3694, %v3730
      %s3739 = scalar_lea.vmem %s7, 288
      %v3740 = vld [vmem:[%s3739] sm:$0xff]
      %v3741 = vld [vmem:[%s3739 + $0x8] sm:$0xff]
      %v3742 = vld [vmem:[%s3739 + $0x10] sm:$0xff]
      %v3743 = vld [vmem:[%s3739 + $0x18] sm:$0xff]
      %v3744 = vld [vmem:[%s3739 + $0x20] sm:$0xff]
      %v3745 = vld [vmem:[%s3739 + $0x28] sm:$0xff]
      %v3746 = vld [vmem:[%s3739 + $0x30] sm:$0xff]
      %v3747 = vld [vmem:[%s3739 + $0x38] sm:$0xff]
      %v3748 = vld [vmem:[%s3739 + $0x40] sm:$0xff]
      %v3749 = vld [vmem:[%s3739 + $0x48] sm:$0xff]
      %v3750 = vld [vmem:[%s3739 + $0x50] sm:$0xff]
      %v3751 = vld [vmem:[%s3739 + $0x58] sm:$0xff]
      %s3752 = scalar_lea.vmem %s8, 3
      %v3753 = vld [vmem:[%s3752] sm:$0x1]
      %v3758 = vrot.slane %v3735, 7
      %v3759 = vrot.slane %v3736, 7
      %v3760 = vsel %vm753, %v3758, %v3759
      %v3761 = vrot.slane %v3737, 7
      %v3762 = vsel %vm753, %v3759, %v3761
      %v3763 = vrot.slane %v3738, 7
      %v3764 = vsel %vm753, %v3761, %v3763
      %v3770 = vsel %vm753, 0.0, %v3758
      %v3771 = vsel %vm753, %v3763, 0.0
      %v3774 = vrot.slane %v3770, 1
      %v3775 = vrot.slane %v3760, 1
      %v3776 = vsel %vm473, %v3774, %v3775
      %v3777 = vrot.slane %v3762, 1
      %v3778 = vsel %vm473, %v3775, %v3777
      %v3779 = vrot.slane %v3764, 1
      %v3780 = vsel %vm473, %v3777, %v3779
      %v3781 = vrot.slane %v3771, 1
      %v3782 = vsel %vm473, %v3779, %v3781
      %3783 = vrot.lane.b32.xlu0 %v3776, 32
      %v3784 = vpop.permute.xlu0 %3783
      %3785 = vrot.lane.b32.xlu0 %v3778, 32
      %v3786 = vpop.permute.xlu0 %3785
      %3787 = vrot.lane.b32.xlu0 %v3780, 32
      %v3788 = vpop.permute.xlu0 %3787
      %3789 = vrot.lane.b32.xlu0 %v3782, 32
      %v3790 = vpop.permute.xlu0 %3789
      %v3795 = vrot.slane %v3770, 2
      %v3796 = vrot.slane %v3760, 2
      %v3797 = vsel %vm543, %v3795, %v3796
      %v3798 = vrot.slane %v3762, 2
      %v3799 = vsel %vm543, %v3796, %v3798
      %v3800 = vrot.slane %v3764, 2
      %v3801 = vsel %vm543, %v3798, %v3800
      %v3802 = vrot.slane %v3771, 2
      %v3803 = vsel %vm543, %v3800, %v3802
      %3804 = vrot.lane.b32.xlu0 %v3797, 64
      %v3805 = vpop.permute.xlu0 %3804
      %3806 = vrot.lane.b32.xlu0 %v3799, 64
      %v3807 = vpop.permute.xlu0 %3806
      %3808 = vrot.lane.b32.xlu0 %v3801, 64
      %v3809 = vpop.permute.xlu0 %3808
      %3810 = vrot.lane.b32.xlu0 %v3803, 64
      %v3811 = vpop.permute.xlu0 %3810
      %v3816 = vsel %vm1003, %v3770, %v3784
      %v3817 = vsel %vm1003, %v3760, %v3786
      %v3818 = vsel %vm1003, %v3762, %v3788
      %v3819 = vsel %vm1003, %v3764, %v3790
      %v3820 = vsel %vm1039, %v3816, %v3805
      %v3821 = vsel %vm1039, %v3817, %v3807
      %v3822 = vsel %vm1039, %v3818, %v3809
      %v3823 = vsel %vm1039, %v3819, %v3811
      %v3825 = vlaneseq
      %v3826 = vshrl.u32 %v3825, 7
      %v3827 = vsub.s32 0, %v3826
      %v3828 = vrot.slane %v3753, %v3827
      %v3831 = vsel %vm1075, %v3820, 0
      %v3834 = vsel %vm1075, %v3821, 0
      %v3837 = vsel %vm1075, %v3822, 0
      %v3840 = vsel %vm1075, %v3823, 0
      %3842 = vmatprep.subr.mxu0 0.0
      %3843 = vmatpush1.msra.mxu0 0.0
      %3844 = vmatprep.subr.mxu0 0.0
      %3845 = vmatpush1.msra.mxu0 0.0
      %3846 = vmatprep.subr.mxu0 0.0
      %3847 = vmatpush1.msra.mxu0 0.0
      %3848 = vmatprep.subr.mxu0 0.0
      %3849 = vmatpush1.msra.mxu0 0.0
      %3850 = vmatprep.subr.mxu0 0.0
      %3851 = vmatpush1.msra.mxu0 %v3751
      %3852 = vmatprep.subr.mxu0 0.0
      %3853 = vmatpush1.msra.mxu0 %v3750
      %3854 = vmatprep.subr.mxu0 0.0
      %3855 = vmatpush1.msra.mxu0 %v3749
      %3856 = vmatprep.subr.mxu0 0.0
      %3857 = vmatpush1.msra.mxu0 %v3748
      %3858 = vmatprep.subr.mxu0 0.0
      %3859 = vmatpush1.msra.mxu0 %v3747
      %3860 = vmatprep.subr.mxu0 0.0
      %3861 = vmatpush1.msra.mxu0 %v3746
      %3862 = vmatprep.subr.mxu0 0.0
      %3863 = vmatpush1.msra.mxu0 %v3745
      %3864 = vmatprep.subr.mxu0 0.0
      %3865 = vmatpush1.msra.mxu0 %v3744
      %3866 = vmatprep.subr.mxu0 0.0
      %3867 = vmatpush1.msra.mxu0 %v3743
      %3868 = vmatprep.subr.mxu0 0.0
      %3869 = vmatpush1.msra.mxu0 %v3742
      %3870 = vmatprep.subr.mxu0 0.0
      %3871 = vmatpush1.msra.mxu0 %v3741
      %3872 = vmatprep.subr.mxu0 0.0
      %3873 = vmatpush1.msra.mxu0 %v3740
      %3874 = vmatprep.subr.mxu0 0.0
      %3875 = vmatpush2.msra.mxu0 0.0
      %3876 = vmatprep.subr.mxu0 0.0
      %3877 = vmatpush2.msra.mxu0 0.0
      %3878 = vmatprep.subr.mxu0 0.0
      %3879 = vmatpush2.msra.mxu0 0.0
      %3880 = vmatprep.subr.mxu0 0.0
      %3881 = vmatpush2.msra.mxu0 0.0
      %3882 = vmatprep.subr.mxu0 0.0
      %3883 = vmatpush2.msra.mxu0 0.0
      %3884 = vmatprep.subr.mxu0 0.0
      %3885 = vmatpush2.msra.mxu0 0.0
      %3886 = vmatprep.subr.mxu0 0.0
      %3887 = vmatpush2.msra.mxu0 0.0
      %3888 = vmatprep.subr.mxu0 0.0
      %3889 = vmatpush2.msra.mxu0 0.0
      %3890 = vmatprep.subr.mxu0 0.0
      %3891 = vmatpush2.msra.mxu0 0.0
      %3892 = vmatprep.subr.mxu0 0.0
      %3893 = vmatpush2.msra.mxu0 0.0
      %3894 = vmatprep.subr.mxu0 0.0
      %3895 = vmatpush2.msra.mxu0 0.0
      %3896 = vmatprep.subr.mxu0 0.0
      %3897 = vmatpush2.msra.mxu0 0.0
      %3898 = vmatprep.subr.mxu0 0.0
      %3899 = vmatpush2.msra.mxu0 0.0
      %3900 = vmatprep.subr.mxu0 0.0
      %3901 = vmatpush2.msra.mxu0 0.0
      %3902 = vmatprep.subr.mxu0 0.0
      %3903 = vmatpush2.msra.mxu0 0.0
      %3904 = vmatprep.subr.mxu0 0.0
      %3905 = vmatpush2.msra.mxu0 0.0
      %3906 = vmatprep.mubr.f32.mxu0 0.0
      %3907 = vmatmul.mubr.f32.gmra.mxu0 %v3831
      %v3908 = vpop.f32.mrf.mxu0
      %v3909 = vadd.f32 %v3828, %v3908
      %v3910 = vpop.f32.mrf.mxu0
      %3911 = vmatprep.mubr.f32.mxu0 0.0
      %3912 = vmatmul.mubr.f32.gmra.mxu0 %v3834
      %v3913 = vpop.f32.mrf.mxu0
      %v3914 = vadd.f32 %v3828, %v3913
      %v3915 = vpop.f32.mrf.mxu0
      %3916 = vmatprep.mubr.f32.mxu0 0.0
      %3917 = vmatmul.mubr.f32.gmra.mxu0 %v3837
      %v3918 = vpop.f32.mrf.mxu0
      %v3919 = vadd.f32 %v3828, %v3918
      %v3920 = vpop.f32.mrf.mxu0
      %3921 = vmatprep.mubr.f32.mxu0 0.0
      %3922 = vmatmul.mubr.f32.gmra.mxu0 %v3840
      %v3923 = vpop.f32.mrf.mxu0
      %v3924 = vadd.f32 %v3828, %v3923
      %v3925 = vpop.f32.mrf.mxu0
      %3926 = vdwg.mxu0
      %v3927 = vsel %vm1003, %v3909, 0.0
      %v3928 = vsel %vm1003, %v3914, 0.0
      %v3929 = vadd.f32 %v3927, %v3928
      %v3930 = vsel %vm1003, %v3919, 0.0
      %v3931 = vadd.f32 %v3929, %v3930
      %v3932 = vsel %vm1003, %v3924, 0.0
      %v3933 = vadd.f32 %v3931, %v3932
      %v3934 = vrot.slane %v3933, 4
      %v3935 = vadd.f32 %v3933, %v3934
      %v3936 = vrot.slane %v3935, 2
      %v3937 = vadd.f32 %v3935, %v3936
      %v3938 = vrot.slane %v3937, 1
      %v3939 = vadd.f32 %v3937, %v3938
      %v3940 = vmul.f32 %v3939, 0.03125
      %v3941 = vmul.f32 %v3909, %v3909
      %v3942 = vmul.f32 %v3914, %v3914
      %v3943 = vmul.f32 %v3919, %v3919
      %v3944 = vmul.f32 %v3924, %v3924
      %v3945 = vsel %vm1003, %v3941, 0.0
      %v3946 = vsel %vm1003, %v3942, 0.0
      %v3947 = vadd.f32 %v3945, %v3946
      %v3948 = vsel %vm1003, %v3943, 0.0
      %v3949 = vadd.f32 %v3947, %v3948
      %v3950 = vsel %vm1003, %v3944, 0.0
      %v3951 = vadd.f32 %v3949, %v3950
      %v3952 = vrot.slane %v3951, 4
      %v3953 = vadd.f32 %v3951, %v3952
      %v3954 = vrot.slane %v3953, 2
      %v3955 = vadd.f32 %v3953, %v3954
      %v3956 = vrot.slane %v3955, 1
      %v3957 = vadd.f32 %v3955, %v3956
      %v3958 = vmul.f32 %v3957, 0.03125
      %v3959 = vmul.f32 %v3940, %v3940
      %v3960 = vsub.f32 %v3958, %v3959
      %v3961 = vsub.f32 %v3909, %v3940
      %v3962 = vsub.f32 %v3914, %v3940
      %v3963 = vsub.f32 %v3919, %v3940
      %v3964 = vsub.f32 %v3924, %v3940
      %v3965 = vadd.f32 %v3960, 1e-05
      %v3966 = vrsqrt.pop %v3965
      %v3967 = vmul.f32 %v3961, %v3966
      %v3968 = vmul.f32 %v3962, %v3966
      %v3969 = vmul.f32 %v3963, %v3966
      %v3970 = vmul.f32 %v3964, %v3966
      %v3971 = vadd.f32 %v3513, %v3967
      %v3972 = vadd.f32 %v3514, %v3968
      %v3973 = vadd.f32 %v3515, %v3969
      %v3974 = vadd.f32 %v3516, %v3970
      %v3975 = vadd.f32 %v3517, %v3967
      %v3976 = vadd.f32 %v3518, %v3968
      %v3977 = vadd.f32 %v3519, %v3969
      %v3978 = vadd.f32 %v3520, %v3970
      %s3979 = scalar_lea.vmem %s5, 640
      %v3980 = vld [vmem:[%s3979] sm:$0xff]
      %v3981 = vld [vmem:[%s3979 + $0x8] sm:$0xff]
      %v3982 = vld [vmem:[%s3979 + $0x10] sm:$0xff]
      %v3983 = vld [vmem:[%s3979 + $0x18] sm:$0xff]
      %v3984 = vld [vmem:[%s3979 + $0x20] sm:$0xff]
      %v3985 = vld [vmem:[%s3979 + $0x28] sm:$0xff]
      %v3986 = vld [vmem:[%s3979 + $0x30] sm:$0xff]
      %v3987 = vld [vmem:[%s3979 + $0x38] sm:$0xff]
      %v3988 = vld [vmem:[%s3979 + $0x40] sm:$0xff]
      %v3989 = vld [vmem:[%s3979 + $0x48] sm:$0xff]
      %v3990 = vld [vmem:[%s3979 + $0x50] sm:$0xff]
      %v3991 = vld [vmem:[%s3979 + $0x58] sm:$0xff]
      %v3992 = vld [vmem:[%s3979 + $0x60] sm:$0xff]
      %v3993 = vld [vmem:[%s3979 + $0x68] sm:$0xff]
      %v3994 = vld [vmem:[%s3979 + $0x70] sm:$0xff]
      %v3995 = vld [vmem:[%s3979 + $0x78] sm:$0xff]
      %v3996 = vld [vmem:[%s3979 + $0x80] sm:$0xff]
      %v3997 = vld [vmem:[%s3979 + $0x88] sm:$0xff]
      %v3998 = vld [vmem:[%s3979 + $0x90] sm:$0xff]
      %v3999 = vld [vmem:[%s3979 + $0x98] sm:$0xff]
      %s4000 = scalar_lea.vmem %s6, 4
      %v4001 = vld [vmem:[%s4000] sm:$0x1]
      %4004 = vrot.lane.b32.xlu0 %v3971, 32
      %v4005 = vpop.permute.xlu0 %4004
      %4006 = vrot.lane.b32.xlu0 %v3972, 32
      %v4007 = vpop.permute.xlu0 %4006
      %4012 = vrot.lane.b32.xlu0 %v3971, 64
      %v4013 = vpop.permute.xlu0 %4012
      %4014 = vrot.lane.b32.xlu0 %v3972, 64
      %v4015 = vpop.permute.xlu0 %4014
      %4016 = vrot.lane.b32.xlu0 %v3973, 64
      %v4017 = vpop.permute.xlu0 %4016
      %4018 = vrot.lane.b32.xlu0 %v3974, 64
      %v4019 = vpop.permute.xlu0 %4018
      %4024 = vrot.lane.b32.xlu0 %v3973, 96
      %v4025 = vpop.permute.xlu0 %4024
      %4026 = vrot.lane.b32.xlu0 %v3974, 96
      %v4027 = vpop.permute.xlu0 %4026
      %v4030 = vsel %vm1003, 0.0, %v4005
      %v4031 = vsel %vm1003, 0.0, %v4007
      %v4032 = vsel %vm1039, %v3584, %v4013
      %v4033 = vsel %vm1039, %v3584, %v4015
      %v4034 = vsel %vm1039, %v4030, %v4017
      %v4035 = vsel %vm1039, %v4031, %v4019
      %v4036 = vsel %vm1075, %v4032, %v4025
      %v4037 = vsel %vm1075, %v4033, %v4027
      %v4038 = vsel %vm1075, %v4034, %v3579
      %v4039 = vsel %vm1075, %v4035, %v3579
      %v4041 = vlaneseq
      %v4042 = vshrl.u32 %v4041, 7
      %v4043 = vsub.s32 0, %v4042
      %v4044 = vrot.slane %v4001, %v4043
      %4046 = vmatprep.subr.mxu0 0.0
      %4047 = vmatpush1.msra.mxu0 %v3995
      %4048 = vmatprep.subr.mxu0 0.0
      %4049 = vmatpush1.msra.mxu0 %v3994
      %4050 = vmatprep.subr.mxu0 0.0
      %4051 = vmatpush1.msra.mxu0 %v3993
      %4052 = vmatprep.subr.mxu0 0.0
      %4053 = vmatpush1.msra.mxu0 %v3992
      %4054 = vmatprep.subr.mxu0 0.0
      %4055 = vmatpush1.msra.mxu0 %v3991
      %4056 = vmatprep.subr.mxu0 0.0
      %4057 = vmatpush1.msra.mxu0 %v3990
      %4058 = vmatprep.subr.mxu0 0.0
      %4059 = vmatpush1.msra.mxu0 %v3989
      %4060 = vmatprep.subr.mxu0 0.0
      %4061 = vmatpush1.msra.mxu0 %v3988
      %4062 = vmatprep.subr.mxu0 0.0
      %4063 = vmatpush1.msra.mxu0 %v3987
      %4064 = vmatprep.subr.mxu0 0.0
      %4065 = vmatpush1.msra.mxu0 %v3986
      %4066 = vmatprep.subr.mxu0 0.0
      %4067 = vmatpush1.msra.mxu0 %v3985
      %4068 = vmatprep.subr.mxu0 0.0
      %4069 = vmatpush1.msra.mxu0 %v3984
      %4070 = vmatprep.subr.mxu0 0.0
      %4071 = vmatpush1.msra.mxu0 %v3983
      %4072 = vmatprep.subr.mxu0 0.0
      %4073 = vmatpush1.msra.mxu0 %v3982
      %4074 = vmatprep.subr.mxu0 0.0
      %4075 = vmatpush1.msra.mxu0 %v3981
      %4076 = vmatprep.subr.mxu0 0.0
      %4077 = vmatpush1.msra.mxu0 %v3980
      %4078 = vmatprep.subr.mxu0 0.0
      %4079 = vmatpush2.msra.mxu0 0.0
      %4080 = vmatprep.subr.mxu0 0.0
      %4081 = vmatpush2.msra.mxu0 0.0
      %4082 = vmatprep.subr.mxu0 0.0
      %4083 = vmatpush2.msra.mxu0 0.0
      %4084 = vmatprep.subr.mxu0 0.0
      %4085 = vmatpush2.msra.mxu0 0.0
      %4086 = vmatprep.subr.mxu0 0.0
      %4087 = vmatpush2.msra.mxu0 0.0
      %4088 = vmatprep.subr.mxu0 0.0
      %4089 = vmatpush2.msra.mxu0 0.0
      %4090 = vmatprep.subr.mxu0 0.0
      %4091 = vmatpush2.msra.mxu0 0.0
      %4092 = vmatprep.subr.mxu0 0.0
      %4093 = vmatpush2.msra.mxu0 0.0
      %4094 = vmatprep.subr.mxu0 0.0
      %4095 = vmatpush2.msra.mxu0 0.0
      %4096 = vmatprep.subr.mxu0 0.0
      %4097 = vmatpush2.msra.mxu0 0.0
      %4098 = vmatprep.subr.mxu0 0.0
      %4099 = vmatpush2.msra.mxu0 0.0
      %4100 = vmatprep.subr.mxu0 0.0
      %4101 = vmatpush2.msra.mxu0 0.0
      %4102 = vmatprep.subr.mxu0 0.0
      %4103 = vmatpush2.msra.mxu0 %v3999
      %4104 = vmatprep.subr.mxu0 0.0
      %4105 = vmatpush2.msra.mxu0 %v3998
      %4106 = vmatprep.subr.mxu0 0.0
      %4107 = vmatpush2.msra.mxu0 %v3997
      %4108 = vmatprep.subr.mxu0 0.0
      %4109 = vmatpush2.msra.mxu0 %v3996
      %4110 = vmatprep.mubr.f32.mxu0 %v3146
      %4111 = vmatmul.mubr.f32.gmra.mxu0 %v4036
      %v4112 = vpop.f32.mrf.mxu0
      %v4113 = vadd.f32 %v4044, %v4112
      %v4114 = vpop.f32.mrf.mxu0
      %4115 = vmatprep.mubr.f32.mxu0 %v3146
      %4116 = vmatmul.mubr.f32.gmra.mxu0 %v4037
      %v4117 = vpop.f32.mrf.mxu0
      %v4118 = vadd.f32 %v4044, %v4117
      %v4119 = vpop.f32.mrf.mxu0
      %4120 = vmatprep.mubr.f32.mxu0 %v3146
      %4121 = vmatmul.mubr.f32.gmra.mxu0 %v4038
      %v4122 = vpop.f32.mrf.mxu0
      %v4123 = vadd.f32 %v4044, %v4122
      %v4124 = vpop.f32.mrf.mxu0
      %4125 = vmatprep.mubr.f32.mxu0 %v3146
      %4126 = vmatmul.mubr.f32.gmra.mxu0 %v4039
      %v4127 = vpop.f32.mrf.mxu0
      %v4128 = vadd.f32 %v4044, %v4127
      %v4129 = vpop.f32.mrf.mxu0
      %4130 = vdwg.mxu0
      %v4131 = vtanh.pop %v4113
      %v4132 = vtanh.pop %v4118
      %v4133 = vtanh.pop %v4123
      %v4134 = vtanh.pop %v4128
      %v4135 = vxor.u32 %v4113, 2147483648
      %v4136 = vxor.u32 %v4118, 2147483648
      %v4137 = vxor.u32 %v4123, 2147483648
      %v4138 = vxor.u32 %v4128, 2147483648
      %v4139 = vmul.f32 %v4135, 1.442695
      %v4140 = vpow.pop %v4139
      %v4141 = vmul.f32 %v4136, 1.442695
      %v4142 = vpow.pop %v4141
      %v4143 = vmul.f32 %v4137, 1.442695
      %v4144 = vpow.pop %v4143
      %v4145 = vmul.f32 %v4138, 1.442695
      %v4146 = vpow.pop %v4145
      %v4147 = vadd.f32 %v4140, 1.0
      %v4148 = vadd.f32 %v4142, 1.0
      %v4149 = vadd.f32 %v4144, 1.0
      %v4150 = vadd.f32 %v4146, 1.0
      %v4151 = vrcp.pop %v4147
      %v4152 = vmul.f32 1.0, %v4151
      %v4153 = vrcp.pop %v4148
      %v4154 = vmul.f32 1.0, %v4153
      %v4155 = vrcp.pop %v4149
      %v4156 = vmul.f32 1.0, %v4155
      %v4157 = vrcp.pop %v4150
      %v4158 = vmul.f32 1.0, %v4157
      %4163 = vrot.lane.b32.xlu0 %v4152, 96
      %v4164 = vpop.permute.xlu0 %4163
      %4165 = vrot.lane.b32.xlu0 %v4154, 96
      %v4166 = vpop.permute.xlu0 %4165
      %4167 = vrot.lane.b32.xlu0 %v4156, 96
      %v4168 = vpop.permute.xlu0 %4167
      %4169 = vrot.lane.b32.xlu0 %v4158, 96
      %v4170 = vpop.permute.xlu0 %4169
      %v4175 = vmul.f32 %v4131, %v4164
      %v4176 = vmul.f32 %v4132, %v4166
      %v4177 = vmul.f32 %v4133, %v4168
      %v4178 = vmul.f32 %v4134, %v4170
      %s4179 = scalar_lea.vmem %s7, 384
      %v4180 = vld [vmem:[%s4179] sm:$0xff]
      %v4181 = vld [vmem:[%s4179 + $0x8] sm:$0xff]
      %v4182 = vld [vmem:[%s4179 + $0x10] sm:$0xff]
      %v4183 = vld [vmem:[%s4179 + $0x18] sm:$0xff]
      %v4184 = vld [vmem:[%s4179 + $0x20] sm:$0xff]
      %v4185 = vld [vmem:[%s4179 + $0x28] sm:$0xff]
      %v4186 = vld [vmem:[%s4179 + $0x30] sm:$0xff]
      %v4187 = vld [vmem:[%s4179 + $0x38] sm:$0xff]
      %v4188 = vld [vmem:[%s4179 + $0x40] sm:$0xff]
      %v4189 = vld [vmem:[%s4179 + $0x48] sm:$0xff]
      %v4190 = vld [vmem:[%s4179 + $0x50] sm:$0xff]
      %v4191 = vld [vmem:[%s4179 + $0x58] sm:$0xff]
      %s4192 = scalar_lea.vmem %s8, 4
      %v4193 = vld [vmem:[%s4192] sm:$0x1]
      %v4198 = vrot.slane %v4175, 7
      %v4199 = vrot.slane %v4176, 7
      %v4200 = vsel %vm753, %v4198, %v4199
      %v4201 = vrot.slane %v4177, 7
      %v4202 = vsel %vm753, %v4199, %v4201
      %v4203 = vrot.slane %v4178, 7
      %v4204 = vsel %vm753, %v4201, %v4203
      %v4210 = vsel %vm753, 0.0, %v4198
      %v4211 = vsel %vm753, %v4203, 0.0
      %v4214 = vrot.slane %v4210, 1
      %v4215 = vrot.slane %v4200, 1
      %v4216 = vsel %vm473, %v4214, %v4215
      %v4217 = vrot.slane %v4202, 1
      %v4218 = vsel %vm473, %v4215, %v4217
      %v4219 = vrot.slane %v4204, 1
      %v4220 = vsel %vm473, %v4217, %v4219
      %v4221 = vrot.slane %v4211, 1
      %v4222 = vsel %vm473, %v4219, %v4221
      %4223 = vrot.lane.b32.xlu0 %v4216, 32
      %v4224 = vpop.permute.xlu0 %4223
      %4225 = vrot.lane.b32.xlu0 %v4218, 32
      %v4226 = vpop.permute.xlu0 %4225
      %4227 = vrot.lane.b32.xlu0 %v4220, 32
      %v4228 = vpop.permute.xlu0 %4227
      %4229 = vrot.lane.b32.xlu0 %v4222, 32
      %v4230 = vpop.permute.xlu0 %4229
      %v4235 = vrot.slane %v4210, 2
      %v4236 = vrot.slane %v4200, 2
      %v4237 = vsel %vm543, %v4235, %v4236
      %v4238 = vrot.slane %v4202, 2
      %v4239 = vsel %vm543, %v4236, %v4238
      %v4240 = vrot.slane %v4204, 2
      %v4241 = vsel %vm543, %v4238, %v4240
      %v4242 = vrot.slane %v4211, 2
      %v4243 = vsel %vm543, %v4240, %v4242
      %4244 = vrot.lane.b32.xlu0 %v4237, 64
      %v4245 = vpop.permute.xlu0 %4244
      %4246 = vrot.lane.b32.xlu0 %v4239, 64
      %v4247 = vpop.permute.xlu0 %4246
      %4248 = vrot.lane.b32.xlu0 %v4241, 64
      %v4249 = vpop.permute.xlu0 %4248
      %4250 = vrot.lane.b32.xlu0 %v4243, 64
      %v4251 = vpop.permute.xlu0 %4250
      %v4256 = vsel %vm1003, %v4210, %v4224
      %v4257 = vsel %vm1003, %v4200, %v4226
      %v4258 = vsel %vm1003, %v4202, %v4228
      %v4259 = vsel %vm1003, %v4204, %v4230
      %v4260 = vsel %vm1039, %v4256, %v4245
      %v4261 = vsel %vm1039, %v4257, %v4247
      %v4262 = vsel %vm1039, %v4258, %v4249
      %v4263 = vsel %vm1039, %v4259, %v4251
      %v4265 = vlaneseq
      %v4266 = vshrl.u32 %v4265, 7
      %v4267 = vsub.s32 0, %v4266
      %v4268 = vrot.slane %v4193, %v4267
      %v4271 = vsel %vm1075, %v4260, 0
      %v4274 = vsel %vm1075, %v4261, 0
      %v4277 = vsel %vm1075, %v4262, 0
      %v4280 = vsel %vm1075, %v4263, 0
      %4282 = vmatprep.subr.mxu0 0.0
      %4283 = vmatpush1.msra.mxu0 0.0
      %4284 = vmatprep.subr.mxu0 0.0
      %4285 = vmatpush1.msra.mxu0 0.0
      %4286 = vmatprep.subr.mxu0 0.0
      %4287 = vmatpush1.msra.mxu0 0.0
      %4288 = vmatprep.subr.mxu0 0.0
      %4289 = vmatpush1.msra.mxu0 0.0
      %4290 = vmatprep.subr.mxu0 0.0
      %4291 = vmatpush1.msra.mxu0 %v4191
      %4292 = vmatprep.subr.mxu0 0.0
      %4293 = vmatpush1.msra.mxu0 %v4190
      %4294 = vmatprep.subr.mxu0 0.0
      %4295 = vmatpush1.msra.mxu0 %v4189
      %4296 = vmatprep.subr.mxu0 0.0
      %4297 = vmatpush1.msra.mxu0 %v4188
      %4298 = vmatprep.subr.mxu0 0.0
      %4299 = vmatpush1.msra.mxu0 %v4187
      %4300 = vmatprep.subr.mxu0 0.0
      %4301 = vmatpush1.msra.mxu0 %v4186
      %4302 = vmatprep.subr.mxu0 0.0
      %4303 = vmatpush1.msra.mxu0 %v4185
      %4304 = vmatprep.subr.mxu0 0.0
      %4305 = vmatpush1.msra.mxu0 %v4184
      %4306 = vmatprep.subr.mxu0 0.0
      %4307 = vmatpush1.msra.mxu0 %v4183
      %4308 = vmatprep.subr.mxu0 0.0
      %4309 = vmatpush1.msra.mxu0 %v4182
      %4310 = vmatprep.subr.mxu0 0.0
      %4311 = vmatpush1.msra.mxu0 %v4181
      %4312 = vmatprep.subr.mxu0 0.0
      %4313 = vmatpush1.msra.mxu0 %v4180
      %4314 = vmatprep.subr.mxu0 0.0
      %4315 = vmatpush2.msra.mxu0 0.0
      %4316 = vmatprep.subr.mxu0 0.0
      %4317 = vmatpush2.msra.mxu0 0.0
      %4318 = vmatprep.subr.mxu0 0.0
      %4319 = vmatpush2.msra.mxu0 0.0
      %4320 = vmatprep.subr.mxu0 0.0
      %4321 = vmatpush2.msra.mxu0 0.0
      %4322 = vmatprep.subr.mxu0 0.0
      %4323 = vmatpush2.msra.mxu0 0.0
      %4324 = vmatprep.subr.mxu0 0.0
      %4325 = vmatpush2.msra.mxu0 0.0
      %4326 = vmatprep.subr.mxu0 0.0
      %4327 = vmatpush2.msra.mxu0 0.0
      %4328 = vmatprep.subr.mxu0 0.0
      %4329 = vmatpush2.msra.mxu0 0.0
      %4330 = vmatprep.subr.mxu0 0.0
      %4331 = vmatpush2.msra.mxu0 0.0
      %4332 = vmatprep.subr.mxu0 0.0
      %4333 = vmatpush2.msra.mxu0 0.0
      %4334 = vmatprep.subr.mxu0 0.0
      %4335 = vmatpush2.msra.mxu0 0.0
      %4336 = vmatprep.subr.mxu0 0.0
      %4337 = vmatpush2.msra.mxu0 0.0
      %4338 = vmatprep.subr.mxu0 0.0
      %4339 = vmatpush2.msra.mxu0 0.0
      %4340 = vmatprep.subr.mxu0 0.0
      %4341 = vmatpush2.msra.mxu0 0.0
      %4342 = vmatprep.subr.mxu0 0.0
      %4343 = vmatpush2.msra.mxu0 0.0
      %4344 = vmatprep.subr.mxu0 0.0
      %4345 = vmatpush2.msra.mxu0 0.0
      %4346 = vmatprep.mubr.f32.mxu0 0.0
      %4347 = vmatmul.mubr.f32.gmra.mxu0 %v4271
      %v4348 = vpop.f32.mrf.mxu0
      %v4349 = vadd.f32 %v4268, %v4348
      %v4350 = vpop.f32.mrf.mxu0
      %4351 = vmatprep.mubr.f32.mxu0 0.0
      %4352 = vmatmul.mubr.f32.gmra.mxu0 %v4274
      %v4353 = vpop.f32.mrf.mxu0
      %v4354 = vadd.f32 %v4268, %v4353
      %v4355 = vpop.f32.mrf.mxu0
      %4356 = vmatprep.mubr.f32.mxu0 0.0
      %4357 = vmatmul.mubr.f32.gmra.mxu0 %v4277
      %v4358 = vpop.f32.mrf.mxu0
      %v4359 = vadd.f32 %v4268, %v4358
      %v4360 = vpop.f32.mrf.mxu0
      %4361 = vmatprep.mubr.f32.mxu0 0.0
      %4362 = vmatmul.mubr.f32.gmra.mxu0 %v4280
      %v4363 = vpop.f32.mrf.mxu0
      %v4364 = vadd.f32 %v4268, %v4363
      %v4365 = vpop.f32.mrf.mxu0
      %4366 = vdwg.mxu0
      %v4367 = vsel %vm1003, %v4349, 0.0
      %v4368 = vsel %vm1003, %v4354, 0.0
      %v4369 = vadd.f32 %v4367, %v4368
      %v4370 = vsel %vm1003, %v4359, 0.0
      %v4371 = vadd.f32 %v4369, %v4370
      %v4372 = vsel %vm1003, %v4364, 0.0
      %v4373 = vadd.f32 %v4371, %v4372
      %v4374 = vrot.slane %v4373, 4
      %v4375 = vadd.f32 %v4373, %v4374
      %v4376 = vrot.slane %v4375, 2
      %v4377 = vadd.f32 %v4375, %v4376
      %v4378 = vrot.slane %v4377, 1
      %v4379 = vadd.f32 %v4377, %v4378
      %v4380 = vmul.f32 %v4379, 0.03125
      %v4381 = vmul.f32 %v4349, %v4349
      %v4382 = vmul.f32 %v4354, %v4354
      %v4383 = vmul.f32 %v4359, %v4359
      %v4384 = vmul.f32 %v4364, %v4364
      %v4385 = vsel %vm1003, %v4381, 0.0
      %v4386 = vsel %vm1003, %v4382, 0.0
      %v4387 = vadd.f32 %v4385, %v4386
      %v4388 = vsel %vm1003, %v4383, 0.0
      %v4389 = vadd.f32 %v4387, %v4388
      %v4390 = vsel %vm1003, %v4384, 0.0
      %v4391 = vadd.f32 %v4389, %v4390
      %v4392 = vrot.slane %v4391, 4
      %v4393 = vadd.f32 %v4391, %v4392
      %v4394 = vrot.slane %v4393, 2
      %v4395 = vadd.f32 %v4393, %v4394
      %v4396 = vrot.slane %v4395, 1
      %v4397 = vadd.f32 %v4395, %v4396
      %v4398 = vmul.f32 %v4397, 0.03125
      %v4399 = vmul.f32 %v4380, %v4380
      %v4400 = vsub.f32 %v4398, %v4399
      %v4401 = vsub.f32 %v4349, %v4380
      %v4402 = vsub.f32 %v4354, %v4380
      %v4403 = vsub.f32 %v4359, %v4380
      %v4404 = vsub.f32 %v4364, %v4380
      %v4405 = vadd.f32 %v4400, 1e-05
      %v4406 = vrsqrt.pop %v4405
      %v4407 = vmul.f32 %v4401, %v4406
      %v4408 = vmul.f32 %v4402, %v4406
      %v4409 = vmul.f32 %v4403, %v4406
      %v4410 = vmul.f32 %v4404, %v4406
      %v4411 = vadd.f32 %v3975, %v4407
      %v4412 = vadd.f32 %v3976, %v4408
      %v4413 = vadd.f32 %v3977, %v4409
      %v4414 = vadd.f32 %v3978, %v4410
      %v4415 = vld [vmem:[%s9] sm:$0xff]
      %v4416 = vld [vmem:[%s9 + $0x8] sm:$0xff]
      %v4417 = vld [vmem:[%s9 + $0x10] sm:$0xff]
      %v4418 = vld [vmem:[%s9 + $0x18] sm:$0xff]
      %v4419 = vld [vmem:[%s9 + $0x20] sm:$0xff]
      %v4420 = vld [vmem:[%s9 + $0x28] sm:$0xff]
      %v4421 = vld [vmem:[%s9 + $0x30] sm:$0xff]
      %v4422 = vld [vmem:[%s9 + $0x38] sm:$0xff]
      %v4423 = vld [vmem:[%s9 + $0x40] sm:$0xff]
      %v4424 = vld [vmem:[%s9 + $0x48] sm:$0xff]
      %v4425 = vld [vmem:[%s9 + $0x50] sm:$0xff]
      %v4426 = vld [vmem:[%s9 + $0x58] sm:$0xff]
      %v4427 = vld [vmem:[%s9 + $0x60] sm:$0xff]
      %v4428 = vld [vmem:[%s9 + $0x68] sm:$0xff]
      %v4429 = vld [vmem:[%s9 + $0x70] sm:$0xff]
      %v4430 = vld [vmem:[%s9 + $0x78] sm:$0xff]
      %v4431 = vld [vmem:[%s9 + $0x80] sm:$0xff]
      %v4432 = vld [vmem:[%s9 + $0x88] sm:$0xff]
      %v4433 = vld [vmem:[%s9 + $0x90] sm:$0xff]
      %v4434 = vld [vmem:[%s9 + $0x98] sm:$0xff]
      %v4435 = vld [vmem:[%s10] sm:$0x1]
      %v4440 = vrot.slane %v4411, 6
      %v4441 = vrot.slane %v4412, 6
      %v4442 = vsel %vm711, %v4440, %v4441
      %v4443 = vrot.slane %v4413, 6
      %v4444 = vsel %vm711, %v4441, %v4443
      %v4445 = vrot.slane %v4414, 6
      %v4446 = vsel %vm711, %v4443, %v4445
      %v4452 = vsel %vm711, 0.0, %v4440
      %v4453 = vsel %vm711, %v4445, 0.0
      %v4456 = vrot.slane %v4452, 1
      %v4457 = vrot.slane %v4442, 1
      %v4458 = vsel %vm473, %v4456, %v4457
      %v4459 = vrot.slane %v4444, 1
      %v4460 = vsel %vm473, %v4457, %v4459
      %v4461 = vrot.slane %v4446, 1
      %v4462 = vsel %vm473, %v4459, %v4461
      %v4463 = vrot.slane %v4453, 1
      %v4464 = vsel %vm473, %v4461, %v4463
      %4465 = vrot.lane.b32.xlu0 %v4458, 32
      %v4466 = vpop.permute.xlu0 %4465
      %4467 = vrot.lane.b32.xlu0 %v4460, 32
      %v4468 = vpop.permute.xlu0 %4467
      %4469 = vrot.lane.b32.xlu0 %v4462, 32
      %v4470 = vpop.permute.xlu0 %4469
      %4471 = vrot.lane.b32.xlu0 %v4464, 32
      %v4472 = vpop.permute.xlu0 %4471
      %v4477 = vrot.slane %v4452, 2
      %v4478 = vrot.slane %v4442, 2
      %v4479 = vsel %vm543, %v4477, %v4478
      %v4480 = vrot.slane %v4444, 2
      %v4481 = vsel %vm543, %v4478, %v4480
      %v4482 = vrot.slane %v4446, 2
      %v4483 = vsel %vm543, %v4480, %v4482
      %v4484 = vrot.slane %v4453, 2
      %v4485 = vsel %vm543, %v4482, %v4484
      %4486 = vrot.lane.b32.xlu0 %v4479, 64
      %v4487 = vpop.permute.xlu0 %4486
      %4488 = vrot.lane.b32.xlu0 %v4481, 64
      %v4489 = vpop.permute.xlu0 %4488
      %4490 = vrot.lane.b32.xlu0 %v4483, 64
      %v4491 = vpop.permute.xlu0 %4490
      %4492 = vrot.lane.b32.xlu0 %v4485, 64
      %v4493 = vpop.permute.xlu0 %4492
      %v4498 = vrot.slane %v4452, 3
      %v4499 = vrot.slane %v4442, 3
      %v4500 = vsel %vm585, %v4498, %v4499
      %v4501 = vrot.slane %v4444, 3
      %v4502 = vsel %vm585, %v4499, %v4501
      %v4503 = vrot.slane %v4446, 3
      %v4504 = vsel %vm585, %v4501, %v4503
      %v4505 = vrot.slane %v4453, 3
      %v4506 = vsel %vm585, %v4503, %v4505
      %4507 = vrot.lane.b32.xlu0 %v4500, 96
      %v4508 = vpop.permute.xlu0 %4507
      %4509 = vrot.lane.b32.xlu0 %v4502, 96
      %v4510 = vpop.permute.xlu0 %4509
      %4511 = vrot.lane.b32.xlu0 %v4504, 96
      %v4512 = vpop.permute.xlu0 %4511
      %4513 = vrot.lane.b32.xlu0 %v4506, 96
      %v4514 = vpop.permute.xlu0 %4513
      %v4519 = vrot.slane %v4452, 4
      %v4520 = vrot.slane %v4442, 4
      %v4521 = vsel %vm627, %v4519, %v4520
      %v4522 = vrot.slane %v4444, 4
      %v4523 = vsel %vm627, %v4520, %v4522
      %v4524 = vrot.slane %v4446, 4
      %v4525 = vsel %vm627, %v4522, %v4524
      %v4526 = vrot.slane %v4453, 4
      %v4527 = vsel %vm627, %v4524, %v4526
      %v4528 = vsel %vm1003, %v4452, %v4466
      %v4529 = vsel %vm1003, %v4442, %v4468
      %v4530 = vsel %vm1003, %v4444, %v4470
      %v4531 = vsel %vm1003, %v4446, %v4472
      %v4532 = vsel %vm1039, %v4528, %v4487
      %v4533 = vsel %vm1039, %v4529, %v4489
      %v4534 = vsel %vm1039, %v4530, %v4491
      %v4535 = vsel %vm1039, %v4531, %v4493
      %v4536 = vsel %vm1075, %v4532, %v4508
      %v4537 = vsel %vm1075, %v4533, %v4510
      %v4538 = vsel %vm1075, %v4534, %v4512
      %v4539 = vsel %vm1075, %v4535, %v4514
      %v4541 = vlaneseq
      %v4542 = vshrl.u32 %v4541, 7
      %v4543 = vsub.s32 0, %v4542
      %v4544 = vrot.slane %v4435, %v4543
      %v4546 = vsel %vm1003, %v4521, 0
      %v4548 = vsel %vm1003, %v4523, 0
      %v4550 = vsel %vm1003, %v4525, 0
      %v4552 = vsel %vm1003, %v4527, 0
      %4554 = vmatprep.subr.mxu0 0.0
      %4555 = vmatpush1.msra.mxu0 %v4430
      %4556 = vmatprep.subr.mxu0 0.0
      %4557 = vmatpush1.msra.mxu0 %v4429
      %4558 = vmatprep.subr.mxu0 0.0
      %4559 = vmatpush1.msra.mxu0 %v4428
      %4560 = vmatprep.subr.mxu0 0.0
      %4561 = vmatpush1.msra.mxu0 %v4427
      %4562 = vmatprep.subr.mxu0 0.0
      %4563 = vmatpush1.msra.mxu0 %v4426
      %4564 = vmatprep.subr.mxu0 0.0
      %4565 = vmatpush1.msra.mxu0 %v4425
      %4566 = vmatprep.subr.mxu0 0.0
      %4567 = vmatpush1.msra.mxu0 %v4424
      %4568 = vmatprep.subr.mxu0 0.0
      %4569 = vmatpush1.msra.mxu0 %v4423
      %4570 = vmatprep.subr.mxu0 0.0
      %4571 = vmatpush1.msra.mxu0 %v4422
      %4572 = vmatprep.subr.mxu0 0.0
      %4573 = vmatpush1.msra.mxu0 %v4421
      %4574 = vmatprep.subr.mxu0 0.0
      %4575 = vmatpush1.msra.mxu0 %v4420
      %4576 = vmatprep.subr.mxu0 0.0
      %4577 = vmatpush1.msra.mxu0 %v4419
      %4578 = vmatprep.subr.mxu0 0.0
      %4579 = vmatpush1.msra.mxu0 %v4418
      %4580 = vmatprep.subr.mxu0 0.0
      %4581 = vmatpush1.msra.mxu0 %v4417
      %4582 = vmatprep.subr.mxu0 0.0
      %4583 = vmatpush1.msra.mxu0 %v4416
      %4584 = vmatprep.subr.mxu0 0.0
      %4585 = vmatpush1.msra.mxu0 %v4415
      %4586 = vmatprep.subr.mxu0 0.0
      %4587 = vmatpush2.msra.mxu0 0.0
      %4588 = vmatprep.subr.mxu0 0.0
      %4589 = vmatpush2.msra.mxu0 0.0
      %4590 = vmatprep.subr.mxu0 0.0
      %4591 = vmatpush2.msra.mxu0 0.0
      %4592 = vmatprep.subr.mxu0 0.0
      %4593 = vmatpush2.msra.mxu0 0.0
      %4594 = vmatprep.subr.mxu0 0.0
      %4595 = vmatpush2.msra.mxu0 0.0
      %4596 = vmatprep.subr.mxu0 0.0
      %4597 = vmatpush2.msra.mxu0 0.0
      %4598 = vmatprep.subr.mxu0 0.0
      %4599 = vmatpush2.msra.mxu0 0.0
      %4600 = vmatprep.subr.mxu0 0.0
      %4601 = vmatpush2.msra.mxu0 0.0
      %4602 = vmatprep.subr.mxu0 0.0
      %4603 = vmatpush2.msra.mxu0 0.0
      %4604 = vmatprep.subr.mxu0 0.0
      %4605 = vmatpush2.msra.mxu0 0.0
      %4606 = vmatprep.subr.mxu0 0.0
      %4607 = vmatpush2.msra.mxu0 0.0
      %4608 = vmatprep.subr.mxu0 0.0
      %4609 = vmatpush2.msra.mxu0 0.0
      %4610 = vmatprep.subr.mxu0 0.0
      %4611 = vmatpush2.msra.mxu0 %v4434
      %4612 = vmatprep.subr.mxu0 0.0
      %4613 = vmatpush2.msra.mxu0 %v4433
      %4614 = vmatprep.subr.mxu0 0.0
      %4615 = vmatpush2.msra.mxu0 %v4432
      %4616 = vmatprep.subr.mxu0 0.0
      %4617 = vmatpush2.msra.mxu0 %v4431
      %4618 = vmatprep.mubr.f32.mxu0 %v4546
      %4619 = vmatmul.mubr.f32.gmra.mxu0 %v4536
      %v4620 = vpop.f32.mrf.mxu0
      %v4621 = vadd.f32 %v4544, %v4620
      %v4622 = vpop.f32.mrf.mxu0
      %4623 = vmatprep.mubr.f32.mxu0 %v4548
      %4624 = vmatmul.mubr.f32.gmra.mxu0 %v4537
      %v4625 = vpop.f32.mrf.mxu0
      %v4626 = vadd.f32 %v4544, %v4625
      %v4627 = vpop.f32.mrf.mxu0
      %4628 = vmatprep.mubr.f32.mxu0 %v4550
      %4629 = vmatmul.mubr.f32.gmra.mxu0 %v4538
      %v4630 = vpop.f32.mrf.mxu0
      %v4631 = vadd.f32 %v4544, %v4630
      %v4632 = vpop.f32.mrf.mxu0
      %4633 = vmatprep.mubr.f32.mxu0 %v4552
      %4634 = vmatmul.mubr.f32.gmra.mxu0 %v4539
      %v4635 = vpop.f32.mrf.mxu0
      %v4636 = vadd.f32 %v4544, %v4635
      %v4637 = vpop.f32.mrf.mxu0
      %4638 = vdwg.mxu0
      %v4639 = vsel %vm1003, %v4621, 0.0
      %v4640 = vsel %vm1003, %v4626, 0.0
      %v4641 = vadd.f32 %v4639, %v4640
      %v4642 = vsel %vm1003, %v4631, 0.0
      %v4643 = vadd.f32 %v4641, %v4642
      %v4644 = vsel %vm1003, %v4636, 0.0
      %v4645 = vadd.f32 %v4643, %v4644
      %v4646 = vrot.slane %v4645, 4
      %v4647 = vadd.f32 %v4645, %v4646
      %v4648 = vrot.slane %v4647, 2
      %v4649 = vadd.f32 %v4647, %v4648
      %v4650 = vrot.slane %v4649, 1
      %v4651 = vadd.f32 %v4649, %v4650
      %v4652 = vmul.f32 %v4651, 0.03125
      %v4653 = vmul.f32 %v4621, %v4621
      %v4654 = vmul.f32 %v4626, %v4626
      %v4655 = vmul.f32 %v4631, %v4631
      %v4656 = vmul.f32 %v4636, %v4636
      %v4657 = vsel %vm1003, %v4653, 0.0
      %v4658 = vsel %vm1003, %v4654, 0.0
      %v4659 = vadd.f32 %v4657, %v4658
      %v4660 = vsel %vm1003, %v4655, 0.0
      %v4661 = vadd.f32 %v4659, %v4660
      %v4662 = vsel %vm1003, %v4656, 0.0
      %v4663 = vadd.f32 %v4661, %v4662
      %v4664 = vrot.slane %v4663, 4
      %v4665 = vadd.f32 %v4663, %v4664
      %v4666 = vrot.slane %v4665, 2
      %v4667 = vadd.f32 %v4665, %v4666
      %v4668 = vrot.slane %v4667, 1
      %v4669 = vadd.f32 %v4667, %v4668
      %v4670 = vmul.f32 %v4669, 0.03125
      %v4671 = vmul.f32 %v4652, %v4652
      %v4672 = vsub.f32 %v4670, %v4671
      %v4673 = vsub.f32 %v4621, %v4652
      %v4674 = vsub.f32 %v4626, %v4652
      %v4675 = vsub.f32 %v4631, %v4652
      %v4676 = vsub.f32 %v4636, %v4652
      %v4677 = vadd.f32 %v4672, 1e-05
      %v4678 = vrsqrt.pop %v4677
      %v4679 = vmul.f32 %v4673, %v4678
      %v4680 = vmul.f32 %v4674, %v4678
      %v4681 = vmul.f32 %v4675, %v4678
      %v4682 = vmul.f32 %v4676, %v4678
      %v4683 = vxor.u32 %v4679, 2147483648
      %v4684 = vxor.u32 %v4680, 2147483648
      %v4685 = vxor.u32 %v4681, 2147483648
      %v4686 = vxor.u32 %v4682, 2147483648
      %v4687 = vmul.f32 %v4683, 1.442695
      %v4688 = vpow.pop %v4687
      %v4689 = vmul.f32 %v4684, 1.442695
      %v4690 = vpow.pop %v4689
      %v4691 = vmul.f32 %v4685, 1.442695
      %v4692 = vpow.pop %v4691
      %v4693 = vmul.f32 %v4686, 1.442695
      %v4694 = vpow.pop %v4693
      %v4695 = vadd.f32 %v4688, 1.0
      %v4696 = vadd.f32 %v4690, 1.0
      %v4697 = vadd.f32 %v4692, 1.0
      %v4698 = vadd.f32 %v4694, 1.0
      %v4699 = vrcp.pop %v4695
      %v4700 = vmul.f32 1.0, %v4699
      %v4701 = vrcp.pop %v4696
      %v4702 = vmul.f32 1.0, %v4701
      %v4703 = vrcp.pop %v4697
      %v4704 = vmul.f32 1.0, %v4703
      %v4705 = vrcp.pop %v4698
      %v4706 = vmul.f32 1.0, %v4705
      %4711 = vrot.lane.b32.xlu0 %v4700, 112
      %v4712 = vpop.permute.xlu0 %4711
      %4713 = vrot.lane.b32.xlu0 %v4702, 112
      %v4714 = vpop.permute.xlu0 %4713
      %4715 = vrot.lane.b32.xlu0 %v4704, 112
      %v4716 = vpop.permute.xlu0 %4715
      %4717 = vrot.lane.b32.xlu0 %v4706, 112
      %v4718 = vpop.permute.xlu0 %4717
      %v4723 = vmul.f32 %v4679, %v4712
      %v4724 = vmul.f32 %v4680, %v4714
      %v4725 = vmul.f32 %v4681, %v4716
      %v4726 = vmul.f32 %v4682, %v4718
      %v4727 = vld [vmem:[%s11] sm:$0xff]
      %v4728 = vld [vmem:[%s11 + $0x8] sm:$0xff]
      %v4729 = vld [vmem:[%s12] sm:$0x1]
      %v4731 = vlaneseq
      %v4732 = vshrl.u32 %v4731, 7
      %v4733 = vsub.s32 0, %v4732
      %v4734 = vrot.slane %v4729, %v4733
      %v4737 = vsel %vm985, %v4723, 0
      %v4740 = vsel %vm985, %v4724, 0
      %v4743 = vsel %vm985, %v4725, 0
      %v4746 = vsel %vm985, %v4726, 0
      %4748 = vmatprep.subr.mxu0 0.0
      %4749 = vmatpush1.msra.mxu0 0.0
      %4750 = vmatprep.subr.mxu0 0.0
      %4751 = vmatpush1.msra.mxu0 0.0
      %4752 = vmatprep.subr.mxu0 0.0
      %4753 = vmatpush1.msra.mxu0 0.0
      %4754 = vmatprep.subr.mxu0 0.0
      %4755 = vmatpush1.msra.mxu0 0.0
      %4756 = vmatprep.subr.mxu0 0.0
      %4757 = vmatpush1.msra.mxu0 0.0
      %4758 = vmatprep.subr.mxu0 0.0
      %4759 = vmatpush1.msra.mxu0 0.0
      %4760 = vmatprep.subr.mxu0 0.0
      %4761 = vmatpush1.msra.mxu0 0.0
      %4762 = vmatprep.subr.mxu0 0.0
      %4763 = vmatpush1.msra.mxu0 0.0
      %4764 = vmatprep.subr.mxu0 0.0
      %4765 = vmatpush1.msra.mxu0 0.0
      %4766 = vmatprep.subr.mxu0 0.0
      %4767 = vmatpush1.msra.mxu0 0.0
      %4768 = vmatprep.subr.mxu0 0.0
      %4769 = vmatpush1.msra.mxu0 0.0
      %4770 = vmatprep.subr.mxu0 0.0
      %4771 = vmatpush1.msra.mxu0 0.0
      %4772 = vmatprep.subr.mxu0 0.0
      %4773 = vmatpush1.msra.mxu0 0.0
      %4774 = vmatprep.subr.mxu0 0.0
      %4775 = vmatpush1.msra.mxu0 0.0
      %4776 = vmatprep.subr.mxu0 0.0
      %4777 = vmatpush1.msra.mxu0 %v4728
      %4778 = vmatprep.subr.mxu0 0.0
      %4779 = vmatpush1.msra.mxu0 %v4727
      %4780 = vmatprep.subr.mxu0 0.0
      %4781 = vmatpush2.msra.mxu0 0.0
      %4782 = vmatprep.subr.mxu0 0.0
      %4783 = vmatpush2.msra.mxu0 0.0
      %4784 = vmatprep.subr.mxu0 0.0
      %4785 = vmatpush2.msra.mxu0 0.0
      %4786 = vmatprep.subr.mxu0 0.0
      %4787 = vmatpush2.msra.mxu0 0.0
      %4788 = vmatprep.subr.mxu0 0.0
      %4789 = vmatpush2.msra.mxu0 0.0
      %4790 = vmatprep.subr.mxu0 0.0
      %4791 = vmatpush2.msra.mxu0 0.0
      %4792 = vmatprep.subr.mxu0 0.0
      %4793 = vmatpush2.msra.mxu0 0.0
      %4794 = vmatprep.subr.mxu0 0.0
      %4795 = vmatpush2.msra.mxu0 0.0
      %4796 = vmatprep.subr.mxu0 0.0
      %4797 = vmatpush2.msra.mxu0 0.0
      %4798 = vmatprep.subr.mxu0 0.0
      %4799 = vmatpush2.msra.mxu0 0.0
      %4800 = vmatprep.subr.mxu0 0.0
      %4801 = vmatpush2.msra.mxu0 0.0
      %4802 = vmatprep.subr.mxu0 0.0
      %4803 = vmatpush2.msra.mxu0 0.0
      %4804 = vmatprep.subr.mxu0 0.0
      %4805 = vmatpush2.msra.mxu0 0.0
      %4806 = vmatprep.subr.mxu0 0.0
      %4807 = vmatpush2.msra.mxu0 0.0
      %4808 = vmatprep.subr.mxu0 0.0
      %4809 = vmatpush2.msra.mxu0 0.0
      %4810 = vmatprep.subr.mxu0 0.0
      %4811 = vmatpush2.msra.mxu0 0.0
      %4812 = vmatprep.mubr.f32.mxu0 0.0
      %4813 = vmatmul.mubr.f32.gmra.mxu0 %v4737
      %v4814 = vpop.f32.mrf.mxu0
      %v4815 = vadd.f32 %v4734, %v4814
      %v4816 = vpop.f32.mrf.mxu0
      %4817 = vmatprep.mubr.f32.mxu0 0.0
      %4818 = vmatmul.mubr.f32.gmra.mxu0 %v4740
      %v4819 = vpop.f32.mrf.mxu0
      %v4820 = vadd.f32 %v4734, %v4819
      %v4821 = vpop.f32.mrf.mxu0
      %4822 = vmatprep.mubr.f32.mxu0 0.0
      %4823 = vmatmul.mubr.f32.gmra.mxu0 %v4743
      %v4824 = vpop.f32.mrf.mxu0
      %v4825 = vadd.f32 %v4734, %v4824
      %v4826 = vpop.f32.mrf.mxu0
      %4827 = vmatprep.mubr.f32.mxu0 0.0
      %4828 = vmatmul.mubr.f32.gmra.mxu0 %v4746
      %v4829 = vpop.f32.mrf.mxu0
      %v4830 = vadd.f32 %v4734, %v4829
      %v4831 = vpop.f32.mrf.mxu0
      %4832 = vdwg.mxu0
      %4833 = vst.msk [vmem:[%s440] sm:$0xff] %vm985, %v4815
      %4834 = vst.msk [vmem:[%s440 + $0x8] sm:$0xff] %vm985, %v4820
      %4835 = vst.msk [vmem:[%s440 + $0x10] sm:$0xff] %vm985, %v4825
      %4836 = vst.msk [vmem:[%s440 + $0x18] sm:$0xff] %vm985, %v4830
      %p4837 = scmp.lt.s32.totalorder %s24, 1
      %s4838 = scalar_select %p4837, %s24, 1
      %s4839 = smul.addr %s4838, 4
      %s4840 = smul.addr %s4839, 8
      %s4841 = scalar_lea.vmem %s13, %s4840
      // Predicated region
      $region73: #{encoder_forward.1} parent=71 // pred_check
        %p4842 = pneg %p320
      $region74: #{encoder_forward.1} parent=71 // pred_check_branch
        %4844 = sbr.rel (%p4842) target = $region76
      $region75: #{encoder_forward.1} parent=71 // pred_region
        _
      $region76: #{encoder_forward.1} parent=71 // pred_fallthru
        _
    $region72: #{encoder_forward.1} parent=5 // pred_fallthru
      _
    %p4845 = scmp.le.s32.totalorder 2, %s19
    // Predicated region
    $region77: #{encoder_forward.1} parent=5 // pred_check
      %p4846 = pneg %p4845
    $region78: #{encoder_forward.1} parent=5 // pred_check_branch
      %4848 = sbr.rel (%p4846) target = $region80
    $region79: #{encoder_forward.1} parent=5 // pred_region
      %s4849 = ssub.s32 %s19, 2
      // Predicated region
      $region81: #{encoder_forward.1} parent=79 // pred_check
        %p4850 = pneg %p326
      $region82: #{encoder_forward.1} parent=79 // pred_check_branch
        %4852 = sbr.rel (%p4850) target = $region84
      $region83: #{encoder_forward.1} parent=79 // pred_region
        %p4853 = scmp.lt.s32.totalorder %s25, 1
        %s4854 = scalar_select %p4853, %s25, 1
        %s4855 = smul.addr %s4854, 4
        %s4856 = smul.addr %s4855, 8
        %s4857 = scalar_lea.vmem %s13, %s4856
      $region84: #{encoder_forward.1} parent=79 // pred_fallthru
        _
    $region80: #{encoder_forward.1} parent=5 // pred_fallthru
      _
  $region6: #{encoder_forward.1} parent=0 // loop_footer
    %s23 = sadd.s32 1, %s19
  $region7: #{encoder_forward.1} parent=0 // loop_footer_branch
    %18 = sbr.rel target = $region3
  $region8: #{encoder_forward.1} parent=0 // loop_exit
    _

</llo_original>
